<compile_context>
chip_gen: v7x
topology: tpu7x:2x2x1
jax: 0.10.0
libtpu: 0.0.40
codegen_flags: <defaults>
</compile_context>

<pallas_src>
import functools

import numpy as np
import jax
import jax.numpy as jnp
from jax import lax
from jax.experimental import pallas as pl
from jax.experimental.pallas import tpu as pltpu

EPS = 1e-5  # torch.nn.InstanceNorm2d default


def _convblock_kernel(x_ref, w1_ref, w2_ref, m_ref, o_ref, *,
                      C_in, C_out, H, W, NB, LPAD):
    """One grid step processes NB samples.

    x_ref  : (NB, C_in, H*W)   input samples, flattened NCHW (VMEM)
    w1_ref : (9, C_out, C_in)  conv1 weights, tap-major
    w2_ref : (9, C_out, C_out) conv2 weights, tap-major
    m_ref  : (9, H*W)          per-tap validity masks (1.0 / 0.0)
    o_ref  : (NB, C_out, H*W)  output samples, flattened NCHW
    """
    HW = H * W
    # Static lane shifts for the 9 taps of a 3x3 / padding=1 conv.
    shifts = [dy * W + dx for dy in (-1, 0, 1) for dx in (-1, 0, 1)]

    w1 = w1_ref[...]      # (9, C_out, C_in)
    w2 = w2_ref[...]      # (9, C_out, C_out)
    masks = m_ref[...]    # (9, HW)

    def conv3x3(act, w, C):
        # act: (C, HW) f32, w: (9, C_out, C) f32 -> (C_out, HW) f32.
        zpad = jnp.zeros((C, LPAD), jnp.float32)
        padded = jnp.concatenate([zpad, act, zpad], axis=1)   # (C, HW + 2*LPAD)
        acc = None
        for t, s in enumerate(shifts):
            win = padded[:, LPAD + s:LPAD + s + HW]           # (C, HW) shifted window
            if s != 0:  # center tap needs no mask
                win = win * masks[t:t + 1, :]                 # zero OOB / row-wrap lanes
            part = jnp.dot(w[t], win, preferred_element_type=jnp.float32)
            acc = part if acc is None else acc + part
        return acc

    def instnorm_relu(a):
        # a: (C, HW) f32; per-channel biased variance over HW.
        inv_hw = 1.0 / HW
        mean = jnp.sum(a, axis=1, keepdims=True) * inv_hw
        d = a - mean
        var = jnp.sum(d * d, axis=1, keepdims=True) * inv_hw
        return jnp.maximum(d * lax.rsqrt(var + EPS), 0.0)

    for i in range(NB):  # static unroll over samples in this block
        act = x_ref[i].astype(jnp.float32)                    # (C_in, HW)
        y1 = instnorm_relu(conv3x3(act, w1, C_in))             # (C_out, HW)
        y2 = instnorm_relu(conv3x3(y1, w2, C_out))             # (C_out, HW)
        o_ref[i] = y2.astype(o_ref.dtype)


def conv_block(x_nchw, w1, b1, w2, b2):
    """ConvBlock forward.

    x_nchw : (N, C_in, H, W) float32 (PyTorch layout)
    w1     : (C_out, C_in, 3, 3),  b1: (C_out,)
    w2     : (C_out, C_out, 3, 3), b2: (C_out,)
    returns: (N, C_out, H, W) float32
    """
    # A per-channel bias added before a non-affine InstanceNorm is exactly
    # cancelled by the mean subtraction -> dead compute, dropped entirely.
    del b1, b2

    N, C_in, H, W = x_nchw.shape
    C_out = w1.shape[0]
    HW = H * W
    # Lane padding band; rounded up to a 128-lane tile so the in-kernel
    # concatenate happens on aligned boundaries.
    LPAD = ((W + 1 + 127) // 128) * 128

    # Free reshape: keep NCHW, just flatten spatial dims onto the lane axis.
    x_flat = x_nchw.reshape(N, C_in, HW).astype(jnp.float32)

    # torch (C_out, C_in, kh, kw) -> (9, C_out, C_in), tap-major (dy, dx) order.
    w1_t = jnp.transpose(w1, (2, 3, 0, 1)).reshape(9, C_out, C_in).astype(jnp.float32)
    w2_t = jnp.transpose(w2, (2, 3, 0, 1)).reshape(9, C_out, C_out).astype(jnp.float32)

    # Per-tap validity masks on the flattened spatial axis, built once on host.
    ys, xs = np.meshgrid(np.arange(H), np.arange(W), indexing="ij")
    ys = ys.reshape(-1)
    xs = xs.reshape(-1)
    tap_masks = np.stack([
        ((ys + dy >= 0) & (ys + dy < H) & (xs + dx >= 0) & (xs + dx < W))
        for dy in (-1, 0, 1) for dx in (-1, 0, 1)
    ]).astype(np.float32)                                   # (9, HW)
    tap_masks = jnp.asarray(tap_masks)

    # Samples per grid step: batch tiny samples so each step carries enough
    # work to amortize per-step pipeline overhead; cap the static unroll at 8.
    bytes_per_sample = 4 * HW * (C_in + 2 * C_out)
    target = max(1, min(8, (1 << 20) // max(bytes_per_sample, 1)))
    NB = 1
    for d in range(1, N + 1):
        if N % d == 0 and d <= target:
            NB = d

    kernel = functools.partial(
        _convblock_kernel, C_in=C_in, C_out=C_out, H=H, W=W, NB=NB, LPAD=LPAD)

    out_flat = pl.pallas_call(
        kernel,
        out_shape=jax.ShapeDtypeStruct((N, C_out, HW), jnp.float32),
        grid_spec=pltpu.PrefetchScalarGridSpec(
            num_scalar_prefetch=0,
            grid=(N // NB,),
            in_specs=[
                pl.BlockSpec((NB, C_in, HW), lambda n: (n, 0, 0)),
                pl.BlockSpec((9, C_out, C_in), lambda n: (0, 0, 0)),
                pl.BlockSpec((9, C_out, C_out), lambda n: (0, 0, 0)),
                pl.BlockSpec((9, HW), lambda n: (0, 0)),
            ],
            out_specs=pl.BlockSpec((NB, C_out, HW), lambda n: (n, 0, 0)),
        ),
        compiler_params=pltpu.CompilerParams(
            dimension_semantics=("parallel",),
        ),
    )(x_flat, w1_t, w2_t, tap_masks)

    return out_flat.reshape(N, C_out, H, W)


def _reference(x_nchw, w1, b1, w2, b2):
    """Pure-JAX reference (mirrors torch semantics, biases included)."""
    def conv(x, w, b):  # x: NHWC, w: (Cout, Cin, 3, 3)
        w_hwio = jnp.transpose(w, (2, 3, 1, 0))
        y = lax.conv_general_dilated(
            x, w_hwio, window_strides=(1, 1), padding=((1, 1), (1, 1)),
            dimension_numbers=("NHWC", "HWIO", "NHWC"))
        return y + b[None, None, None, :]

    def instnorm_relu(x):  # NHWC, per (n, c) over H*W, biased variance
        mean = jnp.mean(x, axis=(1, 2), keepdims=True)
        var = jnp.mean((x - mean) ** 2, axis=(1, 2), keepdims=True)
        return jnp.maximum((x - mean) * lax.rsqrt(var + EPS), 0.0)

    x = jnp.transpose(x_nchw, (0, 2, 3, 1))
    x = instnorm_relu(conv(x, w1, b1))
    x = instnorm_relu(conv(x, w2, b2))
    return jnp.transpose(x, (0, 3, 1, 2))


if __name__ == "__main__":
    N, C_in, C_out, H, W = 2, 4, 8, 16, 16

    key = jax.random.PRNGKey(0)
    kx, kw1, kb1, kw2, kb2 = jax.random.split(key, 5)

    x = jax.random.normal(kx, (N, C_in, H, W), dtype=jnp.float32)
    fan1 = C_in * 9
    w1 = jax.random.uniform(kw1, (C_out, C_in, 3, 3), jnp.float32,
                            -1.0 / fan1 ** 0.5, 1.0 / fan1 ** 0.5)
    b1 = jax.random.uniform(kb1, (C_out,), jnp.float32,
                            -1.0 / fan1 ** 0.5, 1.0 / fan1 ** 0.5)
    fan2 = C_out * 9
    w2 = jax.random.uniform(kw2, (C_out, C_out, 3, 3), jnp.float32,
                            -1.0 / fan2 ** 0.5, 1.0 / fan2 ** 0.5)
    b2 = jax.random.uniform(kb2, (C_out,), jnp.float32,
                            -1.0 / fan2 ** 0.5, 1.0 / fan2 ** 0.5)

    out = jax.block_until_ready(conv_block(x, w1, b1, w2, b2))
    ref = jax.block_until_ready(_reference(x, w1, b1, w2, b2))

    assert out.shape == (N, C_out, H, W), out.shape
    err = float(jnp.max(jnp.abs(out - ref)))
    assert err < 5e-4, err
    print("KERNEL_OK")
</pallas_src>

<mosaic_0001>
module attributes {stable_mosaic.version = 11 : i64} {
  func.func @_convblock_kernel(%arg0: i32, %arg1: memref<2x4x256xf32, #tpu.memory_space<vmem>>, %arg2: memref<9x8x4xf32, #tpu.memory_space<vmem>>, %arg3: memref<9x8x8xf32, #tpu.memory_space<vmem>>, %arg4: memref<9x256xf32, #tpu.memory_space<vmem>>, %arg5: memref<2x8x256xf32, #tpu.memory_space<vmem>>) attributes {dimension_semantics = [#tpu.dimension_semantics<parallel>], iteration_bounds = array<i64: 1>, scalar_prefetch = 0 : i64, scratch_operands = 0 : i64, tpu.core_type = #tpu.core_type<tc>, window_params = [{transform_indices = @transform_0, window_bounds = array<i64: 2, 4, 256>}, {pipeline_mode = #tpu.pipeline_mode<synchronous>, transform_indices = @transform_1, window_bounds = array<i64: 9, 8, 4>}, {pipeline_mode = #tpu.pipeline_mode<synchronous>, transform_indices = @transform_2, window_bounds = array<i64: 9, 8, 8>}, {pipeline_mode = #tpu.pipeline_mode<synchronous>, transform_indices = @transform_3, window_bounds = array<i64: 9, 256>}, {transform_indices = @transform_4, window_bounds = array<i64: 2, 8, 256>}]} {
    %c0 = arith.constant 0 : index
    %c0_0 = arith.constant 0 : index
    %c0_1 = arith.constant 0 : index
    %0 = vector.load %arg2[%c0, %c0_0, %c0_1] : memref<9x8x4xf32, #tpu.memory_space<vmem>>, vector<9x8x4xf32>
    %c0_2 = arith.constant 0 : index
    %c0_3 = arith.constant 0 : index
    %c0_4 = arith.constant 0 : index
    %1 = vector.load %arg3[%c0_2, %c0_3, %c0_4] : memref<9x8x8xf32, #tpu.memory_space<vmem>>, vector<9x8x8xf32>
    %c0_5 = arith.constant 0 : index
    %c0_6 = arith.constant 0 : index
    %2 = vector.load %arg4[%c0_5, %c0_6] : memref<9x256xf32, #tpu.memory_space<vmem>>, vector<9x256xf32>
    %c0_7 = arith.constant 0 : index
    %c0_8 = arith.constant 0 : index
    %c0_9 = arith.constant 0 : index
    %3 = vector.load %arg1[%c0_7, %c0_8, %c0_9] : memref<2x4x256xf32, #tpu.memory_space<vmem>>, vector<1x4x256xf32>
    %4 = vector.shape_cast %3 : vector<1x4x256xf32> to vector<4x256xf32>
    %cst = arith.constant 0.000000e+00 : f32
    %5 = vector.broadcast %cst : f32 to vector<4x128xf32>
    %6 = tpu.concatenate %5, %4, %5 in 1 : vector<4x128xf32>, vector<4x256xf32>, vector<4x128xf32> -> vector<4x512xf32>
    %7 = vector.extract_strided_slice %6 {offsets = [0, 111], sizes = [4, 256], strides = [1, 1]} : vector<4x512xf32> to vector<4x256xf32>
    %8 = vector.extract_strided_slice %2 {offsets = [0, 0], sizes = [1, 256], strides = [1, 1]} : vector<9x256xf32> to vector<1x256xf32>
    %9 = vector.broadcast %8 : vector<1x256xf32> to vector<4x256xf32>
    %10 = arith.mulf %7, %9 : vector<4x256xf32>
    %11 = vector.extract_strided_slice %0 {offsets = [0, 0, 0], sizes = [1, 8, 4], strides = [1, 1, 1]} : vector<9x8x4xf32> to vector<1x8x4xf32>
    %12 = vector.shape_cast %11 : vector<1x8x4xf32> to vector<8x4xf32>
    %cst_10 = arith.constant dense<0.000000e+00> : vector<8x256xf32>
    %13 = tpu.matmul %12, %10, %cst_10 {dimension_numbers = #tpu.dot_dimension_numbers<[1], [0], [0], [1], [0, 0, 1, 1], [], []>} : vector<8x4xf32>, vector<4x256xf32>, vector<8x256xf32> -> vector<8x256xf32>
    %14 = vector.extract_strided_slice %6 {offsets = [0, 112], sizes = [4, 256], strides = [1, 1]} : vector<4x512xf32> to vector<4x256xf32>
    %15 = vector.extract_strided_slice %2 {offsets = [1, 0], sizes = [1, 256], strides = [1, 1]} : vector<9x256xf32> to vector<1x256xf32>
    %16 = vector.broadcast %15 : vector<1x256xf32> to vector<4x256xf32>
    %17 = arith.mulf %14, %16 : vector<4x256xf32>
    %18 = vector.extract_strided_slice %0 {offsets = [1, 0, 0], sizes = [1, 8, 4], strides = [1, 1, 1]} : vector<9x8x4xf32> to vector<1x8x4xf32>
    %19 = vector.shape_cast %18 : vector<1x8x4xf32> to vector<8x4xf32>
    %cst_11 = arith.constant dense<0.000000e+00> : vector<8x256xf32>
    %20 = tpu.matmul %19, %17, %cst_11 {dimension_numbers = #tpu.dot_dimension_numbers<[1], [0], [0], [1], [0, 0, 1, 1], [], []>} : vector<8x4xf32>, vector<4x256xf32>, vector<8x256xf32> -> vector<8x256xf32>
    %21 = arith.addf %13, %20 : vector<8x256xf32>
    %22 = vector.extract_strided_slice %6 {offsets = [0, 113], sizes = [4, 256], strides = [1, 1]} : vector<4x512xf32> to vector<4x256xf32>
    %23 = vector.extract_strided_slice %2 {offsets = [2, 0], sizes = [1, 256], strides = [1, 1]} : vector<9x256xf32> to vector<1x256xf32>
    %24 = vector.broadcast %23 : vector<1x256xf32> to vector<4x256xf32>
    %25 = arith.mulf %22, %24 : vector<4x256xf32>
    %26 = vector.extract_strided_slice %0 {offsets = [2, 0, 0], sizes = [1, 8, 4], strides = [1, 1, 1]} : vector<9x8x4xf32> to vector<1x8x4xf32>
    %27 = vector.shape_cast %26 : vector<1x8x4xf32> to vector<8x4xf32>
    %cst_12 = arith.constant dense<0.000000e+00> : vector<8x256xf32>
    %28 = tpu.matmul %27, %25, %cst_12 {dimension_numbers = #tpu.dot_dimension_numbers<[1], [0], [0], [1], [0, 0, 1, 1], [], []>} : vector<8x4xf32>, vector<4x256xf32>, vector<8x256xf32> -> vector<8x256xf32>
    %29 = arith.addf %21, %28 : vector<8x256xf32>
    %30 = vector.extract_strided_slice %6 {offsets = [0, 127], sizes = [4, 256], strides = [1, 1]} : vector<4x512xf32> to vector<4x256xf32>
    %31 = vector.extract_strided_slice %2 {offsets = [3, 0], sizes = [1, 256], strides = [1, 1]} : vector<9x256xf32> to vector<1x256xf32>
    %32 = vector.broadcast %31 : vector<1x256xf32> to vector<4x256xf32>
    %33 = arith.mulf %30, %32 : vector<4x256xf32>
    %34 = vector.extract_strided_slice %0 {offsets = [3, 0, 0], sizes = [1, 8, 4], strides = [1, 1, 1]} : vector<9x8x4xf32> to vector<1x8x4xf32>
    %35 = vector.shape_cast %34 : vector<1x8x4xf32> to vector<8x4xf32>
    %cst_13 = arith.constant dense<0.000000e+00> : vector<8x256xf32>
    %36 = tpu.matmul %35, %33, %cst_13 {dimension_numbers = #tpu.dot_dimension_numbers<[1], [0], [0], [1], [0, 0, 1, 1], [], []>} : vector<8x4xf32>, vector<4x256xf32>, vector<8x256xf32> -> vector<8x256xf32>
    %37 = arith.addf %29, %36 : vector<8x256xf32>
    %38 = vector.extract_strided_slice %6 {offsets = [0, 128], sizes = [4, 256], strides = [1, 1]} : vector<4x512xf32> to vector<4x256xf32>
    %39 = vector.extract_strided_slice %0 {offsets = [4, 0, 0], sizes = [1, 8, 4], strides = [1, 1, 1]} : vector<9x8x4xf32> to vector<1x8x4xf32>
    %40 = vector.shape_cast %39 : vector<1x8x4xf32> to vector<8x4xf32>
    %cst_14 = arith.constant dense<0.000000e+00> : vector<8x256xf32>
    %41 = tpu.matmul %40, %38, %cst_14 {dimension_numbers = #tpu.dot_dimension_numbers<[1], [0], [0], [1], [0, 0, 1, 1], [], []>} : vector<8x4xf32>, vector<4x256xf32>, vector<8x256xf32> -> vector<8x256xf32>
    %42 = arith.addf %37, %41 : vector<8x256xf32>
    %43 = vector.extract_strided_slice %6 {offsets = [0, 129], sizes = [4, 256], strides = [1, 1]} : vector<4x512xf32> to vector<4x256xf32>
    %44 = vector.extract_strided_slice %2 {offsets = [5, 0], sizes = [1, 256], strides = [1, 1]} : vector<9x256xf32> to vector<1x256xf32>
    %45 = vector.broadcast %44 : vector<1x256xf32> to vector<4x256xf32>
    %46 = arith.mulf %43, %45 : vector<4x256xf32>
    %47 = vector.extract_strided_slice %0 {offsets = [5, 0, 0], sizes = [1, 8, 4], strides = [1, 1, 1]} : vector<9x8x4xf32> to vector<1x8x4xf32>
    %48 = vector.shape_cast %47 : vector<1x8x4xf32> to vector<8x4xf32>
    %cst_15 = arith.constant dense<0.000000e+00> : vector<8x256xf32>
    %49 = tpu.matmul %48, %46, %cst_15 {dimension_numbers = #tpu.dot_dimension_numbers<[1], [0], [0], [1], [0, 0, 1, 1], [], []>} : vector<8x4xf32>, vector<4x256xf32>, vector<8x256xf32> -> vector<8x256xf32>
    %50 = arith.addf %42, %49 : vector<8x256xf32>
    %51 = vector.extract_strided_slice %6 {offsets = [0, 143], sizes = [4, 256], strides = [1, 1]} : vector<4x512xf32> to vector<4x256xf32>
    %52 = vector.extract_strided_slice %2 {offsets = [6, 0], sizes = [1, 256], strides = [1, 1]} : vector<9x256xf32> to vector<1x256xf32>
    %53 = vector.broadcast %52 : vector<1x256xf32> to vector<4x256xf32>
    %54 = arith.mulf %51, %53 : vector<4x256xf32>
    %55 = vector.extract_strided_slice %0 {offsets = [6, 0, 0], sizes = [1, 8, 4], strides = [1, 1, 1]} : vector<9x8x4xf32> to vector<1x8x4xf32>
    %56 = vector.shape_cast %55 : vector<1x8x4xf32> to vector<8x4xf32>
    %cst_16 = arith.constant dense<0.000000e+00> : vector<8x256xf32>
    %57 = tpu.matmul %56, %54, %cst_16 {dimension_numbers = #tpu.dot_dimension_numbers<[1], [0], [0], [1], [0, 0, 1, 1], [], []>} : vector<8x4xf32>, vector<4x256xf32>, vector<8x256xf32> -> vector<8x256xf32>
    %58 = arith.addf %50, %57 : vector<8x256xf32>
    %59 = vector.extract_strided_slice %6 {offsets = [0, 144], sizes = [4, 256], strides = [1, 1]} : vector<4x512xf32> to vector<4x256xf32>
    %60 = vector.extract_strided_slice %2 {offsets = [7, 0], sizes = [1, 256], strides = [1, 1]} : vector<9x256xf32> to vector<1x256xf32>
    %61 = vector.broadcast %60 : vector<1x256xf32> to vector<4x256xf32>
    %62 = arith.mulf %59, %61 : vector<4x256xf32>
    %63 = vector.extract_strided_slice %0 {offsets = [7, 0, 0], sizes = [1, 8, 4], strides = [1, 1, 1]} : vector<9x8x4xf32> to vector<1x8x4xf32>
    %64 = vector.shape_cast %63 : vector<1x8x4xf32> to vector<8x4xf32>
    %cst_17 = arith.constant dense<0.000000e+00> : vector<8x256xf32>
    %65 = tpu.matmul %64, %62, %cst_17 {dimension_numbers = #tpu.dot_dimension_numbers<[1], [0], [0], [1], [0, 0, 1, 1], [], []>} : vector<8x4xf32>, vector<4x256xf32>, vector<8x256xf32> -> vector<8x256xf32>
    %66 = arith.addf %58, %65 : vector<8x256xf32>
    %67 = vector.extract_strided_slice %6 {offsets = [0, 145], sizes = [4, 256], strides = [1, 1]} : vector<4x512xf32> to vector<4x256xf32>
    %68 = vector.extract_strided_slice %2 {offsets = [8, 0], sizes = [1, 256], strides = [1, 1]} : vector<9x256xf32> to vector<1x256xf32>
    %69 = vector.broadcast %68 : vector<1x256xf32> to vector<4x256xf32>
    %70 = arith.mulf %67, %69 : vector<4x256xf32>
    %71 = vector.extract_strided_slice %0 {offsets = [8, 0, 0], sizes = [1, 8, 4], strides = [1, 1, 1]} : vector<9x8x4xf32> to vector<1x8x4xf32>
    %72 = vector.shape_cast %71 : vector<1x8x4xf32> to vector<8x4xf32>
    %cst_18 = arith.constant dense<0.000000e+00> : vector<8x256xf32>
    %73 = tpu.matmul %72, %70, %cst_18 {dimension_numbers = #tpu.dot_dimension_numbers<[1], [0], [0], [1], [0, 0, 1, 1], [], []>} : vector<8x4xf32>, vector<4x256xf32>, vector<8x256xf32> -> vector<8x256xf32>
    %74 = arith.addf %66, %73 : vector<8x256xf32>
    %cst_19 = arith.constant dense<0.000000e+00> : vector<8xf32>
    %75 = vector.multi_reduction <add>, %74, %cst_19 [1] : vector<8x256xf32> to vector<8xf32>
    %76 = vector.shape_cast %75 : vector<8xf32> to vector<8x1xf32>
    %cst_20 = arith.constant 3.906250e-03 : f32
    %77 = vector.broadcast %cst_20 : f32 to vector<8x1xf32>
    %78 = arith.mulf %76, %77 : vector<8x1xf32>
    %79 = vector.broadcast %78 : vector<8x1xf32> to vector<8x256xf32>
    %80 = arith.subf %74, %79 : vector<8x256xf32>
    %81 = arith.mulf %80, %80 : vector<8x256xf32>
    %cst_21 = arith.constant dense<0.000000e+00> : vector<8xf32>
    %82 = vector.multi_reduction <add>, %81, %cst_21 [1] : vector<8x256xf32> to vector<8xf32>
    %83 = vector.shape_cast %82 : vector<8xf32> to vector<8x1xf32>
    %cst_22 = arith.constant 3.906250e-03 : f32
    %84 = vector.broadcast %cst_22 : f32 to vector<8x1xf32>
    %85 = arith.mulf %83, %84 : vector<8x1xf32>
    %cst_23 = arith.constant 9.99999974E-6 : f32
    %86 = vector.broadcast %cst_23 : f32 to vector<8x1xf32>
    %87 = arith.addf %85, %86 : vector<8x1xf32>
    %88 = math.rsqrt %87 : vector<8x1xf32>
    %89 = vector.broadcast %88 : vector<8x1xf32> to vector<8x256xf32>
    %90 = arith.mulf %80, %89 : vector<8x256xf32>
    %cst_24 = arith.constant 0.000000e+00 : f32
    %91 = vector.broadcast %cst_24 : f32 to vector<8x256xf32>
    %92 = arith.maximumf %90, %91 : vector<8x256xf32>
    %cst_25 = arith.constant 0.000000e+00 : f32
    %93 = vector.broadcast %cst_25 : f32 to vector<8x128xf32>
    %94 = tpu.concatenate %93, %92, %93 in 1 : vector<8x128xf32>, vector<8x256xf32>, vector<8x128xf32> -> vector<8x512xf32>
    %95 = vector.extract_strided_slice %94 {offsets = [0, 111], sizes = [8, 256], strides = [1, 1]} : vector<8x512xf32> to vector<8x256xf32>
    %96 = vector.extract_strided_slice %2 {offsets = [0, 0], sizes = [1, 256], strides = [1, 1]} : vector<9x256xf32> to vector<1x256xf32>
    %97 = vector.broadcast %96 : vector<1x256xf32> to vector<8x256xf32>
    %98 = arith.mulf %95, %97 : vector<8x256xf32>
    %99 = vector.extract_strided_slice %1 {offsets = [0, 0, 0], sizes = [1, 8, 8], strides = [1, 1, 1]} : vector<9x8x8xf32> to vector<1x8x8xf32>
    %100 = vector.shape_cast %99 : vector<1x8x8xf32> to vector<8x8xf32>
    %cst_26 = arith.constant dense<0.000000e+00> : vector<8x256xf32>
    %101 = tpu.matmul %100, %98, %cst_26 {dimension_numbers = #tpu.dot_dimension_numbers<[1], [0], [0], [1], [0, 0, 1, 1], [], []>} : vector<8x8xf32>, vector<8x256xf32>, vector<8x256xf32> -> vector<8x256xf32>
    %102 = vector.extract_strided_slice %94 {offsets = [0, 112], sizes = [8, 256], strides = [1, 1]} : vector<8x512xf32> to vector<8x256xf32>
    %103 = vector.extract_strided_slice %2 {offsets = [1, 0], sizes = [1, 256], strides = [1, 1]} : vector<9x256xf32> to vector<1x256xf32>
    %104 = vector.broadcast %103 : vector<1x256xf32> to vector<8x256xf32>
    %105 = arith.mulf %102, %104 : vector<8x256xf32>
    %106 = vector.extract_strided_slice %1 {offsets = [1, 0, 0], sizes = [1, 8, 8], strides = [1, 1, 1]} : vector<9x8x8xf32> to vector<1x8x8xf32>
    %107 = vector.shape_cast %106 : vector<1x8x8xf32> to vector<8x8xf32>
    %cst_27 = arith.constant dense<0.000000e+00> : vector<8x256xf32>
    %108 = tpu.matmul %107, %105, %cst_27 {dimension_numbers = #tpu.dot_dimension_numbers<[1], [0], [0], [1], [0, 0, 1, 1], [], []>} : vector<8x8xf32>, vector<8x256xf32>, vector<8x256xf32> -> vector<8x256xf32>
    %109 = arith.addf %101, %108 : vector<8x256xf32>
    %110 = vector.extract_strided_slice %94 {offsets = [0, 113], sizes = [8, 256], strides = [1, 1]} : vector<8x512xf32> to vector<8x256xf32>
    %111 = vector.extract_strided_slice %2 {offsets = [2, 0], sizes = [1, 256], strides = [1, 1]} : vector<9x256xf32> to vector<1x256xf32>
    %112 = vector.broadcast %111 : vector<1x256xf32> to vector<8x256xf32>
    %113 = arith.mulf %110, %112 : vector<8x256xf32>
    %114 = vector.extract_strided_slice %1 {offsets = [2, 0, 0], sizes = [1, 8, 8], strides = [1, 1, 1]} : vector<9x8x8xf32> to vector<1x8x8xf32>
    %115 = vector.shape_cast %114 : vector<1x8x8xf32> to vector<8x8xf32>
    %cst_28 = arith.constant dense<0.000000e+00> : vector<8x256xf32>
    %116 = tpu.matmul %115, %113, %cst_28 {dimension_numbers = #tpu.dot_dimension_numbers<[1], [0], [0], [1], [0, 0, 1, 1], [], []>} : vector<8x8xf32>, vector<8x256xf32>, vector<8x256xf32> -> vector<8x256xf32>
    %117 = arith.addf %109, %116 : vector<8x256xf32>
    %118 = vector.extract_strided_slice %94 {offsets = [0, 127], sizes = [8, 256], strides = [1, 1]} : vector<8x512xf32> to vector<8x256xf32>
    %119 = vector.extract_strided_slice %2 {offsets = [3, 0], sizes = [1, 256], strides = [1, 1]} : vector<9x256xf32> to vector<1x256xf32>
    %120 = vector.broadcast %119 : vector<1x256xf32> to vector<8x256xf32>
    %121 = arith.mulf %118, %120 : vector<8x256xf32>
    %122 = vector.extract_strided_slice %1 {offsets = [3, 0, 0], sizes = [1, 8, 8], strides = [1, 1, 1]} : vector<9x8x8xf32> to vector<1x8x8xf32>
    %123 = vector.shape_cast %122 : vector<1x8x8xf32> to vector<8x8xf32>
    %cst_29 = arith.constant dense<0.000000e+00> : vector<8x256xf32>
    %124 = tpu.matmul %123, %121, %cst_29 {dimension_numbers = #tpu.dot_dimension_numbers<[1], [0], [0], [1], [0, 0, 1, 1], [], []>} : vector<8x8xf32>, vector<8x256xf32>, vector<8x256xf32> -> vector<8x256xf32>
    %125 = arith.addf %117, %124 : vector<8x256xf32>
    %126 = vector.extract_strided_slice %94 {offsets = [0, 128], sizes = [8, 256], strides = [1, 1]} : vector<8x512xf32> to vector<8x256xf32>
    %127 = vector.extract_strided_slice %1 {offsets = [4, 0, 0], sizes = [1, 8, 8], strides = [1, 1, 1]} : vector<9x8x8xf32> to vector<1x8x8xf32>
    %128 = vector.shape_cast %127 : vector<1x8x8xf32> to vector<8x8xf32>
    %cst_30 = arith.constant dense<0.000000e+00> : vector<8x256xf32>
    %129 = tpu.matmul %128, %126, %cst_30 {dimension_numbers = #tpu.dot_dimension_numbers<[1], [0], [0], [1], [0, 0, 1, 1], [], []>} : vector<8x8xf32>, vector<8x256xf32>, vector<8x256xf32> -> vector<8x256xf32>
    %130 = arith.addf %125, %129 : vector<8x256xf32>
    %131 = vector.extract_strided_slice %94 {offsets = [0, 129], sizes = [8, 256], strides = [1, 1]} : vector<8x512xf32> to vector<8x256xf32>
    %132 = vector.extract_strided_slice %2 {offsets = [5, 0], sizes = [1, 256], strides = [1, 1]} : vector<9x256xf32> to vector<1x256xf32>
    %133 = vector.broadcast %132 : vector<1x256xf32> to vector<8x256xf32>
    %134 = arith.mulf %131, %133 : vector<8x256xf32>
    %135 = vector.extract_strided_slice %1 {offsets = [5, 0, 0], sizes = [1, 8, 8], strides = [1, 1, 1]} : vector<9x8x8xf32> to vector<1x8x8xf32>
    %136 = vector.shape_cast %135 : vector<1x8x8xf32> to vector<8x8xf32>
    %cst_31 = arith.constant dense<0.000000e+00> : vector<8x256xf32>
    %137 = tpu.matmul %136, %134, %cst_31 {dimension_numbers = #tpu.dot_dimension_numbers<[1], [0], [0], [1], [0, 0, 1, 1], [], []>} : vector<8x8xf32>, vector<8x256xf32>, vector<8x256xf32> -> vector<8x256xf32>
    %138 = arith.addf %130, %137 : vector<8x256xf32>
    %139 = vector.extract_strided_slice %94 {offsets = [0, 143], sizes = [8, 256], strides = [1, 1]} : vector<8x512xf32> to vector<8x256xf32>
    %140 = vector.extract_strided_slice %2 {offsets = [6, 0], sizes = [1, 256], strides = [1, 1]} : vector<9x256xf32> to vector<1x256xf32>
    %141 = vector.broadcast %140 : vector<1x256xf32> to vector<8x256xf32>
    %142 = arith.mulf %139, %141 : vector<8x256xf32>
    %143 = vector.extract_strided_slice %1 {offsets = [6, 0, 0], sizes = [1, 8, 8], strides = [1, 1, 1]} : vector<9x8x8xf32> to vector<1x8x8xf32>
    %144 = vector.shape_cast %143 : vector<1x8x8xf32> to vector<8x8xf32>
    %cst_32 = arith.constant dense<0.000000e+00> : vector<8x256xf32>
    %145 = tpu.matmul %144, %142, %cst_32 {dimension_numbers = #tpu.dot_dimension_numbers<[1], [0], [0], [1], [0, 0, 1, 1], [], []>} : vector<8x8xf32>, vector<8x256xf32>, vector<8x256xf32> -> vector<8x256xf32>
    %146 = arith.addf %138, %145 : vector<8x256xf32>
    %147 = vector.extract_strided_slice %94 {offsets = [0, 144], sizes = [8, 256], strides = [1, 1]} : vector<8x512xf32> to vector<8x256xf32>
    %148 = vector.extract_strided_slice %2 {offsets = [7, 0], sizes = [1, 256], strides = [1, 1]} : vector<9x256xf32> to vector<1x256xf32>
    %149 = vector.broadcast %148 : vector<1x256xf32> to vector<8x256xf32>
    %150 = arith.mulf %147, %149 : vector<8x256xf32>
    %151 = vector.extract_strided_slice %1 {offsets = [7, 0, 0], sizes = [1, 8, 8], strides = [1, 1, 1]} : vector<9x8x8xf32> to vector<1x8x8xf32>
    %152 = vector.shape_cast %151 : vector<1x8x8xf32> to vector<8x8xf32>
    %cst_33 = arith.constant dense<0.000000e+00> : vector<8x256xf32>
    %153 = tpu.matmul %152, %150, %cst_33 {dimension_numbers = #tpu.dot_dimension_numbers<[1], [0], [0], [1], [0, 0, 1, 1], [], []>} : vector<8x8xf32>, vector<8x256xf32>, vector<8x256xf32> -> vector<8x256xf32>
    %154 = arith.addf %146, %153 : vector<8x256xf32>
    %155 = vector.extract_strided_slice %94 {offsets = [0, 145], sizes = [8, 256], strides = [1, 1]} : vector<8x512xf32> to vector<8x256xf32>
    %156 = vector.extract_strided_slice %2 {offsets = [8, 0], sizes = [1, 256], strides = [1, 1]} : vector<9x256xf32> to vector<1x256xf32>
    %157 = vector.broadcast %156 : vector<1x256xf32> to vector<8x256xf32>
    %158 = arith.mulf %155, %157 : vector<8x256xf32>
    %159 = vector.extract_strided_slice %1 {offsets = [8, 0, 0], sizes = [1, 8, 8], strides = [1, 1, 1]} : vector<9x8x8xf32> to vector<1x8x8xf32>
    %160 = vector.shape_cast %159 : vector<1x8x8xf32> to vector<8x8xf32>
    %cst_34 = arith.constant dense<0.000000e+00> : vector<8x256xf32>
    %161 = tpu.matmul %160, %158, %cst_34 {dimension_numbers = #tpu.dot_dimension_numbers<[1], [0], [0], [1], [0, 0, 1, 1], [], []>} : vector<8x8xf32>, vector<8x256xf32>, vector<8x256xf32> -> vector<8x256xf32>
    %162 = arith.addf %154, %161 : vector<8x256xf32>
    %cst_35 = arith.constant dense<0.000000e+00> : vector<8xf32>
    %163 = vector.multi_reduction <add>, %162, %cst_35 [1] : vector<8x256xf32> to vector<8xf32>
    %164 = vector.shape_cast %163 : vector<8xf32> to vector<8x1xf32>
    %cst_36 = arith.constant 3.906250e-03 : f32
    %165 = vector.broadcast %cst_36 : f32 to vector<8x1xf32>
    %166 = arith.mulf %164, %165 : vector<8x1xf32>
    %167 = vector.broadcast %166 : vector<8x1xf32> to vector<8x256xf32>
    %168 = arith.subf %162, %167 : vector<8x256xf32>
    %169 = arith.mulf %168, %168 : vector<8x256xf32>
    %cst_37 = arith.constant dense<0.000000e+00> : vector<8xf32>
    %170 = vector.multi_reduction <add>, %169, %cst_37 [1] : vector<8x256xf32> to vector<8xf32>
    %171 = vector.shape_cast %170 : vector<8xf32> to vector<8x1xf32>
    %cst_38 = arith.constant 3.906250e-03 : f32
    %172 = vector.broadcast %cst_38 : f32 to vector<8x1xf32>
    %173 = arith.mulf %171, %172 : vector<8x1xf32>
    %cst_39 = arith.constant 9.99999974E-6 : f32
    %174 = vector.broadcast %cst_39 : f32 to vector<8x1xf32>
    %175 = arith.addf %173, %174 : vector<8x1xf32>
    %176 = math.rsqrt %175 : vector<8x1xf32>
    %177 = vector.broadcast %176 : vector<8x1xf32> to vector<8x256xf32>
    %178 = arith.mulf %168, %177 : vector<8x256xf32>
    %cst_40 = arith.constant 0.000000e+00 : f32
    %179 = vector.broadcast %cst_40 : f32 to vector<8x256xf32>
    %180 = arith.maximumf %178, %179 : vector<8x256xf32>
    %c0_41 = arith.constant 0 : index
    %c0_42 = arith.constant 0 : index
    %c0_43 = arith.constant 0 : index
    %181 = vector.load %arg5[%c0_41, %c0_42, %c0_43] : memref<2x8x256xf32, #tpu.memory_space<vmem>>, vector<1x8x256xf32>
    %182 = vector.shape_cast %181 : vector<1x8x256xf32> to vector<8x256xf32>
    %183 = vector.shape_cast %180 : vector<8x256xf32> to vector<1x8x256xf32>
    tpu.vector_store %arg5[%c0_41, %c0_42, %c0_43], %183 {strides = array<i32>} : memref<2x8x256xf32, #tpu.memory_space<vmem>>, vector<1x8x256xf32>,
    %c1 = arith.constant 1 : index
    %c0_44 = arith.constant 0 : index
    %c0_45 = arith.constant 0 : index
    %184 = vector.load %arg1[%c1, %c0_44, %c0_45] : memref<2x4x256xf32, #tpu.memory_space<vmem>>, vector<1x4x256xf32>
    %185 = vector.shape_cast %184 : vector<1x4x256xf32> to vector<4x256xf32>
    %cst_46 = arith.constant 0.000000e+00 : f32
    %186 = vector.broadcast %cst_46 : f32 to vector<4x128xf32>
    %187 = tpu.concatenate %186, %185, %186 in 1 : vector<4x128xf32>, vector<4x256xf32>, vector<4x128xf32> -> vector<4x512xf32>
    %188 = vector.extract_strided_slice %187 {offsets = [0, 111], sizes = [4, 256], strides = [1, 1]} : vector<4x512xf32> to vector<4x256xf32>
    %189 = vector.extract_strided_slice %2 {offsets = [0, 0], sizes = [1, 256], strides = [1, 1]} : vector<9x256xf32> to vector<1x256xf32>
    %190 = vector.broadcast %189 : vector<1x256xf32> to vector<4x256xf32>
    %191 = arith.mulf %188, %190 : vector<4x256xf32>
    %192 = vector.extract_strided_slice %0 {offsets = [0, 0, 0], sizes = [1, 8, 4], strides = [1, 1, 1]} : vector<9x8x4xf32> to vector<1x8x4xf32>
    %193 = vector.shape_cast %192 : vector<1x8x4xf32> to vector<8x4xf32>
    %cst_47 = arith.constant dense<0.000000e+00> : vector<8x256xf32>
    %194 = tpu.matmul %193, %191, %cst_47 {dimension_numbers = #tpu.dot_dimension_numbers<[1], [0], [0], [1], [0, 0, 1, 1], [], []>} : vector<8x4xf32>, vector<4x256xf32>, vector<8x256xf32> -> vector<8x256xf32>
    %195 = vector.extract_strided_slice %187 {offsets = [0, 112], sizes = [4, 256], strides = [1, 1]} : vector<4x512xf32> to vector<4x256xf32>
    %196 = vector.extract_strided_slice %2 {offsets = [1, 0], sizes = [1, 256], strides = [1, 1]} : vector<9x256xf32> to vector<1x256xf32>
    %197 = vector.broadcast %196 : vector<1x256xf32> to vector<4x256xf32>
    %198 = arith.mulf %195, %197 : vector<4x256xf32>
    %199 = vector.extract_strided_slice %0 {offsets = [1, 0, 0], sizes = [1, 8, 4], strides = [1, 1, 1]} : vector<9x8x4xf32> to vector<1x8x4xf32>
    %200 = vector.shape_cast %199 : vector<1x8x4xf32> to vector<8x4xf32>
    %cst_48 = arith.constant dense<0.000000e+00> : vector<8x256xf32>
    %201 = tpu.matmul %200, %198, %cst_48 {dimension_numbers = #tpu.dot_dimension_numbers<[1], [0], [0], [1], [0, 0, 1, 1], [], []>} : vector<8x4xf32>, vector<4x256xf32>, vector<8x256xf32> -> vector<8x256xf32>
    %202 = arith.addf %194, %201 : vector<8x256xf32>
    %203 = vector.extract_strided_slice %187 {offsets = [0, 113], sizes = [4, 256], strides = [1, 1]} : vector<4x512xf32> to vector<4x256xf32>
    %204 = vector.extract_strided_slice %2 {offsets = [2, 0], sizes = [1, 256], strides = [1, 1]} : vector<9x256xf32> to vector<1x256xf32>
    %205 = vector.broadcast %204 : vector<1x256xf32> to vector<4x256xf32>
    %206 = arith.mulf %203, %205 : vector<4x256xf32>
    %207 = vector.extract_strided_slice %0 {offsets = [2, 0, 0], sizes = [1, 8, 4], strides = [1, 1, 1]} : vector<9x8x4xf32> to vector<1x8x4xf32>
    %208 = vector.shape_cast %207 : vector<1x8x4xf32> to vector<8x4xf32>
    %cst_49 = arith.constant dense<0.000000e+00> : vector<8x256xf32>
    %209 = tpu.matmul %208, %206, %cst_49 {dimension_numbers = #tpu.dot_dimension_numbers<[1], [0], [0], [1], [0, 0, 1, 1], [], []>} : vector<8x4xf32>, vector<4x256xf32>, vector<8x256xf32> -> vector<8x256xf32>
    %210 = arith.addf %202, %209 : vector<8x256xf32>
    %211 = vector.extract_strided_slice %187 {offsets = [0, 127], sizes = [4, 256], strides = [1, 1]} : vector<4x512xf32> to vector<4x256xf32>
    %212 = vector.extract_strided_slice %2 {offsets = [3, 0], sizes = [1, 256], strides = [1, 1]} : vector<9x256xf32> to vector<1x256xf32>
    %213 = vector.broadcast %212 : vector<1x256xf32> to vector<4x256xf32>
    %214 = arith.mulf %211, %213 : vector<4x256xf32>
    %215 = vector.extract_strided_slice %0 {offsets = [3, 0, 0], sizes = [1, 8, 4], strides = [1, 1, 1]} : vector<9x8x4xf32> to vector<1x8x4xf32>
    %216 = vector.shape_cast %215 : vector<1x8x4xf32> to vector<8x4xf32>
    %cst_50 = arith.constant dense<0.000000e+00> : vector<8x256xf32>
    %217 = tpu.matmul %216, %214, %cst_50 {dimension_numbers = #tpu.dot_dimension_numbers<[1], [0], [0], [1], [0, 0, 1, 1], [], []>} : vector<8x4xf32>, vector<4x256xf32>, vector<8x256xf32> -> vector<8x256xf32>
    %218 = arith.addf %210, %217 : vector<8x256xf32>
    %219 = vector.extract_strided_slice %187 {offsets = [0, 128], sizes = [4, 256], strides = [1, 1]} : vector<4x512xf32> to vector<4x256xf32>
    %220 = vector.extract_strided_slice %0 {offsets = [4, 0, 0], sizes = [1, 8, 4], strides = [1, 1, 1]} : vector<9x8x4xf32> to vector<1x8x4xf32>
    %221 = vector.shape_cast %220 : vector<1x8x4xf32> to vector<8x4xf32>
    %cst_51 = arith.constant dense<0.000000e+00> : vector<8x256xf32>
    %222 = tpu.matmul %221, %219, %cst_51 {dimension_numbers = #tpu.dot_dimension_numbers<[1], [0], [0], [1], [0, 0, 1, 1], [], []>} : vector<8x4xf32>, vector<4x256xf32>, vector<8x256xf32> -> vector<8x256xf32>
    %223 = arith.addf %218, %222 : vector<8x256xf32>
    %224 = vector.extract_strided_slice %187 {offsets = [0, 129], sizes = [4, 256], strides = [1, 1]} : vector<4x512xf32> to vector<4x256xf32>
    %225 = vector.extract_strided_slice %2 {offsets = [5, 0], sizes = [1, 256], strides = [1, 1]} : vector<9x256xf32> to vector<1x256xf32>
    %226 = vector.broadcast %225 : vector<1x256xf32> to vector<4x256xf32>
    %227 = arith.mulf %224, %226 : vector<4x256xf32>
    %228 = vector.extract_strided_slice %0 {offsets = [5, 0, 0], sizes = [1, 8, 4], strides = [1, 1, 1]} : vector<9x8x4xf32> to vector<1x8x4xf32>
    %229 = vector.shape_cast %228 : vector<1x8x4xf32> to vector<8x4xf32>
    %cst_52 = arith.constant dense<0.000000e+00> : vector<8x256xf32>
    %230 = tpu.matmul %229, %227, %cst_52 {dimension_numbers = #tpu.dot_dimension_numbers<[1], [0], [0], [1], [0, 0, 1, 1], [], []>} : vector<8x4xf32>, vector<4x256xf32>, vector<8x256xf32> -> vector<8x256xf32>
    %231 = arith.addf %223, %230 : vector<8x256xf32>
    %232 = vector.extract_strided_slice %187 {offsets = [0, 143], sizes = [4, 256], strides = [1, 1]} : vector<4x512xf32> to vector<4x256xf32>
    %233 = vector.extract_strided_slice %2 {offsets = [6, 0], sizes = [1, 256], strides = [1, 1]} : vector<9x256xf32> to vector<1x256xf32>
    %234 = vector.broadcast %233 : vector<1x256xf32> to vector<4x256xf32>
    %235 = arith.mulf %232, %234 : vector<4x256xf32>
    %236 = vector.extract_strided_slice %0 {offsets = [6, 0, 0], sizes = [1, 8, 4], strides = [1, 1, 1]} : vector<9x8x4xf32> to vector<1x8x4xf32>
    %237 = vector.shape_cast %236 : vector<1x8x4xf32> to vector<8x4xf32>
    %cst_53 = arith.constant dense<0.000000e+00> : vector<8x256xf32>
    %238 = tpu.matmul %237, %235, %cst_53 {dimension_numbers = #tpu.dot_dimension_numbers<[1], [0], [0], [1], [0, 0, 1, 1], [], []>} : vector<8x4xf32>, vector<4x256xf32>, vector<8x256xf32> -> vector<8x256xf32>
    %239 = arith.addf %231, %238 : vector<8x256xf32>
    %240 = vector.extract_strided_slice %187 {offsets = [0, 144], sizes = [4, 256], strides = [1, 1]} : vector<4x512xf32> to vector<4x256xf32>
    %241 = vector.extract_strided_slice %2 {offsets = [7, 0], sizes = [1, 256], strides = [1, 1]} : vector<9x256xf32> to vector<1x256xf32>
    %242 = vector.broadcast %241 : vector<1x256xf32> to vector<4x256xf32>
    %243 = arith.mulf %240, %242 : vector<4x256xf32>
    %244 = vector.extract_strided_slice %0 {offsets = [7, 0, 0], sizes = [1, 8, 4], strides = [1, 1, 1]} : vector<9x8x4xf32> to vector<1x8x4xf32>
    %245 = vector.shape_cast %244 : vector<1x8x4xf32> to vector<8x4xf32>
    %cst_54 = arith.constant dense<0.000000e+00> : vector<8x256xf32>
    %246 = tpu.matmul %245, %243, %cst_54 {dimension_numbers = #tpu.dot_dimension_numbers<[1], [0], [0], [1], [0, 0, 1, 1], [], []>} : vector<8x4xf32>, vector<4x256xf32>, vector<8x256xf32> -> vector<8x256xf32>
    %247 = arith.addf %239, %246 : vector<8x256xf32>
    %248 = vector.extract_strided_slice %187 {offsets = [0, 145], sizes = [4, 256], strides = [1, 1]} : vector<4x512xf32> to vector<4x256xf32>
    %249 = vector.extract_strided_slice %2 {offsets = [8, 0], sizes = [1, 256], strides = [1, 1]} : vector<9x256xf32> to vector<1x256xf32>
    %250 = vector.broadcast %249 : vector<1x256xf32> to vector<4x256xf32>
    %251 = arith.mulf %248, %250 : vector<4x256xf32>
    %252 = vector.extract_strided_slice %0 {offsets = [8, 0, 0], sizes = [1, 8, 4], strides = [1, 1, 1]} : vector<9x8x4xf32> to vector<1x8x4xf32>
    %253 = vector.shape_cast %252 : vector<1x8x4xf32> to vector<8x4xf32>
    %cst_55 = arith.constant dense<0.000000e+00> : vector<8x256xf32>
    %254 = tpu.matmul %253, %251, %cst_55 {dimension_numbers = #tpu.dot_dimension_numbers<[1], [0], [0], [1], [0, 0, 1, 1], [], []>} : vector<8x4xf32>, vector<4x256xf32>, vector<8x256xf32> -> vector<8x256xf32>
    %255 = arith.addf %247, %254 : vector<8x256xf32>
    %cst_56 = arith.constant dense<0.000000e+00> : vector<8xf32>
    %256 = vector.multi_reduction <add>, %255, %cst_56 [1] : vector<8x256xf32> to vector<8xf32>
    %257 = vector.shape_cast %256 : vector<8xf32> to vector<8x1xf32>
    %cst_57 = arith.constant 3.906250e-03 : f32
    %258 = vector.broadcast %cst_57 : f32 to vector<8x1xf32>
    %259 = arith.mulf %257, %258 : vector<8x1xf32>
    %260 = vector.broadcast %259 : vector<8x1xf32> to vector<8x256xf32>
    %261 = arith.subf %255, %260 : vector<8x256xf32>
    %262 = arith.mulf %261, %261 : vector<8x256xf32>
    %cst_58 = arith.constant dense<0.000000e+00> : vector<8xf32>
    %263 = vector.multi_reduction <add>, %262, %cst_58 [1] : vector<8x256xf32> to vector<8xf32>
    %264 = vector.shape_cast %263 : vector<8xf32> to vector<8x1xf32>
    %cst_59 = arith.constant 3.906250e-03 : f32
    %265 = vector.broadcast %cst_59 : f32 to vector<8x1xf32>
    %266 = arith.mulf %264, %265 : vector<8x1xf32>
    %cst_60 = arith.constant 9.99999974E-6 : f32
    %267 = vector.broadcast %cst_60 : f32 to vector<8x1xf32>
    %268 = arith.addf %266, %267 : vector<8x1xf32>
    %269 = math.rsqrt %268 : vector<8x1xf32>
    %270 = vector.broadcast %269 : vector<8x1xf32> to vector<8x256xf32>
    %271 = arith.mulf %261, %270 : vector<8x256xf32>
    %cst_61 = arith.constant 0.000000e+00 : f32
    %272 = vector.broadcast %cst_61 : f32 to vector<8x256xf32>
    %273 = arith.maximumf %271, %272 : vector<8x256xf32>
    %cst_62 = arith.constant 0.000000e+00 : f32
    %274 = vector.broadcast %cst_62 : f32 to vector<8x128xf32>
    %275 = tpu.concatenate %274, %273, %274 in 1 : vector<8x128xf32>, vector<8x256xf32>, vector<8x128xf32> -> vector<8x512xf32>
    %276 = vector.extract_strided_slice %275 {offsets = [0, 111], sizes = [8, 256], strides = [1, 1]} : vector<8x512xf32> to vector<8x256xf32>
    %277 = vector.extract_strided_slice %2 {offsets = [0, 0], sizes = [1, 256], strides = [1, 1]} : vector<9x256xf32> to vector<1x256xf32>
    %278 = vector.broadcast %277 : vector<1x256xf32> to vector<8x256xf32>
    %279 = arith.mulf %276, %278 : vector<8x256xf32>
    %280 = vector.extract_strided_slice %1 {offsets = [0, 0, 0], sizes = [1, 8, 8], strides = [1, 1, 1]} : vector<9x8x8xf32> to vector<1x8x8xf32>
    %281 = vector.shape_cast %280 : vector<1x8x8xf32> to vector<8x8xf32>
    %cst_63 = arith.constant dense<0.000000e+00> : vector<8x256xf32>
    %282 = tpu.matmul %281, %279, %cst_63 {dimension_numbers = #tpu.dot_dimension_numbers<[1], [0], [0], [1], [0, 0, 1, 1], [], []>} : vector<8x8xf32>, vector<8x256xf32>, vector<8x256xf32> -> vector<8x256xf32>
    %283 = vector.extract_strided_slice %275 {offsets = [0, 112], sizes = [8, 256], strides = [1, 1]} : vector<8x512xf32> to vector<8x256xf32>
    %284 = vector.extract_strided_slice %2 {offsets = [1, 0], sizes = [1, 256], strides = [1, 1]} : vector<9x256xf32> to vector<1x256xf32>
    %285 = vector.broadcast %284 : vector<1x256xf32> to vector<8x256xf32>
    %286 = arith.mulf %283, %285 : vector<8x256xf32>
    %287 = vector.extract_strided_slice %1 {offsets = [1, 0, 0], sizes = [1, 8, 8], strides = [1, 1, 1]} : vector<9x8x8xf32> to vector<1x8x8xf32>
    %288 = vector.shape_cast %287 : vector<1x8x8xf32> to vector<8x8xf32>
    %cst_64 = arith.constant dense<0.000000e+00> : vector<8x256xf32>
    %289 = tpu.matmul %288, %286, %cst_64 {dimension_numbers = #tpu.dot_dimension_numbers<[1], [0], [0], [1], [0, 0, 1, 1], [], []>} : vector<8x8xf32>, vector<8x256xf32>, vector<8x256xf32> -> vector<8x256xf32>
    %290 = arith.addf %282, %289 : vector<8x256xf32>
    %291 = vector.extract_strided_slice %275 {offsets = [0, 113], sizes = [8, 256], strides = [1, 1]} : vector<8x512xf32> to vector<8x256xf32>
    %292 = vector.extract_strided_slice %2 {offsets = [2, 0], sizes = [1, 256], strides = [1, 1]} : vector<9x256xf32> to vector<1x256xf32>
    %293 = vector.broadcast %292 : vector<1x256xf32> to vector<8x256xf32>
    %294 = arith.mulf %291, %293 : vector<8x256xf32>
    %295 = vector.extract_strided_slice %1 {offsets = [2, 0, 0], sizes = [1, 8, 8], strides = [1, 1, 1]} : vector<9x8x8xf32> to vector<1x8x8xf32>
    %296 = vector.shape_cast %295 : vector<1x8x8xf32> to vector<8x8xf32>
    %cst_65 = arith.constant dense<0.000000e+00> : vector<8x256xf32>
    %297 = tpu.matmul %296, %294, %cst_65 {dimension_numbers = #tpu.dot_dimension_numbers<[1], [0], [0], [1], [0, 0, 1, 1], [], []>} : vector<8x8xf32>, vector<8x256xf32>, vector<8x256xf32> -> vector<8x256xf32>
    %298 = arith.addf %290, %297 : vector<8x256xf32>
    %299 = vector.extract_strided_slice %275 {offsets = [0, 127], sizes = [8, 256], strides = [1, 1]} : vector<8x512xf32> to vector<8x256xf32>
    %300 = vector.extract_strided_slice %2 {offsets = [3, 0], sizes = [1, 256], strides = [1, 1]} : vector<9x256xf32> to vector<1x256xf32>
    %301 = vector.broadcast %300 : vector<1x256xf32> to vector<8x256xf32>
    %302 = arith.mulf %299, %301 : vector<8x256xf32>
    %303 = vector.extract_strided_slice %1 {offsets = [3, 0, 0], sizes = [1, 8, 8], strides = [1, 1, 1]} : vector<9x8x8xf32> to vector<1x8x8xf32>
    %304 = vector.shape_cast %303 : vector<1x8x8xf32> to vector<8x8xf32>
    %cst_66 = arith.constant dense<0.000000e+00> : vector<8x256xf32>
    %305 = tpu.matmul %304, %302, %cst_66 {dimension_numbers = #tpu.dot_dimension_numbers<[1], [0], [0], [1], [0, 0, 1, 1], [], []>} : vector<8x8xf32>, vector<8x256xf32>, vector<8x256xf32> -> vector<8x256xf32>
    %306 = arith.addf %298, %305 : vector<8x256xf32>
    %307 = vector.extract_strided_slice %275 {offsets = [0, 128], sizes = [8, 256], strides = [1, 1]} : vector<8x512xf32> to vector<8x256xf32>
    %308 = vector.extract_strided_slice %1 {offsets = [4, 0, 0], sizes = [1, 8, 8], strides = [1, 1, 1]} : vector<9x8x8xf32> to vector<1x8x8xf32>
    %309 = vector.shape_cast %308 : vector<1x8x8xf32> to vector<8x8xf32>
    %cst_67 = arith.constant dense<0.000000e+00> : vector<8x256xf32>
    %310 = tpu.matmul %309, %307, %cst_67 {dimension_numbers = #tpu.dot_dimension_numbers<[1], [0], [0], [1], [0, 0, 1, 1], [], []>} : vector<8x8xf32>, vector<8x256xf32>, vector<8x256xf32> -> vector<8x256xf32>
    %311 = arith.addf %306, %310 : vector<8x256xf32>
    %312 = vector.extract_strided_slice %275 {offsets = [0, 129], sizes = [8, 256], strides = [1, 1]} : vector<8x512xf32> to vector<8x256xf32>
    %313 = vector.extract_strided_slice %2 {offsets = [5, 0], sizes = [1, 256], strides = [1, 1]} : vector<9x256xf32> to vector<1x256xf32>
    %314 = vector.broadcast %313 : vector<1x256xf32> to vector<8x256xf32>
    %315 = arith.mulf %312, %314 : vector<8x256xf32>
    %316 = vector.extract_strided_slice %1 {offsets = [5, 0, 0], sizes = [1, 8, 8], strides = [1, 1, 1]} : vector<9x8x8xf32> to vector<1x8x8xf32>
    %317 = vector.shape_cast %316 : vector<1x8x8xf32> to vector<8x8xf32>
    %cst_68 = arith.constant dense<0.000000e+00> : vector<8x256xf32>
    %318 = tpu.matmul %317, %315, %cst_68 {dimension_numbers = #tpu.dot_dimension_numbers<[1], [0], [0], [1], [0, 0, 1, 1], [], []>} : vector<8x8xf32>, vector<8x256xf32>, vector<8x256xf32> -> vector<8x256xf32>
    %319 = arith.addf %311, %318 : vector<8x256xf32>
    %320 = vector.extract_strided_slice %275 {offsets = [0, 143], sizes = [8, 256], strides = [1, 1]} : vector<8x512xf32> to vector<8x256xf32>
    %321 = vector.extract_strided_slice %2 {offsets = [6, 0], sizes = [1, 256], strides = [1, 1]} : vector<9x256xf32> to vector<1x256xf32>
    %322 = vector.broadcast %321 : vector<1x256xf32> to vector<8x256xf32>
    %323 = arith.mulf %320, %322 : vector<8x256xf32>
    %324 = vector.extract_strided_slice %1 {offsets = [6, 0, 0], sizes = [1, 8, 8], strides = [1, 1, 1]} : vector<9x8x8xf32> to vector<1x8x8xf32>
    %325 = vector.shape_cast %324 : vector<1x8x8xf32> to vector<8x8xf32>
    %cst_69 = arith.constant dense<0.000000e+00> : vector<8x256xf32>
    %326 = tpu.matmul %325, %323, %cst_69 {dimension_numbers = #tpu.dot_dimension_numbers<[1], [0], [0], [1], [0, 0, 1, 1], [], []>} : vector<8x8xf32>, vector<8x256xf32>, vector<8x256xf32> -> vector<8x256xf32>
    %327 = arith.addf %319, %326 : vector<8x256xf32>
    %328 = vector.extract_strided_slice %275 {offsets = [0, 144], sizes = [8, 256], strides = [1, 1]} : vector<8x512xf32> to vector<8x256xf32>
    %329 = vector.extract_strided_slice %2 {offsets = [7, 0], sizes = [1, 256], strides = [1, 1]} : vector<9x256xf32> to vector<1x256xf32>
    %330 = vector.broadcast %329 : vector<1x256xf32> to vector<8x256xf32>
    %331 = arith.mulf %328, %330 : vector<8x256xf32>
    %332 = vector.extract_strided_slice %1 {offsets = [7, 0, 0], sizes = [1, 8, 8], strides = [1, 1, 1]} : vector<9x8x8xf32> to vector<1x8x8xf32>
    %333 = vector.shape_cast %332 : vector<1x8x8xf32> to vector<8x8xf32>
    %cst_70 = arith.constant dense<0.000000e+00> : vector<8x256xf32>
    %334 = tpu.matmul %333, %331, %cst_70 {dimension_numbers = #tpu.dot_dimension_numbers<[1], [0], [0], [1], [0, 0, 1, 1], [], []>} : vector<8x8xf32>, vector<8x256xf32>, vector<8x256xf32> -> vector<8x256xf32>
    %335 = arith.addf %327, %334 : vector<8x256xf32>
    %336 = vector.extract_strided_slice %275 {offsets = [0, 145], sizes = [8, 256], strides = [1, 1]} : vector<8x512xf32> to vector<8x256xf32>
    %337 = vector.extract_strided_slice %2 {offsets = [8, 0], sizes = [1, 256], strides = [1, 1]} : vector<9x256xf32> to vector<1x256xf32>
    %338 = vector.broadcast %337 : vector<1x256xf32> to vector<8x256xf32>
    %339 = arith.mulf %336, %338 : vector<8x256xf32>
    %340 = vector.extract_strided_slice %1 {offsets = [8, 0, 0], sizes = [1, 8, 8], strides = [1, 1, 1]} : vector<9x8x8xf32> to vector<1x8x8xf32>
    %341 = vector.shape_cast %340 : vector<1x8x8xf32> to vector<8x8xf32>
    %cst_71 = arith.constant dense<0.000000e+00> : vector<8x256xf32>
    %342 = tpu.matmul %341, %339, %cst_71 {dimension_numbers = #tpu.dot_dimension_numbers<[1], [0], [0], [1], [0, 0, 1, 1], [], []>} : vector<8x8xf32>, vector<8x256xf32>, vector<8x256xf32> -> vector<8x256xf32>
    %343 = arith.addf %335, %342 : vector<8x256xf32>
    %cst_72 = arith.constant dense<0.000000e+00> : vector<8xf32>
    %344 = vector.multi_reduction <add>, %343, %cst_72 [1] : vector<8x256xf32> to vector<8xf32>
    %345 = vector.shape_cast %344 : vector<8xf32> to vector<8x1xf32>
    %cst_73 = arith.constant 3.906250e-03 : f32
    %346 = vector.broadcast %cst_73 : f32 to vector<8x1xf32>
    %347 = arith.mulf %345, %346 : vector<8x1xf32>
    %348 = vector.broadcast %347 : vector<8x1xf32> to vector<8x256xf32>
    %349 = arith.subf %343, %348 : vector<8x256xf32>
    %350 = arith.mulf %349, %349 : vector<8x256xf32>
    %cst_74 = arith.constant dense<0.000000e+00> : vector<8xf32>
    %351 = vector.multi_reduction <add>, %350, %cst_74 [1] : vector<8x256xf32> to vector<8xf32>
    %352 = vector.shape_cast %351 : vector<8xf32> to vector<8x1xf32>
    %cst_75 = arith.constant 3.906250e-03 : f32
    %353 = vector.broadcast %cst_75 : f32 to vector<8x1xf32>
    %354 = arith.mulf %352, %353 : vector<8x1xf32>
    %cst_76 = arith.constant 9.99999974E-6 : f32
    %355 = vector.broadcast %cst_76 : f32 to vector<8x1xf32>
    %356 = arith.addf %354, %355 : vector<8x1xf32>
    %357 = math.rsqrt %356 : vector<8x1xf32>
    %358 = vector.broadcast %357 : vector<8x1xf32> to vector<8x256xf32>
    %359 = arith.mulf %349, %358 : vector<8x256xf32>
    %cst_77 = arith.constant 0.000000e+00 : f32
    %360 = vector.broadcast %cst_77 : f32 to vector<8x256xf32>
    %361 = arith.maximumf %359, %360 : vector<8x256xf32>
    %c1_78 = arith.constant 1 : index
    %c0_79 = arith.constant 0 : index
    %c0_80 = arith.constant 0 : index
    %362 = vector.load %arg5[%c1_78, %c0_79, %c0_80] : memref<2x8x256xf32, #tpu.memory_space<vmem>>, vector<1x8x256xf32>
    %363 = vector.shape_cast %362 : vector<1x8x256xf32> to vector<8x256xf32>
    %364 = vector.shape_cast %361 : vector<8x256xf32> to vector<1x8x256xf32>
    tpu.vector_store %arg5[%c1_78, %c0_79, %c0_80], %364 {strides = array<i32>} : memref<2x8x256xf32, #tpu.memory_space<vmem>>, vector<1x8x256xf32>,
    return
  }
  func.func @transform_0(%arg0: i32) -> (i32, i32, i32) {
    %c0_i32 = arith.constant 0 : i32
    %c0_i32_0 = arith.constant 0 : i32
    %c0_i32_1 = arith.constant 0 : i32
    return %arg0, %c0_i32, %c0_i32_0 : i32, i32, i32
  }
  func.func @transform_1(%arg0: i32) -> (i32, i32, i32) {
    %c0_i32 = arith.constant 0 : i32
    %c0_i32_0 = arith.constant 0 : i32
    %c0_i32_1 = arith.constant 0 : i32
    %c0_i32_2 = arith.constant 0 : i32
    return %c0_i32, %c0_i32_0, %c0_i32_1 : i32, i32, i32
  }
  func.func @transform_2(%arg0: i32) -> (i32, i32, i32) {
    %c0_i32 = arith.constant 0 : i32
    %c0_i32_0 = arith.constant 0 : i32
    %c0_i32_1 = arith.constant 0 : i32
    %c0_i32_2 = arith.constant 0 : i32
    return %c0_i32, %c0_i32_0, %c0_i32_1 : i32, i32, i32
  }
  func.func @transform_3(%arg0: i32) -> (i32, i32) {
    %c0_i32 = arith.constant 0 : i32
    %c0_i32_0 = arith.constant 0 : i32
    %c0_i32_1 = arith.constant 0 : i32
    return %c0_i32, %c0_i32_0 : i32, i32
  }
  func.func @transform_4(%arg0: i32) -> (i32, i32, i32) {
    %c0_i32 = arith.constant 0 : i32
    %c0_i32_0 = arith.constant 0 : i32
    %c0_i32_1 = arith.constant 0 : i32
    return %arg0, %c0_i32, %c0_i32_0 : i32, i32, i32
  }
}

</mosaic_0001>

<llo_original>
// kernel: tpu_custom_call.1
$region0: #{tpu_custom_call.1}
  #allocation0 [shape = 'u32[]', space=smem, size = 0x4, offset = 0x4, fixed_abs, tag = 'smem constant byte address 0x4 - core index']
  #allocation1 [shape = 'u32[144,128]{1,0:T(1,128)}', space=vmem, size = 0x12000, scoped, tag = 'internal scratch']
  %s0 = inlined_call_operand.vmem [shape: f32[2,4,256], index: 0, kind: input, shape index: {}]
  %s1 = inlined_call_operand.vmem [shape: f32[9,8,4], index: 1, kind: input, shape index: {}]
  %s2 = inlined_call_operand.vmem [shape: f32[9,8,8], index: 2, kind: input, shape index: {}]
  %s3 = inlined_call_operand.vmem [shape: f32[9,256], index: 3, kind: input, shape index: {}]
  %s4 = inlined_call_operand.hbm [shape: f32[2,8,256], index: 4, kind: output, shape index: {}]
  %s5 = sld [smem:[#allocation0]]
  $region26: #{tpu_custom_call.1} parent=0
    _
  %s7 = ssub.s32 1, %s5
  %s8 = scalar_select 0, %s7, %s5
  $region1: #{tpu_custom_call.1} parent=0
    #allocation2 [shape = 'u8[16384]{0}', space=vmem, size = 0x4000, scoped, tag = 'output window, operand 0, single buffered']
    #allocation3 [shape = 's32[1]{0}', space=sflag, size = 0x4, scoped, tag = 'scoped memory for tpu_custom_call.1']
    %9 = vsyncpa [#allocation3], 0
    // Predicated region
    $region2: #{tpu_custom_call.1} parent=1 // pred_check
      _
    $region3: #{tpu_custom_call.1} parent=1 // pred_check_branch
      %11 = sbr.rel (0) target = $region5
    $region4: #{tpu_custom_call.1} parent=1 // pred_region
      _
    $region5: #{tpu_custom_call.1} parent=1 // pred_fallthru
      _
    // Predicated region
    $region6: #{tpu_custom_call.1} parent=1 // pred_check
      _
    $region7: #{tpu_custom_call.1} parent=1 // pred_check_branch
      %13 = sbr.rel (0) target = $region9
    $region8: #{tpu_custom_call.1} parent=1 // pred_region
      _
    $region9: #{tpu_custom_call.1} parent=1 // pred_fallthru
      _
    // Predicated region
    $region10: #{tpu_custom_call.1} parent=1 // pred_check
      _
    $region11: #{tpu_custom_call.1} parent=1 // pred_check_branch
      %15 = sbr.rel (0) target = $region13
    $region12: #{tpu_custom_call.1} parent=1 // pred_region
      _
    $region13: #{tpu_custom_call.1} parent=1 // pred_fallthru
      _
    // Predicated region
    $region14: #{tpu_custom_call.1} parent=1 // pred_check
      _
    $region15: #{tpu_custom_call.1} parent=1 // pred_check_branch
      %17 = sbr.rel (0) target = $region17
    $region16: #{tpu_custom_call.1} parent=1 // pred_region
      _
    $region17: #{tpu_custom_call.1} parent=1 // pred_fallthru
      _
    %v18 = vld [vmem:[%s1] sm:$0xff]
    %v19 = vld [vmem:[%s1 + $0x8] sm:$0xff]
    %v20 = vld [vmem:[%s1 + $0x10] sm:$0xff]
    %v21 = vld [vmem:[%s1 + $0x18] sm:$0xff]
    %v22 = vld [vmem:[%s1 + $0x20] sm:$0xff]
    %v23 = vld [vmem:[%s1 + $0x28] sm:$0xff]
    %v24 = vld [vmem:[%s1 + $0x30] sm:$0xff]
    %v25 = vld [vmem:[%s1 + $0x38] sm:$0xff]
    %v26 = vld [vmem:[%s1 + $0x40] sm:$0xff]
    %v27 = vld [vmem:[%s2] sm:$0xff]
    %v28 = vld [vmem:[%s2 + $0x8] sm:$0xff]
    %v29 = vld [vmem:[%s2 + $0x10] sm:$0xff]
    %v30 = vld [vmem:[%s2 + $0x18] sm:$0xff]
    %v31 = vld [vmem:[%s2 + $0x20] sm:$0xff]
    %v32 = vld [vmem:[%s2 + $0x28] sm:$0xff]
    %v33 = vld [vmem:[%s2 + $0x30] sm:$0xff]
    %v34 = vld [vmem:[%s2 + $0x38] sm:$0xff]
    %v35 = vld [vmem:[%s2 + $0x40] sm:$0xff]
    %v36 = vld [vmem:[%s3] sm:$0xff]
    %v37 = vld [vmem:[%s3 + $0x8] sm:$0xff]
    %v38 = vld [vmem:[%s3 + $0x10] sm:$0x1]
    %v39 = vld [vmem:[%s3 + $0x18] sm:$0x1]
    %v40 = vld [vmem:[%s0] sm:$0xff]
    %v42 = vcombine.high %v40, %v40
    %v44 = vlaneseq
    %v45 = vshrl.u32 %v44, 7
    %v46 = vsub.s32 0, %v45
    %v47 = vrot.slane %v36, %v46
    %v48 = vlaneseq
    %v49 = vshrl.u32 %v48, 7
    %v50 = vsub.s32 0, %v49
    %v51 = vrot.slane %v37, %v50
    %54 = vrot.lane.b32.xlu0 %v47, 111
    %v55 = vpop.permute.xlu0 %54
    %56 = vrot.lane.b32.xlu0 %v51, 111
    %v57 = vpop.permute.xlu0 %56
    %vm58 = vcmask 908288
    %v59 = vsel %vm58, %v55, %v57
    %v63 = vmul.f32 %v55, 0.0
    %v64 = vmul.f32 %v40, %v59
    %v65 = vmul.f32 %v42, %v57
    %v66 = vlaneseq
    %v67 = vshrl.u32 %v66, 7
    %v68 = vsub.s32 1, %v67
    %v69 = vrot.slane %v36, %v68
    %v70 = vlaneseq
    %v71 = vshrl.u32 %v70, 7
    %v72 = vsub.s32 1, %v71
    %v73 = vrot.slane %v37, %v72
    %76 = vrot.lane.b32.xlu0 %v69, 112
    %v77 = vpop.permute.xlu0 %76
    %78 = vrot.lane.b32.xlu0 %v73, 112
    %v79 = vpop.permute.xlu0 %78
    %vm80 = vcmask 916480
    %v81 = vsel %vm80, %v77, %v79
    %v85 = vmul.f32 %v77, 0.0
    %v86 = vmul.f32 %v40, %v81
    %v87 = vmul.f32 %v42, %v79
    %91 = vrot.lane.b32.xlu0 %v85, 16
    %v92 = vpop.permute.xlu0 %91
    %93 = vrot.lane.b32.xlu0 %v86, 16
    %v94 = vpop.permute.xlu0 %93
    %95 = vrot.lane.b32.xlu0 %v87, 16
    %v96 = vpop.permute.xlu0 %95
    %vm97 = vcmask 130048
    %v98 = vsel %vm97, %v92, %v94
    %v99 = vsel %vm97, %v94, %v96
    %vm100 = vcmask 31744
    %v102 = vsel %vm100, %v19, 0
    %vm104 = vcmask 1043456
    %v105 = vsel %vm104, %v98, 0
    %v107 = vsel %vm104, %v99, 0
    %109 = vmatprep.subr.mxu0 %v107
    %110 = vmatpush1.msra.mxu0 %v105
    %111 = vmatprep.subr.mxu0 0.0
    %112 = vmatpush1.msra.mxu0 0.0
    %113 = vmatprep.subr.mxu0 0.0
    %114 = vmatpush1.msra.mxu0 0.0
    %115 = vmatprep.subr.mxu0 0.0
    %116 = vmatpush1.msra.mxu0 0.0
    %117 = vmatprep.subr.mxu0 0.0
    %118 = vmatpush1.msra.mxu0 0.0
    %119 = vmatprep.subr.mxu0 0.0
    %120 = vmatpush1.msra.mxu0 0.0
    %121 = vmatprep.subr.mxu0 0.0
    %122 = vmatpush1.msra.mxu0 0.0
    %123 = vmatprep.subr.mxu0 0.0
    %124 = vmatpush1.msra.mxu0 0.0
    %125 = vmatprep.subr.mxu0 0.0
    %126 = vmatpush1.msra.mxu0 0.0
    %127 = vmatprep.subr.mxu0 0.0
    %128 = vmatpush1.msra.mxu0 0.0
    %129 = vmatprep.subr.mxu0 0.0
    %130 = vmatpush1.msra.mxu0 0.0
    %131 = vmatprep.subr.mxu0 0.0
    %132 = vmatpush1.msra.mxu0 0.0
    %133 = vmatprep.subr.mxu0 0.0
    %134 = vmatpush1.msra.mxu0 0.0
    %135 = vmatprep.subr.mxu0 0.0
    %136 = vmatpush1.msra.mxu0 0.0
    %137 = vmatprep.subr.mxu0 0.0
    %138 = vmatpush1.msra.mxu0 0.0
    %139 = vmatprep.subr.mxu0 0.0
    %140 = vmatpush1.msra.mxu0 0.0
    %141 = vmatprep.subr.mxu0 0.0
    %142 = vmatpush1.msra.mxu0 0.0
    %143 = vmatprep.subr.mxu0 0.0
    %144 = vmatpush1.msra.mxu0 0.0
    %145 = vmatprep.subr.mxu0 0.0
    %146 = vmatpush1.msra.mxu0 0.0
    %147 = vmatprep.subr.mxu0 0.0
    %148 = vmatpush1.msra.mxu0 0.0
    %149 = vmatprep.subr.mxu0 0.0
    %150 = vmatpush1.msra.mxu0 0.0
    %151 = vmatprep.subr.mxu0 0.0
    %152 = vmatpush1.msra.mxu0 0.0
    %153 = vmatprep.subr.mxu0 0.0
    %154 = vmatpush1.msra.mxu0 0.0
    %155 = vmatprep.subr.mxu0 0.0
    %156 = vmatpush1.msra.mxu0 0.0
    %157 = vmatprep.subr.mxu0 0.0
    %158 = vmatpush1.msra.mxu0 0.0
    %159 = vmatprep.subr.mxu0 0.0
    %160 = vmatpush1.msra.mxu0 0.0
    %161 = vmatprep.subr.mxu0 0.0
    %162 = vmatpush1.msra.mxu0 0.0
    %163 = vmatprep.subr.mxu0 0.0
    %164 = vmatpush1.msra.mxu0 0.0
    %165 = vmatprep.subr.mxu0 0.0
    %166 = vmatpush1.msra.mxu0 0.0
    %167 = vmatprep.subr.mxu0 0.0
    %168 = vmatpush1.msra.mxu0 0.0
    %169 = vmatprep.subr.mxu0 0.0
    %170 = vmatpush1.msra.mxu0 0.0
    %171 = vmatprep.subr.mxu0 0.0
    %172 = vmatpush1.msra.mxu0 0.0
    %173 = vmatprep.mubr.f32.mxu0 0.0
    %174 = vmatmul.mubr.f32.gmra.mrb[0].mxu0 %v102
    %v175 = vpop.f32.mrb[0].mxu0
    %v176 = vadd.f32 0.0, %v175
    %v177 = vpop.f32.mrb[0].mxu0
    %v178 = vadd.f32 0.0, %v177
    %179 = vdwg.mxu0
    %183 = vrot.lane.b32.xlu0 %v63, 17
    %v184 = vpop.permute.xlu0 %183
    %185 = vrot.lane.b32.xlu0 %v64, 17
    %v186 = vpop.permute.xlu0 %185
    %187 = vrot.lane.b32.xlu0 %v65, 17
    %v188 = vpop.permute.xlu0 %187
    %vm189 = vcmask 138240
    %v190 = vsel %vm189, %v184, %v186
    %v191 = vsel %vm189, %v186, %v188
    %v193 = vsel %vm100, %v18, 0
    %v195 = vsel %vm104, %v190, 0
    %v197 = vsel %vm104, %v191, 0
    %199 = vmatprep.subr.mxu0 %v197
    %200 = vmatpush1.msra.mxu0 %v195
    %201 = vmatprep.subr.mxu0 0.0
    %202 = vmatpush1.msra.mxu0 0.0
    %203 = vmatprep.subr.mxu0 0.0
    %204 = vmatpush1.msra.mxu0 0.0
    %205 = vmatprep.subr.mxu0 0.0
    %206 = vmatpush1.msra.mxu0 0.0
    %207 = vmatprep.subr.mxu0 0.0
    %208 = vmatpush1.msra.mxu0 0.0
    %209 = vmatprep.subr.mxu0 0.0
    %210 = vmatpush1.msra.mxu0 0.0
    %211 = vmatprep.subr.mxu0 0.0
    %212 = vmatpush1.msra.mxu0 0.0
    %213 = vmatprep.subr.mxu0 0.0
    %214 = vmatpush1.msra.mxu0 0.0
    %215 = vmatprep.subr.mxu0 0.0
    %216 = vmatpush1.msra.mxu0 0.0
    %217 = vmatprep.subr.mxu0 0.0
    %218 = vmatpush1.msra.mxu0 0.0
    %219 = vmatprep.subr.mxu0 0.0
    %220 = vmatpush1.msra.mxu0 0.0
    %221 = vmatprep.subr.mxu0 0.0
    %222 = vmatpush1.msra.mxu0 0.0
    %223 = vmatprep.subr.mxu0 0.0
    %224 = vmatpush1.msra.mxu0 0.0
    %225 = vmatprep.subr.mxu0 0.0
    %226 = vmatpush1.msra.mxu0 0.0
    %227 = vmatprep.subr.mxu0 0.0
    %228 = vmatpush1.msra.mxu0 0.0
    %229 = vmatprep.subr.mxu0 0.0
    %230 = vmatpush1.msra.mxu0 0.0
    %231 = vmatprep.subr.mxu0 0.0
    %232 = vmatpush1.msra.mxu0 0.0
    %233 = vmatprep.subr.mxu0 0.0
    %234 = vmatpush1.msra.mxu0 0.0
    %235 = vmatprep.subr.mxu0 0.0
    %236 = vmatpush1.msra.mxu0 0.0
    %237 = vmatprep.subr.mxu0 0.0
    %238 = vmatpush1.msra.mxu0 0.0
    %239 = vmatprep.subr.mxu0 0.0
    %240 = vmatpush1.msra.mxu0 0.0
    %241 = vmatprep.subr.mxu0 0.0
    %242 = vmatpush1.msra.mxu0 0.0
    %243 = vmatprep.subr.mxu0 0.0
    %244 = vmatpush1.msra.mxu0 0.0
    %245 = vmatprep.subr.mxu0 0.0
    %246 = vmatpush1.msra.mxu0 0.0
    %247 = vmatprep.subr.mxu0 0.0
    %248 = vmatpush1.msra.mxu0 0.0
    %249 = vmatprep.subr.mxu0 0.0
    %250 = vmatpush1.msra.mxu0 0.0
    %251 = vmatprep.subr.mxu0 0.0
    %252 = vmatpush1.msra.mxu0 0.0
    %253 = vmatprep.subr.mxu0 0.0
    %254 = vmatpush1.msra.mxu0 0.0
    %255 = vmatprep.subr.mxu0 0.0
    %256 = vmatpush1.msra.mxu0 0.0
    %257 = vmatprep.subr.mxu0 0.0
    %258 = vmatpush1.msra.mxu0 0.0
    %259 = vmatprep.subr.mxu0 0.0
    %260 = vmatpush1.msra.mxu0 0.0
    %261 = vmatprep.subr.mxu0 0.0
    %262 = vmatpush1.msra.mxu0 0.0
    %263 = vmatprep.mubr.f32.mxu0 0.0
    %264 = vmatmul.mubr.f32.gmra.mrb[0].mxu0 %v193
    %v265 = vpop.f32.mrb[0].mxu0
    %v266 = vadd.f32 %v176, %v265
    %v267 = vpop.f32.mrb[0].mxu0
    %v268 = vadd.f32 %v178, %v267
    %269 = vdwg.mxu0
    %v270 = vlaneseq
    %v271 = vshrl.u32 %v270, 7
    %v272 = vsub.s32 2, %v271
    %v273 = vrot.slane %v36, %v272
    %v274 = vlaneseq
    %v275 = vshrl.u32 %v274, 7
    %v276 = vsub.s32 2, %v275
    %v277 = vrot.slane %v37, %v276
    %280 = vrot.lane.b32.xlu0 %v273, 113
    %v281 = vpop.permute.xlu0 %280
    %282 = vrot.lane.b32.xlu0 %v277, 113
    %v283 = vpop.permute.xlu0 %282
    %vm284 = vcmask 924672
    %v285 = vsel %vm284, %v281, %v283
    %v289 = vmul.f32 %v281, 0.0
    %v290 = vmul.f32 %v40, %v285
    %v291 = vmul.f32 %v42, %v283
    %295 = vrot.lane.b32.xlu0 %v289, 15
    %v296 = vpop.permute.xlu0 %295
    %297 = vrot.lane.b32.xlu0 %v290, 15
    %v298 = vpop.permute.xlu0 %297
    %299 = vrot.lane.b32.xlu0 %v291, 15
    %v300 = vpop.permute.xlu0 %299
    %vm301 = vcmask 121856
    %v302 = vsel %vm301, %v296, %v298
    %v303 = vsel %vm301, %v298, %v300
    %v305 = vsel %vm100, %v20, 0
    %v307 = vsel %vm104, %v302, 0
    %v309 = vsel %vm104, %v303, 0
    %311 = vmatprep.subr.mxu0 %v309
    %312 = vmatpush1.msra.mxu0 %v307
    %313 = vmatprep.subr.mxu0 0.0
    %314 = vmatpush1.msra.mxu0 0.0
    %315 = vmatprep.subr.mxu0 0.0
    %316 = vmatpush1.msra.mxu0 0.0
    %317 = vmatprep.subr.mxu0 0.0
    %318 = vmatpush1.msra.mxu0 0.0
    %319 = vmatprep.subr.mxu0 0.0
    %320 = vmatpush1.msra.mxu0 0.0
    %321 = vmatprep.subr.mxu0 0.0
    %322 = vmatpush1.msra.mxu0 0.0
    %323 = vmatprep.subr.mxu0 0.0
    %324 = vmatpush1.msra.mxu0 0.0
    %325 = vmatprep.subr.mxu0 0.0
    %326 = vmatpush1.msra.mxu0 0.0
    %327 = vmatprep.subr.mxu0 0.0
    %328 = vmatpush1.msra.mxu0 0.0
    %329 = vmatprep.subr.mxu0 0.0
    %330 = vmatpush1.msra.mxu0 0.0
    %331 = vmatprep.subr.mxu0 0.0
    %332 = vmatpush1.msra.mxu0 0.0
    %333 = vmatprep.subr.mxu0 0.0
    %334 = vmatpush1.msra.mxu0 0.0
    %335 = vmatprep.subr.mxu0 0.0
    %336 = vmatpush1.msra.mxu0 0.0
    %337 = vmatprep.subr.mxu0 0.0
    %338 = vmatpush1.msra.mxu0 0.0
    %339 = vmatprep.subr.mxu0 0.0
    %340 = vmatpush1.msra.mxu0 0.0
    %341 = vmatprep.subr.mxu0 0.0
    %342 = vmatpush1.msra.mxu0 0.0
    %343 = vmatprep.subr.mxu0 0.0
    %344 = vmatpush1.msra.mxu0 0.0
    %345 = vmatprep.subr.mxu0 0.0
    %346 = vmatpush1.msra.mxu0 0.0
    %347 = vmatprep.subr.mxu0 0.0
    %348 = vmatpush1.msra.mxu0 0.0
    %349 = vmatprep.subr.mxu0 0.0
    %350 = vmatpush1.msra.mxu0 0.0
    %351 = vmatprep.subr.mxu0 0.0
    %352 = vmatpush1.msra.mxu0 0.0
    %353 = vmatprep.subr.mxu0 0.0
    %354 = vmatpush1.msra.mxu0 0.0
    %355 = vmatprep.subr.mxu0 0.0
    %356 = vmatpush1.msra.mxu0 0.0
    %357 = vmatprep.subr.mxu0 0.0
    %358 = vmatpush1.msra.mxu0 0.0
    %359 = vmatprep.subr.mxu0 0.0
    %360 = vmatpush1.msra.mxu0 0.0
    %361 = vmatprep.subr.mxu0 0.0
    %362 = vmatpush1.msra.mxu0 0.0
    %363 = vmatprep.subr.mxu0 0.0
    %364 = vmatpush1.msra.mxu0 0.0
    %365 = vmatprep.subr.mxu0 0.0
    %366 = vmatpush1.msra.mxu0 0.0
    %367 = vmatprep.subr.mxu0 0.0
    %368 = vmatpush1.msra.mxu0 0.0
    %369 = vmatprep.subr.mxu0 0.0
    %370 = vmatpush1.msra.mxu0 0.0
    %371 = vmatprep.subr.mxu0 0.0
    %372 = vmatpush1.msra.mxu0 0.0
    %373 = vmatprep.subr.mxu0 0.0
    %374 = vmatpush1.msra.mxu0 0.0
    %375 = vmatprep.mubr.f32.mxu0 0.0
    %376 = vmatmul.mubr.f32.gmra.mrb[0].mxu0 %v305
    %v377 = vpop.f32.mrb[0].mxu0
    %v378 = vadd.f32 0.0, %v377
    %v379 = vpop.f32.mrb[0].mxu0
    %v380 = vadd.f32 0.0, %v379
    %381 = vdwg.mxu0
    %v382 = vadd.f32 %v266, %v378
    %v383 = vadd.f32 %v268, %v380
    %v384 = vlaneseq
    %v385 = vshrl.u32 %v384, 7
    %v386 = vsub.s32 3, %v385
    %v387 = vrot.slane %v36, %v386
    %v388 = vlaneseq
    %v389 = vshrl.u32 %v388, 7
    %v390 = vsub.s32 3, %v389
    %v391 = vrot.slane %v37, %v390
    %394 = vrot.lane.b32.xlu0 %v387, 127
    %v395 = vpop.permute.xlu0 %394
    %396 = vrot.lane.b32.xlu0 %v391, 127
    %v397 = vpop.permute.xlu0 %396
    %vm398 = vcmask 1039360
    %v399 = vsel %vm398, %v395, %v397
    %v403 = vmul.f32 %v395, 0.0
    %v404 = vmul.f32 %v40, %v399
    %v405 = vmul.f32 %v42, %v397
    %409 = vrot.lane.b32.xlu0 %v403, 1
    %v410 = vpop.permute.xlu0 %409
    %411 = vrot.lane.b32.xlu0 %v404, 1
    %v412 = vpop.permute.xlu0 %411
    %413 = vrot.lane.b32.xlu0 %v405, 1
    %v414 = vpop.permute.xlu0 %413
    %vm415 = vcmask 7168
    %v416 = vsel %vm415, %v410, %v412
    %v417 = vsel %vm415, %v412, %v414
    %v419 = vsel %vm100, %v21, 0
    %v421 = vsel %vm104, %v416, 0
    %v423 = vsel %vm104, %v417, 0
    %425 = vmatprep.subr.mxu0 %v423
    %426 = vmatpush1.msra.mxu0 %v421
    %427 = vmatprep.subr.mxu0 0.0
    %428 = vmatpush1.msra.mxu0 0.0
    %429 = vmatprep.subr.mxu0 0.0
    %430 = vmatpush1.msra.mxu0 0.0
    %431 = vmatprep.subr.mxu0 0.0
    %432 = vmatpush1.msra.mxu0 0.0
    %433 = vmatprep.subr.mxu0 0.0
    %434 = vmatpush1.msra.mxu0 0.0
    %435 = vmatprep.subr.mxu0 0.0
    %436 = vmatpush1.msra.mxu0 0.0
    %437 = vmatprep.subr.mxu0 0.0
    %438 = vmatpush1.msra.mxu0 0.0
    %439 = vmatprep.subr.mxu0 0.0
    %440 = vmatpush1.msra.mxu0 0.0
    %441 = vmatprep.subr.mxu0 0.0
    %442 = vmatpush1.msra.mxu0 0.0
    %443 = vmatprep.subr.mxu0 0.0
    %444 = vmatpush1.msra.mxu0 0.0
    %445 = vmatprep.subr.mxu0 0.0
    %446 = vmatpush1.msra.mxu0 0.0
    %447 = vmatprep.subr.mxu0 0.0
    %448 = vmatpush1.msra.mxu0 0.0
    %449 = vmatprep.subr.mxu0 0.0
    %450 = vmatpush1.msra.mxu0 0.0
    %451 = vmatprep.subr.mxu0 0.0
    %452 = vmatpush1.msra.mxu0 0.0
    %453 = vmatprep.subr.mxu0 0.0
    %454 = vmatpush1.msra.mxu0 0.0
    %455 = vmatprep.subr.mxu0 0.0
    %456 = vmatpush1.msra.mxu0 0.0
    %457 = vmatprep.subr.mxu0 0.0
    %458 = vmatpush1.msra.mxu0 0.0
    %459 = vmatprep.subr.mxu0 0.0
    %460 = vmatpush1.msra.mxu0 0.0
    %461 = vmatprep.subr.mxu0 0.0
    %462 = vmatpush1.msra.mxu0 0.0
    %463 = vmatprep.subr.mxu0 0.0
    %464 = vmatpush1.msra.mxu0 0.0
    %465 = vmatprep.subr.mxu0 0.0
    %466 = vmatpush1.msra.mxu0 0.0
    %467 = vmatprep.subr.mxu0 0.0
    %468 = vmatpush1.msra.mxu0 0.0
    %469 = vmatprep.subr.mxu0 0.0
    %470 = vmatpush1.msra.mxu0 0.0
    %471 = vmatprep.subr.mxu0 0.0
    %472 = vmatpush1.msra.mxu0 0.0
    %473 = vmatprep.subr.mxu0 0.0
    %474 = vmatpush1.msra.mxu0 0.0
    %475 = vmatprep.subr.mxu0 0.0
    %476 = vmatpush1.msra.mxu0 0.0
    %477 = vmatprep.subr.mxu0 0.0
    %478 = vmatpush1.msra.mxu0 0.0
    %479 = vmatprep.subr.mxu0 0.0
    %480 = vmatpush1.msra.mxu0 0.0
    %481 = vmatprep.subr.mxu0 0.0
    %482 = vmatpush1.msra.mxu0 0.0
    %483 = vmatprep.subr.mxu0 0.0
    %484 = vmatpush1.msra.mxu0 0.0
    %485 = vmatprep.subr.mxu0 0.0
    %486 = vmatpush1.msra.mxu0 0.0
    %487 = vmatprep.subr.mxu0 0.0
    %488 = vmatpush1.msra.mxu0 0.0
    %489 = vmatprep.mubr.f32.mxu0 0.0
    %490 = vmatmul.mubr.f32.gmra.mrb[0].mxu0 %v419
    %v491 = vpop.f32.mrb[0].mxu0
    %v492 = vadd.f32 0.0, %v491
    %v493 = vpop.f32.mrb[0].mxu0
    %v494 = vadd.f32 0.0, %v493
    %495 = vdwg.mxu0
    %v496 = vadd.f32 %v382, %v492
    %v497 = vadd.f32 %v383, %v494
    %v499 = vsel %vm100, %v22, 0
    %v501 = vsel %vm104, %v40, 0
    %v503 = vsel %vm104, %v42, 0
    %505 = vmatprep.subr.mxu0 %v503
    %506 = vmatpush1.msra.mxu0 %v501
    %507 = vmatprep.subr.mxu0 0.0
    %508 = vmatpush1.msra.mxu0 0.0
    %509 = vmatprep.subr.mxu0 0.0
    %510 = vmatpush1.msra.mxu0 0.0
    %511 = vmatprep.subr.mxu0 0.0
    %512 = vmatpush1.msra.mxu0 0.0
    %513 = vmatprep.subr.mxu0 0.0
    %514 = vmatpush1.msra.mxu0 0.0
    %515 = vmatprep.subr.mxu0 0.0
    %516 = vmatpush1.msra.mxu0 0.0
    %517 = vmatprep.subr.mxu0 0.0
    %518 = vmatpush1.msra.mxu0 0.0
    %519 = vmatprep.subr.mxu0 0.0
    %520 = vmatpush1.msra.mxu0 0.0
    %521 = vmatprep.subr.mxu0 0.0
    %522 = vmatpush1.msra.mxu0 0.0
    %523 = vmatprep.subr.mxu0 0.0
    %524 = vmatpush1.msra.mxu0 0.0
    %525 = vmatprep.subr.mxu0 0.0
    %526 = vmatpush1.msra.mxu0 0.0
    %527 = vmatprep.subr.mxu0 0.0
    %528 = vmatpush1.msra.mxu0 0.0
    %529 = vmatprep.subr.mxu0 0.0
    %530 = vmatpush1.msra.mxu0 0.0
    %531 = vmatprep.subr.mxu0 0.0
    %532 = vmatpush1.msra.mxu0 0.0
    %533 = vmatprep.subr.mxu0 0.0
    %534 = vmatpush1.msra.mxu0 0.0
    %535 = vmatprep.subr.mxu0 0.0
    %536 = vmatpush1.msra.mxu0 0.0
    %537 = vmatprep.subr.mxu0 0.0
    %538 = vmatpush1.msra.mxu0 0.0
    %539 = vmatprep.subr.mxu0 0.0
    %540 = vmatpush1.msra.mxu0 0.0
    %541 = vmatprep.subr.mxu0 0.0
    %542 = vmatpush1.msra.mxu0 0.0
    %543 = vmatprep.subr.mxu0 0.0
    %544 = vmatpush1.msra.mxu0 0.0
    %545 = vmatprep.subr.mxu0 0.0
    %546 = vmatpush1.msra.mxu0 0.0
    %547 = vmatprep.subr.mxu0 0.0
    %548 = vmatpush1.msra.mxu0 0.0
    %549 = vmatprep.subr.mxu0 0.0
    %550 = vmatpush1.msra.mxu0 0.0
    %551 = vmatprep.subr.mxu0 0.0
    %552 = vmatpush1.msra.mxu0 0.0
    %553 = vmatprep.subr.mxu0 0.0
    %554 = vmatpush1.msra.mxu0 0.0
    %555 = vmatprep.subr.mxu0 0.0
    %556 = vmatpush1.msra.mxu0 0.0
    %557 = vmatprep.subr.mxu0 0.0
    %558 = vmatpush1.msra.mxu0 0.0
    %559 = vmatprep.subr.mxu0 0.0
    %560 = vmatpush1.msra.mxu0 0.0
    %561 = vmatprep.subr.mxu0 0.0
    %562 = vmatpush1.msra.mxu0 0.0
    %563 = vmatprep.subr.mxu0 0.0
    %564 = vmatpush1.msra.mxu0 0.0
    %565 = vmatprep.subr.mxu0 0.0
    %566 = vmatpush1.msra.mxu0 0.0
    %567 = vmatprep.subr.mxu0 0.0
    %568 = vmatpush1.msra.mxu0 0.0
    %569 = vmatprep.mubr.f32.mxu0 0.0
    %570 = vmatmul.mubr.f32.gmra.mrb[0].mxu0 %v499
    %v571 = vpop.f32.mrb[0].mxu0
    %v572 = vadd.f32 0.0, %v571
    %v573 = vpop.f32.mrb[0].mxu0
    %v574 = vadd.f32 0.0, %v573
    %575 = vdwg.mxu0
    %v576 = vadd.f32 %v496, %v572
    %v577 = vadd.f32 %v497, %v574
    %v578 = vlaneseq
    %v579 = vshrl.u32 %v578, 7
    %v580 = vsub.s32 5, %v579
    %v581 = vrot.slane %v36, %v580
    %v582 = vlaneseq
    %v583 = vshrl.u32 %v582, 7
    %v584 = vsub.s32 5, %v583
    %v585 = vrot.slane %v37, %v584
    %588 = vrot.lane.b32.xlu0 %v581, 1
    %v589 = vpop.permute.xlu0 %588
    %590 = vrot.lane.b32.xlu0 %v585, 1
    %v591 = vpop.permute.xlu0 %590
    %v592 = vsel %vm415, %v589, %v591
    %v596 = vmul.f32 %v40, %v589
    %v597 = vmul.f32 %v42, %v592
    %v598 = vmul.f32 %v591, 0.0
    %602 = vrot.lane.b32.xlu0 %v596, 127
    %v603 = vpop.permute.xlu0 %602
    %604 = vrot.lane.b32.xlu0 %v597, 127
    %v605 = vpop.permute.xlu0 %604
    %606 = vrot.lane.b32.xlu0 %v598, 127
    %v607 = vpop.permute.xlu0 %606
    %v608 = vsel %vm398, %v603, %v605
    %v609 = vsel %vm398, %v605, %v607
    %v611 = vsel %vm100, %v23, 0
    %v613 = vsel %vm104, %v608, 0
    %v615 = vsel %vm104, %v609, 0
    %617 = vmatprep.subr.mxu0 %v615
    %618 = vmatpush1.msra.mxu0 %v613
    %619 = vmatprep.subr.mxu0 0.0
    %620 = vmatpush1.msra.mxu0 0.0
    %621 = vmatprep.subr.mxu0 0.0
    %622 = vmatpush1.msra.mxu0 0.0
    %623 = vmatprep.subr.mxu0 0.0
    %624 = vmatpush1.msra.mxu0 0.0
    %625 = vmatprep.subr.mxu0 0.0
    %626 = vmatpush1.msra.mxu0 0.0
    %627 = vmatprep.subr.mxu0 0.0
    %628 = vmatpush1.msra.mxu0 0.0
    %629 = vmatprep.subr.mxu0 0.0
    %630 = vmatpush1.msra.mxu0 0.0
    %631 = vmatprep.subr.mxu0 0.0
    %632 = vmatpush1.msra.mxu0 0.0
    %633 = vmatprep.subr.mxu0 0.0
    %634 = vmatpush1.msra.mxu0 0.0
    %635 = vmatprep.subr.mxu0 0.0
    %636 = vmatpush1.msra.mxu0 0.0
    %637 = vmatprep.subr.mxu0 0.0
    %638 = vmatpush1.msra.mxu0 0.0
    %639 = vmatprep.subr.mxu0 0.0
    %640 = vmatpush1.msra.mxu0 0.0
    %641 = vmatprep.subr.mxu0 0.0
    %642 = vmatpush1.msra.mxu0 0.0
    %643 = vmatprep.subr.mxu0 0.0
    %644 = vmatpush1.msra.mxu0 0.0
    %645 = vmatprep.subr.mxu0 0.0
    %646 = vmatpush1.msra.mxu0 0.0
    %647 = vmatprep.subr.mxu0 0.0
    %648 = vmatpush1.msra.mxu0 0.0
    %649 = vmatprep.subr.mxu0 0.0
    %650 = vmatpush1.msra.mxu0 0.0
    %651 = vmatprep.subr.mxu0 0.0
    %652 = vmatpush1.msra.mxu0 0.0
    %653 = vmatprep.subr.mxu0 0.0
    %654 = vmatpush1.msra.mxu0 0.0
    %655 = vmatprep.subr.mxu0 0.0
    %656 = vmatpush1.msra.mxu0 0.0
    %657 = vmatprep.subr.mxu0 0.0
    %658 = vmatpush1.msra.mxu0 0.0
    %659 = vmatprep.subr.mxu0 0.0
    %660 = vmatpush1.msra.mxu0 0.0
    %661 = vmatprep.subr.mxu0 0.0
    %662 = vmatpush1.msra.mxu0 0.0
    %663 = vmatprep.subr.mxu0 0.0
    %664 = vmatpush1.msra.mxu0 0.0
    %665 = vmatprep.subr.mxu0 0.0
    %666 = vmatpush1.msra.mxu0 0.0
    %667 = vmatprep.subr.mxu0 0.0
    %668 = vmatpush1.msra.mxu0 0.0
    %669 = vmatprep.subr.mxu0 0.0
    %670 = vmatpush1.msra.mxu0 0.0
    %671 = vmatprep.subr.mxu0 0.0
    %672 = vmatpush1.msra.mxu0 0.0
    %673 = vmatprep.subr.mxu0 0.0
    %674 = vmatpush1.msra.mxu0 0.0
    %675 = vmatprep.subr.mxu0 0.0
    %676 = vmatpush1.msra.mxu0 0.0
    %677 = vmatprep.subr.mxu0 0.0
    %678 = vmatpush1.msra.mxu0 0.0
    %679 = vmatprep.subr.mxu0 0.0
    %680 = vmatpush1.msra.mxu0 0.0
    %681 = vmatprep.mubr.f32.mxu0 0.0
    %682 = vmatmul.mubr.f32.gmra.mrb[0].mxu0 %v611
    %v683 = vpop.f32.mrb[0].mxu0
    %v684 = vadd.f32 0.0, %v683
    %v685 = vpop.f32.mrb[0].mxu0
    %v686 = vadd.f32 0.0, %v685
    %687 = vdwg.mxu0
    %v688 = vadd.f32 %v576, %v684
    %v689 = vadd.f32 %v577, %v686
    %v690 = vlaneseq
    %v691 = vshrl.u32 %v690, 7
    %v692 = vsub.s32 6, %v691
    %v693 = vrot.slane %v36, %v692
    %v694 = vlaneseq
    %v695 = vshrl.u32 %v694, 7
    %v696 = vsub.s32 6, %v695
    %v697 = vrot.slane %v37, %v696
    %700 = vrot.lane.b32.xlu0 %v693, 15
    %v701 = vpop.permute.xlu0 %700
    %702 = vrot.lane.b32.xlu0 %v697, 15
    %v703 = vpop.permute.xlu0 %702
    %v704 = vsel %vm301, %v701, %v703
    %v708 = vmul.f32 %v40, %v701
    %v709 = vmul.f32 %v42, %v704
    %v710 = vmul.f32 %v703, 0.0
    %714 = vrot.lane.b32.xlu0 %v708, 113
    %v715 = vpop.permute.xlu0 %714
    %716 = vrot.lane.b32.xlu0 %v709, 113
    %v717 = vpop.permute.xlu0 %716
    %718 = vrot.lane.b32.xlu0 %v710, 113
    %v719 = vpop.permute.xlu0 %718
    %v720 = vsel %vm284, %v715, %v717
    %v721 = vsel %vm284, %v717, %v719
    %v723 = vsel %vm100, %v24, 0
    %v725 = vsel %vm104, %v720, 0
    %v727 = vsel %vm104, %v721, 0
    %729 = vmatprep.subr.mxu0 %v727
    %730 = vmatpush1.msra.mxu0 %v725
    %731 = vmatprep.subr.mxu0 0.0
    %732 = vmatpush1.msra.mxu0 0.0
    %733 = vmatprep.subr.mxu0 0.0
    %734 = vmatpush1.msra.mxu0 0.0
    %735 = vmatprep.subr.mxu0 0.0
    %736 = vmatpush1.msra.mxu0 0.0
    %737 = vmatprep.subr.mxu0 0.0
    %738 = vmatpush1.msra.mxu0 0.0
    %739 = vmatprep.subr.mxu0 0.0
    %740 = vmatpush1.msra.mxu0 0.0
    %741 = vmatprep.subr.mxu0 0.0
    %742 = vmatpush1.msra.mxu0 0.0
    %743 = vmatprep.subr.mxu0 0.0
    %744 = vmatpush1.msra.mxu0 0.0
    %745 = vmatprep.subr.mxu0 0.0
    %746 = vmatpush1.msra.mxu0 0.0
    %747 = vmatprep.subr.mxu0 0.0
    %748 = vmatpush1.msra.mxu0 0.0
    %749 = vmatprep.subr.mxu0 0.0
    %750 = vmatpush1.msra.mxu0 0.0
    %751 = vmatprep.subr.mxu0 0.0
    %752 = vmatpush1.msra.mxu0 0.0
    %753 = vmatprep.subr.mxu0 0.0
    %754 = vmatpush1.msra.mxu0 0.0
    %755 = vmatprep.subr.mxu0 0.0
    %756 = vmatpush1.msra.mxu0 0.0
    %757 = vmatprep.subr.mxu0 0.0
    %758 = vmatpush1.msra.mxu0 0.0
    %759 = vmatprep.subr.mxu0 0.0
    %760 = vmatpush1.msra.mxu0 0.0
    %761 = vmatprep.subr.mxu0 0.0
    %762 = vmatpush1.msra.mxu0 0.0
    %763 = vmatprep.subr.mxu0 0.0
    %764 = vmatpush1.msra.mxu0 0.0
    %765 = vmatprep.subr.mxu0 0.0
    %766 = vmatpush1.msra.mxu0 0.0
    %767 = vmatprep.subr.mxu0 0.0
    %768 = vmatpush1.msra.mxu0 0.0
    %769 = vmatprep.subr.mxu0 0.0
    %770 = vmatpush1.msra.mxu0 0.0
    %771 = vmatprep.subr.mxu0 0.0
    %772 = vmatpush1.msra.mxu0 0.0
    %773 = vmatprep.subr.mxu0 0.0
    %774 = vmatpush1.msra.mxu0 0.0
    %775 = vmatprep.subr.mxu0 0.0
    %776 = vmatpush1.msra.mxu0 0.0
    %777 = vmatprep.subr.mxu0 0.0
    %778 = vmatpush1.msra.mxu0 0.0
    %779 = vmatprep.subr.mxu0 0.0
    %780 = vmatpush1.msra.mxu0 0.0
    %781 = vmatprep.subr.mxu0 0.0
    %782 = vmatpush1.msra.mxu0 0.0
    %783 = vmatprep.subr.mxu0 0.0
    %784 = vmatpush1.msra.mxu0 0.0
    %785 = vmatprep.subr.mxu0 0.0
    %786 = vmatpush1.msra.mxu0 0.0
    %787 = vmatprep.subr.mxu0 0.0
    %788 = vmatpush1.msra.mxu0 0.0
    %789 = vmatprep.subr.mxu0 0.0
    %790 = vmatpush1.msra.mxu0 0.0
    %791 = vmatprep.subr.mxu0 0.0
    %792 = vmatpush1.msra.mxu0 0.0
    %793 = vmatprep.mubr.f32.mxu0 0.0
    %794 = vmatmul.mubr.f32.gmra.mrb[0].mxu0 %v723
    %v795 = vpop.f32.mrb[0].mxu0
    %v796 = vadd.f32 0.0, %v795
    %v797 = vpop.f32.mrb[0].mxu0
    %v798 = vadd.f32 0.0, %v797
    %799 = vdwg.mxu0
    %v800 = vadd.f32 %v688, %v796
    %v801 = vadd.f32 %v689, %v798
    %v802 = vlaneseq
    %v803 = vshrl.u32 %v802, 7
    %v804 = vsub.s32 7, %v803
    %v805 = vrot.slane %v36, %v804
    %v806 = vlaneseq
    %v807 = vshrl.u32 %v806, 7
    %v808 = vsub.s32 7, %v807
    %v809 = vrot.slane %v37, %v808
    %812 = vrot.lane.b32.xlu0 %v805, 16
    %v813 = vpop.permute.xlu0 %812
    %814 = vrot.lane.b32.xlu0 %v809, 16
    %v815 = vpop.permute.xlu0 %814
    %v816 = vsel %vm97, %v813, %v815
    %v820 = vmul.f32 %v40, %v813
    %v821 = vmul.f32 %v42, %v816
    %v822 = vmul.f32 %v815, 0.0
    %826 = vrot.lane.b32.xlu0 %v820, 112
    %v827 = vpop.permute.xlu0 %826
    %828 = vrot.lane.b32.xlu0 %v821, 112
    %v829 = vpop.permute.xlu0 %828
    %830 = vrot.lane.b32.xlu0 %v822, 112
    %v831 = vpop.permute.xlu0 %830
    %v832 = vsel %vm80, %v827, %v829
    %v833 = vsel %vm80, %v829, %v831
    %v835 = vsel %vm100, %v25, 0
    %v837 = vsel %vm104, %v832, 0
    %v839 = vsel %vm104, %v833, 0
    %841 = vmatprep.subr.mxu0 %v839
    %842 = vmatpush1.msra.mxu0 %v837
    %843 = vmatprep.subr.mxu0 0.0
    %844 = vmatpush1.msra.mxu0 0.0
    %845 = vmatprep.subr.mxu0 0.0
    %846 = vmatpush1.msra.mxu0 0.0
    %847 = vmatprep.subr.mxu0 0.0
    %848 = vmatpush1.msra.mxu0 0.0
    %849 = vmatprep.subr.mxu0 0.0
    %850 = vmatpush1.msra.mxu0 0.0
    %851 = vmatprep.subr.mxu0 0.0
    %852 = vmatpush1.msra.mxu0 0.0
    %853 = vmatprep.subr.mxu0 0.0
    %854 = vmatpush1.msra.mxu0 0.0
    %855 = vmatprep.subr.mxu0 0.0
    %856 = vmatpush1.msra.mxu0 0.0
    %857 = vmatprep.subr.mxu0 0.0
    %858 = vmatpush1.msra.mxu0 0.0
    %859 = vmatprep.subr.mxu0 0.0
    %860 = vmatpush1.msra.mxu0 0.0
    %861 = vmatprep.subr.mxu0 0.0
    %862 = vmatpush1.msra.mxu0 0.0
    %863 = vmatprep.subr.mxu0 0.0
    %864 = vmatpush1.msra.mxu0 0.0
    %865 = vmatprep.subr.mxu0 0.0
    %866 = vmatpush1.msra.mxu0 0.0
    %867 = vmatprep.subr.mxu0 0.0
    %868 = vmatpush1.msra.mxu0 0.0
    %869 = vmatprep.subr.mxu0 0.0
    %870 = vmatpush1.msra.mxu0 0.0
    %871 = vmatprep.subr.mxu0 0.0
    %872 = vmatpush1.msra.mxu0 0.0
    %873 = vmatprep.subr.mxu0 0.0
    %874 = vmatpush1.msra.mxu0 0.0
    %875 = vmatprep.subr.mxu0 0.0
    %876 = vmatpush1.msra.mxu0 0.0
    %877 = vmatprep.subr.mxu0 0.0
    %878 = vmatpush1.msra.mxu0 0.0
    %879 = vmatprep.subr.mxu0 0.0
    %880 = vmatpush1.msra.mxu0 0.0
    %881 = vmatprep.subr.mxu0 0.0
    %882 = vmatpush1.msra.mxu0 0.0
    %883 = vmatprep.subr.mxu0 0.0
    %884 = vmatpush1.msra.mxu0 0.0
    %885 = vmatprep.subr.mxu0 0.0
    %886 = vmatpush1.msra.mxu0 0.0
    %887 = vmatprep.subr.mxu0 0.0
    %888 = vmatpush1.msra.mxu0 0.0
    %889 = vmatprep.subr.mxu0 0.0
    %890 = vmatpush1.msra.mxu0 0.0
    %891 = vmatprep.subr.mxu0 0.0
    %892 = vmatpush1.msra.mxu0 0.0
    %893 = vmatprep.subr.mxu0 0.0
    %894 = vmatpush1.msra.mxu0 0.0
    %895 = vmatprep.subr.mxu0 0.0
    %896 = vmatpush1.msra.mxu0 0.0
    %897 = vmatprep.subr.mxu0 0.0
    %898 = vmatpush1.msra.mxu0 0.0
    %899 = vmatprep.subr.mxu0 0.0
    %900 = vmatpush1.msra.mxu0 0.0
    %901 = vmatprep.subr.mxu0 0.0
    %902 = vmatpush1.msra.mxu0 0.0
    %903 = vmatprep.subr.mxu0 0.0
    %904 = vmatpush1.msra.mxu0 0.0
    %905 = vmatprep.mubr.f32.mxu0 0.0
    %906 = vmatmul.mubr.f32.gmra.mrb[0].mxu0 %v835
    %v907 = vpop.f32.mrb[0].mxu0
    %v908 = vadd.f32 0.0, %v907
    %v909 = vpop.f32.mrb[0].mxu0
    %v910 = vadd.f32 0.0, %v909
    %911 = vdwg.mxu0
    %v912 = vadd.f32 %v800, %v908
    %v913 = vadd.f32 %v801, %v910
    %v914 = vlaneseq
    %v915 = vshrl.u32 %v914, 7
    %v916 = vsub.s32 0, %v915
    %v917 = vrot.slane %v38, %v916
    %v918 = vlaneseq
    %v919 = vshrl.u32 %v918, 7
    %v920 = vsub.s32 0, %v919
    %v921 = vrot.slane %v39, %v920
    %924 = vrot.lane.b32.xlu0 %v917, 17
    %v925 = vpop.permute.xlu0 %924
    %926 = vrot.lane.b32.xlu0 %v921, 17
    %v927 = vpop.permute.xlu0 %926
    %v928 = vsel %vm189, %v925, %v927
    %v932 = vmul.f32 %v40, %v925
    %v933 = vmul.f32 %v42, %v928
    %v934 = vmul.f32 %v927, 0.0
    %938 = vrot.lane.b32.xlu0 %v932, 111
    %v939 = vpop.permute.xlu0 %938
    %940 = vrot.lane.b32.xlu0 %v933, 111
    %v941 = vpop.permute.xlu0 %940
    %942 = vrot.lane.b32.xlu0 %v934, 111
    %v943 = vpop.permute.xlu0 %942
    %v944 = vsel %vm58, %v939, %v941
    %v945 = vsel %vm58, %v941, %v943
    %v947 = vsel %vm100, %v26, 0
    %v949 = vsel %vm104, %v944, 0
    %v951 = vsel %vm104, %v945, 0
    %953 = vmatprep.subr.mxu0 %v951
    %954 = vmatpush1.msra.mxu0 %v949
    %955 = vmatprep.subr.mxu0 0.0
    %956 = vmatpush1.msra.mxu0 0.0
    %957 = vmatprep.subr.mxu0 0.0
    %958 = vmatpush1.msra.mxu0 0.0
    %959 = vmatprep.subr.mxu0 0.0
    %960 = vmatpush1.msra.mxu0 0.0
    %961 = vmatprep.subr.mxu0 0.0
    %962 = vmatpush1.msra.mxu0 0.0
    %963 = vmatprep.subr.mxu0 0.0
    %964 = vmatpush1.msra.mxu0 0.0
    %965 = vmatprep.subr.mxu0 0.0
    %966 = vmatpush1.msra.mxu0 0.0
    %967 = vmatprep.subr.mxu0 0.0
    %968 = vmatpush1.msra.mxu0 0.0
    %969 = vmatprep.subr.mxu0 0.0
    %970 = vmatpush1.msra.mxu0 0.0
    %971 = vmatprep.subr.mxu0 0.0
    %972 = vmatpush1.msra.mxu0 0.0
    %973 = vmatprep.subr.mxu0 0.0
    %974 = vmatpush1.msra.mxu0 0.0
    %975 = vmatprep.subr.mxu0 0.0
    %976 = vmatpush1.msra.mxu0 0.0
    %977 = vmatprep.subr.mxu0 0.0
    %978 = vmatpush1.msra.mxu0 0.0
    %979 = vmatprep.subr.mxu0 0.0
    %980 = vmatpush1.msra.mxu0 0.0
    %981 = vmatprep.subr.mxu0 0.0
    %982 = vmatpush1.msra.mxu0 0.0
    %983 = vmatprep.subr.mxu0 0.0
    %984 = vmatpush1.msra.mxu0 0.0
    %985 = vmatprep.subr.mxu0 0.0
    %986 = vmatpush1.msra.mxu0 0.0
    %987 = vmatprep.subr.mxu0 0.0
    %988 = vmatpush1.msra.mxu0 0.0
    %989 = vmatprep.subr.mxu0 0.0
    %990 = vmatpush1.msra.mxu0 0.0
    %991 = vmatprep.subr.mxu0 0.0
    %992 = vmatpush1.msra.mxu0 0.0
    %993 = vmatprep.subr.mxu0 0.0
    %994 = vmatpush1.msra.mxu0 0.0
    %995 = vmatprep.subr.mxu0 0.0
    %996 = vmatpush1.msra.mxu0 0.0
    %997 = vmatprep.subr.mxu0 0.0
    %998 = vmatpush1.msra.mxu0 0.0
    %999 = vmatprep.subr.mxu0 0.0
    %1000 = vmatpush1.msra.mxu0 0.0
    %1001 = vmatprep.subr.mxu0 0.0
    %1002 = vmatpush1.msra.mxu0 0.0
    %1003 = vmatprep.subr.mxu0 0.0
    %1004 = vmatpush1.msra.mxu0 0.0
    %1005 = vmatprep.subr.mxu0 0.0
    %1006 = vmatpush1.msra.mxu0 0.0
    %1007 = vmatprep.subr.mxu0 0.0
    %1008 = vmatpush1.msra.mxu0 0.0
    %1009 = vmatprep.subr.mxu0 0.0
    %1010 = vmatpush1.msra.mxu0 0.0
    %1011 = vmatprep.subr.mxu0 0.0
    %1012 = vmatpush1.msra.mxu0 0.0
    %1013 = vmatprep.subr.mxu0 0.0
    %1014 = vmatpush1.msra.mxu0 0.0
    %1015 = vmatprep.subr.mxu0 0.0
    %1016 = vmatpush1.msra.mxu0 0.0
    %1017 = vmatprep.mubr.f32.mxu0 0.0
    %1018 = vmatmul.mubr.f32.gmra.mrb[0].mxu0 %v947
    %v1019 = vpop.f32.mrb[0].mxu0
    %v1020 = vadd.f32 0.0, %v1019
    %v1021 = vpop.f32.mrb[0].mxu0
    %v1022 = vadd.f32 0.0, %v1021
    %1023 = vdwg.mxu0
    %v1024 = vadd.f32 %v912, %v1020
    %v1025 = vadd.f32 %v913, %v1022
    %v1026 = vadd.f32 %v1024, %v1025
    %1027 = vadd.xlane.f32.xlu0 %v1026
    %v1028 = vpop.xlane.xlu0 %1027
    %v1029 = vmul.f32 %v1028, 0.00390625
    %v1030 = vsub.f32 %v1024, %v1029
    %v1031 = vsub.f32 %v1025, %v1029
    %v1032 = vmul.f32 %v1030, %v1030
    %v1033 = vmul.f32 %v1031, %v1031
    %v1034 = vadd.f32 %v1032, %v1033
    %1035 = vadd.xlane.f32.xlu0 %v1034
    %v1036 = vpop.xlane.xlu0 %1035
    %v1037 = vmul.f32 %v1036, 0.00390625
    %v1038 = vadd.f32 %v1037, 1e-05
    %v1039 = vrsqrt.pop %v1038
    %v1040 = vmul.f32 %v1030, %v1039
    %v1041 = vmul.f32 %v1031, %v1039
    %v1042 = vmax.f32 %v1040, 0.0
    %v1043 = vmax.f32 %v1041, 0.0
    %v1044 = vmul.f32 %v1042, %v59
    %v1045 = vmul.f32 %v1043, %v57
    %v1046 = vmul.f32 %v1042, %v81
    %v1047 = vmul.f32 %v1043, %v79
    %1050 = vrot.lane.b32.xlu0 %v1046, 16
    %v1051 = vpop.permute.xlu0 %1050
    %1052 = vrot.lane.b32.xlu0 %v1047, 16
    %v1053 = vpop.permute.xlu0 %1052
    %v1054 = vsel %vm97, %v92, %v1051
    %v1055 = vsel %vm97, %v1051, %v1053
    %vm1058 = vcmask 64512
    %v1060 = vsel %vm1058, %v28, 0
    %1062 = vmatprep.subr.mxu0 %v1055
    %1063 = vmatpush1.msra.mxu0 %v1054
    %1064 = vmatprep.subr.mxu0 0.0
    %1065 = vmatpush1.msra.mxu0 0.0
    %1066 = vmatprep.subr.mxu0 0.0
    %1067 = vmatpush1.msra.mxu0 0.0
    %1068 = vmatprep.subr.mxu0 0.0
    %1069 = vmatpush1.msra.mxu0 0.0
    %1070 = vmatprep.subr.mxu0 0.0
    %1071 = vmatpush1.msra.mxu0 0.0
    %1072 = vmatprep.subr.mxu0 0.0
    %1073 = vmatpush1.msra.mxu0 0.0
    %1074 = vmatprep.subr.mxu0 0.0
    %1075 = vmatpush1.msra.mxu0 0.0
    %1076 = vmatprep.subr.mxu0 0.0
    %1077 = vmatpush1.msra.mxu0 0.0
    %1078 = vmatprep.subr.mxu0 0.0
    %1079 = vmatpush1.msra.mxu0 0.0
    %1080 = vmatprep.subr.mxu0 0.0
    %1081 = vmatpush1.msra.mxu0 0.0
    %1082 = vmatprep.subr.mxu0 0.0
    %1083 = vmatpush1.msra.mxu0 0.0
    %1084 = vmatprep.subr.mxu0 0.0
    %1085 = vmatpush1.msra.mxu0 0.0
    %1086 = vmatprep.subr.mxu0 0.0
    %1087 = vmatpush1.msra.mxu0 0.0
    %1088 = vmatprep.subr.mxu0 0.0
    %1089 = vmatpush1.msra.mxu0 0.0
    %1090 = vmatprep.subr.mxu0 0.0
    %1091 = vmatpush1.msra.mxu0 0.0
    %1092 = vmatprep.subr.mxu0 0.0
    %1093 = vmatpush1.msra.mxu0 0.0
    %1094 = vmatprep.subr.mxu0 0.0
    %1095 = vmatpush1.msra.mxu0 0.0
    %1096 = vmatprep.subr.mxu0 0.0
    %1097 = vmatpush1.msra.mxu0 0.0
    %1098 = vmatprep.subr.mxu0 0.0
    %1099 = vmatpush1.msra.mxu0 0.0
    %1100 = vmatprep.subr.mxu0 0.0
    %1101 = vmatpush1.msra.mxu0 0.0
    %1102 = vmatprep.subr.mxu0 0.0
    %1103 = vmatpush1.msra.mxu0 0.0
    %1104 = vmatprep.subr.mxu0 0.0
    %1105 = vmatpush1.msra.mxu0 0.0
    %1106 = vmatprep.subr.mxu0 0.0
    %1107 = vmatpush1.msra.mxu0 0.0
    %1108 = vmatprep.subr.mxu0 0.0
    %1109 = vmatpush1.msra.mxu0 0.0
    %1110 = vmatprep.subr.mxu0 0.0
    %1111 = vmatpush1.msra.mxu0 0.0
    %1112 = vmatprep.subr.mxu0 0.0
    %1113 = vmatpush1.msra.mxu0 0.0
    %1114 = vmatprep.subr.mxu0 0.0
    %1115 = vmatpush1.msra.mxu0 0.0
    %1116 = vmatprep.subr.mxu0 0.0
    %1117 = vmatpush1.msra.mxu0 0.0
    %1118 = vmatprep.subr.mxu0 0.0
    %1119 = vmatpush1.msra.mxu0 0.0
    %1120 = vmatprep.subr.mxu0 0.0
    %1121 = vmatpush1.msra.mxu0 0.0
    %1122 = vmatprep.subr.mxu0 0.0
    %1123 = vmatpush1.msra.mxu0 0.0
    %1124 = vmatprep.subr.mxu0 0.0
    %1125 = vmatpush1.msra.mxu0 0.0
    %1126 = vmatprep.mubr.f32.mxu0 0.0
    %1127 = vmatmul.mubr.f32.gmra.mrb[0].mxu0 %v1060
    %v1128 = vpop.f32.mrb[0].mxu0
    %v1129 = vadd.f32 0.0, %v1128
    %v1130 = vpop.f32.mrb[0].mxu0
    %v1131 = vadd.f32 0.0, %v1130
    %1132 = vdwg.mxu0
    %1135 = vrot.lane.b32.xlu0 %v1044, 17
    %v1136 = vpop.permute.xlu0 %1135
    %1137 = vrot.lane.b32.xlu0 %v1045, 17
    %v1138 = vpop.permute.xlu0 %1137
    %v1139 = vsel %vm189, %v184, %v1136
    %v1140 = vsel %vm189, %v1136, %v1138
    %v1144 = vsel %vm1058, %v27, 0
    %1146 = vmatprep.subr.mxu0 %v1140
    %1147 = vmatpush1.msra.mxu0 %v1139
    %1148 = vmatprep.subr.mxu0 0.0
    %1149 = vmatpush1.msra.mxu0 0.0
    %1150 = vmatprep.subr.mxu0 0.0
    %1151 = vmatpush1.msra.mxu0 0.0
    %1152 = vmatprep.subr.mxu0 0.0
    %1153 = vmatpush1.msra.mxu0 0.0
    %1154 = vmatprep.subr.mxu0 0.0
    %1155 = vmatpush1.msra.mxu0 0.0
    %1156 = vmatprep.subr.mxu0 0.0
    %1157 = vmatpush1.msra.mxu0 0.0
    %1158 = vmatprep.subr.mxu0 0.0
    %1159 = vmatpush1.msra.mxu0 0.0
    %1160 = vmatprep.subr.mxu0 0.0
    %1161 = vmatpush1.msra.mxu0 0.0
    %1162 = vmatprep.subr.mxu0 0.0
    %1163 = vmatpush1.msra.mxu0 0.0
    %1164 = vmatprep.subr.mxu0 0.0
    %1165 = vmatpush1.msra.mxu0 0.0
    %1166 = vmatprep.subr.mxu0 0.0
    %1167 = vmatpush1.msra.mxu0 0.0
    %1168 = vmatprep.subr.mxu0 0.0
    %1169 = vmatpush1.msra.mxu0 0.0
    %1170 = vmatprep.subr.mxu0 0.0
    %1171 = vmatpush1.msra.mxu0 0.0
    %1172 = vmatprep.subr.mxu0 0.0
    %1173 = vmatpush1.msra.mxu0 0.0
    %1174 = vmatprep.subr.mxu0 0.0
    %1175 = vmatpush1.msra.mxu0 0.0
    %1176 = vmatprep.subr.mxu0 0.0
    %1177 = vmatpush1.msra.mxu0 0.0
    %1178 = vmatprep.subr.mxu0 0.0
    %1179 = vmatpush1.msra.mxu0 0.0
    %1180 = vmatprep.subr.mxu0 0.0
    %1181 = vmatpush1.msra.mxu0 0.0
    %1182 = vmatprep.subr.mxu0 0.0
    %1183 = vmatpush1.msra.mxu0 0.0
    %1184 = vmatprep.subr.mxu0 0.0
    %1185 = vmatpush1.msra.mxu0 0.0
    %1186 = vmatprep.subr.mxu0 0.0
    %1187 = vmatpush1.msra.mxu0 0.0
    %1188 = vmatprep.subr.mxu0 0.0
    %1189 = vmatpush1.msra.mxu0 0.0
    %1190 = vmatprep.subr.mxu0 0.0
    %1191 = vmatpush1.msra.mxu0 0.0
    %1192 = vmatprep.subr.mxu0 0.0
    %1193 = vmatpush1.msra.mxu0 0.0
    %1194 = vmatprep.subr.mxu0 0.0
    %1195 = vmatpush1.msra.mxu0 0.0
    %1196 = vmatprep.subr.mxu0 0.0
    %1197 = vmatpush1.msra.mxu0 0.0
    %1198 = vmatprep.subr.mxu0 0.0
    %1199 = vmatpush1.msra.mxu0 0.0
    %1200 = vmatprep.subr.mxu0 0.0
    %1201 = vmatpush1.msra.mxu0 0.0
    %1202 = vmatprep.subr.mxu0 0.0
    %1203 = vmatpush1.msra.mxu0 0.0
    %1204 = vmatprep.subr.mxu0 0.0
    %1205 = vmatpush1.msra.mxu0 0.0
    %1206 = vmatprep.subr.mxu0 0.0
    %1207 = vmatpush1.msra.mxu0 0.0
    %1208 = vmatprep.subr.mxu0 0.0
    %1209 = vmatpush1.msra.mxu0 0.0
    %1210 = vmatprep.mubr.f32.mxu0 0.0
    %1211 = vmatmul.mubr.f32.gmra.mrb[0].mxu0 %v1144
    %v1212 = vpop.f32.mrb[0].mxu0
    %v1213 = vadd.f32 %v1129, %v1212
    %v1214 = vpop.f32.mrb[0].mxu0
    %v1215 = vadd.f32 %v1131, %v1214
    %1216 = vdwg.mxu0
    %v1217 = vmul.f32 %v1042, %v285
    %v1218 = vmul.f32 %v1043, %v283
    %1221 = vrot.lane.b32.xlu0 %v1217, 15
    %v1222 = vpop.permute.xlu0 %1221
    %1223 = vrot.lane.b32.xlu0 %v1218, 15
    %v1224 = vpop.permute.xlu0 %1223
    %v1225 = vsel %vm301, %v296, %v1222
    %v1226 = vsel %vm301, %v1222, %v1224
    %v1230 = vsel %vm1058, %v29, 0
    %1232 = vmatprep.subr.mxu0 %v1226
    %1233 = vmatpush1.msra.mxu0 %v1225
    %1234 = vmatprep.subr.mxu0 0.0
    %1235 = vmatpush1.msra.mxu0 0.0
    %1236 = vmatprep.subr.mxu0 0.0
    %1237 = vmatpush1.msra.mxu0 0.0
    %1238 = vmatprep.subr.mxu0 0.0
    %1239 = vmatpush1.msra.mxu0 0.0
    %1240 = vmatprep.subr.mxu0 0.0
    %1241 = vmatpush1.msra.mxu0 0.0
    %1242 = vmatprep.subr.mxu0 0.0
    %1243 = vmatpush1.msra.mxu0 0.0
    %1244 = vmatprep.subr.mxu0 0.0
    %1245 = vmatpush1.msra.mxu0 0.0
    %1246 = vmatprep.subr.mxu0 0.0
    %1247 = vmatpush1.msra.mxu0 0.0
    %1248 = vmatprep.subr.mxu0 0.0
    %1249 = vmatpush1.msra.mxu0 0.0
    %1250 = vmatprep.subr.mxu0 0.0
    %1251 = vmatpush1.msra.mxu0 0.0
    %1252 = vmatprep.subr.mxu0 0.0
    %1253 = vmatpush1.msra.mxu0 0.0
    %1254 = vmatprep.subr.mxu0 0.0
    %1255 = vmatpush1.msra.mxu0 0.0
    %1256 = vmatprep.subr.mxu0 0.0
    %1257 = vmatpush1.msra.mxu0 0.0
    %1258 = vmatprep.subr.mxu0 0.0
    %1259 = vmatpush1.msra.mxu0 0.0
    %1260 = vmatprep.subr.mxu0 0.0
    %1261 = vmatpush1.msra.mxu0 0.0
    %1262 = vmatprep.subr.mxu0 0.0
    %1263 = vmatpush1.msra.mxu0 0.0
    %1264 = vmatprep.subr.mxu0 0.0
    %1265 = vmatpush1.msra.mxu0 0.0
    %1266 = vmatprep.subr.mxu0 0.0
    %1267 = vmatpush1.msra.mxu0 0.0
    %1268 = vmatprep.subr.mxu0 0.0
    %1269 = vmatpush1.msra.mxu0 0.0
    %1270 = vmatprep.subr.mxu0 0.0
    %1271 = vmatpush1.msra.mxu0 0.0
    %1272 = vmatprep.subr.mxu0 0.0
    %1273 = vmatpush1.msra.mxu0 0.0
    %1274 = vmatprep.subr.mxu0 0.0
    %1275 = vmatpush1.msra.mxu0 0.0
    %1276 = vmatprep.subr.mxu0 0.0
    %1277 = vmatpush1.msra.mxu0 0.0
    %1278 = vmatprep.subr.mxu0 0.0
    %1279 = vmatpush1.msra.mxu0 0.0
    %1280 = vmatprep.subr.mxu0 0.0
    %1281 = vmatpush1.msra.mxu0 0.0
    %1282 = vmatprep.subr.mxu0 0.0
    %1283 = vmatpush1.msra.mxu0 0.0
    %1284 = vmatprep.subr.mxu0 0.0
    %1285 = vmatpush1.msra.mxu0 0.0
    %1286 = vmatprep.subr.mxu0 0.0
    %1287 = vmatpush1.msra.mxu0 0.0
    %1288 = vmatprep.subr.mxu0 0.0
    %1289 = vmatpush1.msra.mxu0 0.0
    %1290 = vmatprep.subr.mxu0 0.0
    %1291 = vmatpush1.msra.mxu0 0.0
    %1292 = vmatprep.subr.mxu0 0.0
    %1293 = vmatpush1.msra.mxu0 0.0
    %1294 = vmatprep.subr.mxu0 0.0
    %1295 = vmatpush1.msra.mxu0 0.0
    %1296 = vmatprep.mubr.f32.mxu0 0.0
    %1297 = vmatmul.mubr.f32.gmra.mrb[0].mxu0 %v1230
    %v1298 = vpop.f32.mrb[0].mxu0
    %v1299 = vadd.f32 0.0, %v1298
    %v1300 = vpop.f32.mrb[0].mxu0
    %v1301 = vadd.f32 0.0, %v1300
    %1302 = vdwg.mxu0
    %v1303 = vadd.f32 %v1213, %v1299
    %v1304 = vadd.f32 %v1215, %v1301
    %v1305 = vmul.f32 %v1042, %v399
    %v1306 = vmul.f32 %v1043, %v397
    %1309 = vrot.lane.b32.xlu0 %v1305, 1
    %v1310 = vpop.permute.xlu0 %1309
    %1311 = vrot.lane.b32.xlu0 %v1306, 1
    %v1312 = vpop.permute.xlu0 %1311
    %v1313 = vsel %vm415, %v410, %v1310
    %v1314 = vsel %vm415, %v1310, %v1312
    %v1318 = vsel %vm1058, %v30, 0
    %1320 = vmatprep.subr.mxu0 %v1314
    %1321 = vmatpush1.msra.mxu0 %v1313
    %1322 = vmatprep.subr.mxu0 0.0
    %1323 = vmatpush1.msra.mxu0 0.0
    %1324 = vmatprep.subr.mxu0 0.0
    %1325 = vmatpush1.msra.mxu0 0.0
    %1326 = vmatprep.subr.mxu0 0.0
    %1327 = vmatpush1.msra.mxu0 0.0
    %1328 = vmatprep.subr.mxu0 0.0
    %1329 = vmatpush1.msra.mxu0 0.0
    %1330 = vmatprep.subr.mxu0 0.0
    %1331 = vmatpush1.msra.mxu0 0.0
    %1332 = vmatprep.subr.mxu0 0.0
    %1333 = vmatpush1.msra.mxu0 0.0
    %1334 = vmatprep.subr.mxu0 0.0
    %1335 = vmatpush1.msra.mxu0 0.0
    %1336 = vmatprep.subr.mxu0 0.0
    %1337 = vmatpush1.msra.mxu0 0.0
    %1338 = vmatprep.subr.mxu0 0.0
    %1339 = vmatpush1.msra.mxu0 0.0
    %1340 = vmatprep.subr.mxu0 0.0
    %1341 = vmatpush1.msra.mxu0 0.0
    %1342 = vmatprep.subr.mxu0 0.0
    %1343 = vmatpush1.msra.mxu0 0.0
    %1344 = vmatprep.subr.mxu0 0.0
    %1345 = vmatpush1.msra.mxu0 0.0
    %1346 = vmatprep.subr.mxu0 0.0
    %1347 = vmatpush1.msra.mxu0 0.0
    %1348 = vmatprep.subr.mxu0 0.0
    %1349 = vmatpush1.msra.mxu0 0.0
    %1350 = vmatprep.subr.mxu0 0.0
    %1351 = vmatpush1.msra.mxu0 0.0
    %1352 = vmatprep.subr.mxu0 0.0
    %1353 = vmatpush1.msra.mxu0 0.0
    %1354 = vmatprep.subr.mxu0 0.0
    %1355 = vmatpush1.msra.mxu0 0.0
    %1356 = vmatprep.subr.mxu0 0.0
    %1357 = vmatpush1.msra.mxu0 0.0
    %1358 = vmatprep.subr.mxu0 0.0
    %1359 = vmatpush1.msra.mxu0 0.0
    %1360 = vmatprep.subr.mxu0 0.0
    %1361 = vmatpush1.msra.mxu0 0.0
    %1362 = vmatprep.subr.mxu0 0.0
    %1363 = vmatpush1.msra.mxu0 0.0
    %1364 = vmatprep.subr.mxu0 0.0
    %1365 = vmatpush1.msra.mxu0 0.0
    %1366 = vmatprep.subr.mxu0 0.0
    %1367 = vmatpush1.msra.mxu0 0.0
    %1368 = vmatprep.subr.mxu0 0.0
    %1369 = vmatpush1.msra.mxu0 0.0
    %1370 = vmatprep.subr.mxu0 0.0
    %1371 = vmatpush1.msra.mxu0 0.0
    %1372 = vmatprep.subr.mxu0 0.0
    %1373 = vmatpush1.msra.mxu0 0.0
    %1374 = vmatprep.subr.mxu0 0.0
    %1375 = vmatpush1.msra.mxu0 0.0
    %1376 = vmatprep.subr.mxu0 0.0
    %1377 = vmatpush1.msra.mxu0 0.0
    %1378 = vmatprep.subr.mxu0 0.0
    %1379 = vmatpush1.msra.mxu0 0.0
    %1380 = vmatprep.subr.mxu0 0.0
    %1381 = vmatpush1.msra.mxu0 0.0
    %1382 = vmatprep.subr.mxu0 0.0
    %1383 = vmatpush1.msra.mxu0 0.0
    %1384 = vmatprep.mubr.f32.mxu0 0.0
    %1385 = vmatmul.mubr.f32.gmra.mrb[0].mxu0 %v1318
    %v1386 = vpop.f32.mrb[0].mxu0
    %v1387 = vadd.f32 0.0, %v1386
    %v1388 = vpop.f32.mrb[0].mxu0
    %v1389 = vadd.f32 0.0, %v1388
    %1390 = vdwg.mxu0
    %v1391 = vadd.f32 %v1303, %v1387
    %v1392 = vadd.f32 %v1304, %v1389
    %v1394 = vsel %vm1058, %v31, 0
    %1396 = vmatprep.subr.mxu0 %v1043
    %1397 = vmatpush1.msra.mxu0 %v1042
    %1398 = vmatprep.subr.mxu0 0.0
    %1399 = vmatpush1.msra.mxu0 0.0
    %1400 = vmatprep.subr.mxu0 0.0
    %1401 = vmatpush1.msra.mxu0 0.0
    %1402 = vmatprep.subr.mxu0 0.0
    %1403 = vmatpush1.msra.mxu0 0.0
    %1404 = vmatprep.subr.mxu0 0.0
    %1405 = vmatpush1.msra.mxu0 0.0
    %1406 = vmatprep.subr.mxu0 0.0
    %1407 = vmatpush1.msra.mxu0 0.0
    %1408 = vmatprep.subr.mxu0 0.0
    %1409 = vmatpush1.msra.mxu0 0.0
    %1410 = vmatprep.subr.mxu0 0.0
    %1411 = vmatpush1.msra.mxu0 0.0
    %1412 = vmatprep.subr.mxu0 0.0
    %1413 = vmatpush1.msra.mxu0 0.0
    %1414 = vmatprep.subr.mxu0 0.0
    %1415 = vmatpush1.msra.mxu0 0.0
    %1416 = vmatprep.subr.mxu0 0.0
    %1417 = vmatpush1.msra.mxu0 0.0
    %1418 = vmatprep.subr.mxu0 0.0
    %1419 = vmatpush1.msra.mxu0 0.0
    %1420 = vmatprep.subr.mxu0 0.0
    %1421 = vmatpush1.msra.mxu0 0.0
    %1422 = vmatprep.subr.mxu0 0.0
    %1423 = vmatpush1.msra.mxu0 0.0
    %1424 = vmatprep.subr.mxu0 0.0
    %1425 = vmatpush1.msra.mxu0 0.0
    %1426 = vmatprep.subr.mxu0 0.0
    %1427 = vmatpush1.msra.mxu0 0.0
    %1428 = vmatprep.subr.mxu0 0.0
    %1429 = vmatpush1.msra.mxu0 0.0
    %1430 = vmatprep.subr.mxu0 0.0
    %1431 = vmatpush1.msra.mxu0 0.0
    %1432 = vmatprep.subr.mxu0 0.0
    %1433 = vmatpush1.msra.mxu0 0.0
    %1434 = vmatprep.subr.mxu0 0.0
    %1435 = vmatpush1.msra.mxu0 0.0
    %1436 = vmatprep.subr.mxu0 0.0
    %1437 = vmatpush1.msra.mxu0 0.0
    %1438 = vmatprep.subr.mxu0 0.0
    %1439 = vmatpush1.msra.mxu0 0.0
    %1440 = vmatprep.subr.mxu0 0.0
    %1441 = vmatpush1.msra.mxu0 0.0
    %1442 = vmatprep.subr.mxu0 0.0
    %1443 = vmatpush1.msra.mxu0 0.0
    %1444 = vmatprep.subr.mxu0 0.0
    %1445 = vmatpush1.msra.mxu0 0.0
    %1446 = vmatprep.subr.mxu0 0.0
    %1447 = vmatpush1.msra.mxu0 0.0
    %1448 = vmatprep.subr.mxu0 0.0
    %1449 = vmatpush1.msra.mxu0 0.0
    %1450 = vmatprep.subr.mxu0 0.0
    %1451 = vmatpush1.msra.mxu0 0.0
    %1452 = vmatprep.subr.mxu0 0.0
    %1453 = vmatpush1.msra.mxu0 0.0
    %1454 = vmatprep.subr.mxu0 0.0
    %1455 = vmatpush1.msra.mxu0 0.0
    %1456 = vmatprep.subr.mxu0 0.0
    %1457 = vmatpush1.msra.mxu0 0.0
    %1458 = vmatprep.subr.mxu0 0.0
    %1459 = vmatpush1.msra.mxu0 0.0
    %1460 = vmatprep.mubr.f32.mxu0 0.0
    %1461 = vmatmul.mubr.f32.gmra.mrb[0].mxu0 %v1394
    %v1462 = vpop.f32.mrb[0].mxu0
    %v1463 = vadd.f32 0.0, %v1462
    %v1464 = vpop.f32.mrb[0].mxu0
    %v1465 = vadd.f32 0.0, %v1464
    %1466 = vdwg.mxu0
    %v1467 = vadd.f32 %v1391, %v1463
    %v1468 = vadd.f32 %v1392, %v1465
    %v1469 = vmul.f32 %v1042, %v589
    %v1470 = vmul.f32 %v1043, %v592
    %1473 = vrot.lane.b32.xlu0 %v1469, 127
    %v1474 = vpop.permute.xlu0 %1473
    %1475 = vrot.lane.b32.xlu0 %v1470, 127
    %v1476 = vpop.permute.xlu0 %1475
    %v1477 = vsel %vm398, %v1474, %v1476
    %v1478 = vsel %vm398, %v1476, %v607
    %v1482 = vsel %vm1058, %v32, 0
    %1484 = vmatprep.subr.mxu0 %v1478
    %1485 = vmatpush1.msra.mxu0 %v1477
    %1486 = vmatprep.subr.mxu0 0.0
    %1487 = vmatpush1.msra.mxu0 0.0
    %1488 = vmatprep.subr.mxu0 0.0
    %1489 = vmatpush1.msra.mxu0 0.0
    %1490 = vmatprep.subr.mxu0 0.0
    %1491 = vmatpush1.msra.mxu0 0.0
    %1492 = vmatprep.subr.mxu0 0.0
    %1493 = vmatpush1.msra.mxu0 0.0
    %1494 = vmatprep.subr.mxu0 0.0
    %1495 = vmatpush1.msra.mxu0 0.0
    %1496 = vmatprep.subr.mxu0 0.0
    %1497 = vmatpush1.msra.mxu0 0.0
    %1498 = vmatprep.subr.mxu0 0.0
    %1499 = vmatpush1.msra.mxu0 0.0
    %1500 = vmatprep.subr.mxu0 0.0
    %1501 = vmatpush1.msra.mxu0 0.0
    %1502 = vmatprep.subr.mxu0 0.0
    %1503 = vmatpush1.msra.mxu0 0.0
    %1504 = vmatprep.subr.mxu0 0.0
    %1505 = vmatpush1.msra.mxu0 0.0
    %1506 = vmatprep.subr.mxu0 0.0
    %1507 = vmatpush1.msra.mxu0 0.0
    %1508 = vmatprep.subr.mxu0 0.0
    %1509 = vmatpush1.msra.mxu0 0.0
    %1510 = vmatprep.subr.mxu0 0.0
    %1511 = vmatpush1.msra.mxu0 0.0
    %1512 = vmatprep.subr.mxu0 0.0
    %1513 = vmatpush1.msra.mxu0 0.0
    %1514 = vmatprep.subr.mxu0 0.0
    %1515 = vmatpush1.msra.mxu0 0.0
    %1516 = vmatprep.subr.mxu0 0.0
    %1517 = vmatpush1.msra.mxu0 0.0
    %1518 = vmatprep.subr.mxu0 0.0
    %1519 = vmatpush1.msra.mxu0 0.0
    %1520 = vmatprep.subr.mxu0 0.0
    %1521 = vmatpush1.msra.mxu0 0.0
    %1522 = vmatprep.subr.mxu0 0.0
    %1523 = vmatpush1.msra.mxu0 0.0
    %1524 = vmatprep.subr.mxu0 0.0
    %1525 = vmatpush1.msra.mxu0 0.0
    %1526 = vmatprep.subr.mxu0 0.0
    %1527 = vmatpush1.msra.mxu0 0.0
    %1528 = vmatprep.subr.mxu0 0.0
    %1529 = vmatpush1.msra.mxu0 0.0
    %1530 = vmatprep.subr.mxu0 0.0
    %1531 = vmatpush1.msra.mxu0 0.0
    %1532 = vmatprep.subr.mxu0 0.0
    %1533 = vmatpush1.msra.mxu0 0.0
    %1534 = vmatprep.subr.mxu0 0.0
    %1535 = vmatpush1.msra.mxu0 0.0
    %1536 = vmatprep.subr.mxu0 0.0
    %1537 = vmatpush1.msra.mxu0 0.0
    %1538 = vmatprep.subr.mxu0 0.0
    %1539 = vmatpush1.msra.mxu0 0.0
    %1540 = vmatprep.subr.mxu0 0.0
    %1541 = vmatpush1.msra.mxu0 0.0
    %1542 = vmatprep.subr.mxu0 0.0
    %1543 = vmatpush1.msra.mxu0 0.0
    %1544 = vmatprep.subr.mxu0 0.0
    %1545 = vmatpush1.msra.mxu0 0.0
    %1546 = vmatprep.subr.mxu0 0.0
    %1547 = vmatpush1.msra.mxu0 0.0
    %1548 = vmatprep.mubr.f32.mxu0 0.0
    %1549 = vmatmul.mubr.f32.gmra.mrb[0].mxu0 %v1482
    %v1550 = vpop.f32.mrb[0].mxu0
    %v1551 = vadd.f32 0.0, %v1550
    %v1552 = vpop.f32.mrb[0].mxu0
    %v1553 = vadd.f32 0.0, %v1552
    %1554 = vdwg.mxu0
    %v1555 = vadd.f32 %v1467, %v1551
    %v1556 = vadd.f32 %v1468, %v1553
    %v1557 = vmul.f32 %v1042, %v701
    %v1558 = vmul.f32 %v1043, %v704
    %1561 = vrot.lane.b32.xlu0 %v1557, 113
    %v1562 = vpop.permute.xlu0 %1561
    %1563 = vrot.lane.b32.xlu0 %v1558, 113
    %v1564 = vpop.permute.xlu0 %1563
    %v1565 = vsel %vm284, %v1562, %v1564
    %v1566 = vsel %vm284, %v1564, %v719
    %v1570 = vsel %vm1058, %v33, 0
    %1572 = vmatprep.subr.mxu0 %v1566
    %1573 = vmatpush1.msra.mxu0 %v1565
    %1574 = vmatprep.subr.mxu0 0.0
    %1575 = vmatpush1.msra.mxu0 0.0
    %1576 = vmatprep.subr.mxu0 0.0
    %1577 = vmatpush1.msra.mxu0 0.0
    %1578 = vmatprep.subr.mxu0 0.0
    %1579 = vmatpush1.msra.mxu0 0.0
    %1580 = vmatprep.subr.mxu0 0.0
    %1581 = vmatpush1.msra.mxu0 0.0
    %1582 = vmatprep.subr.mxu0 0.0
    %1583 = vmatpush1.msra.mxu0 0.0
    %1584 = vmatprep.subr.mxu0 0.0
    %1585 = vmatpush1.msra.mxu0 0.0
    %1586 = vmatprep.subr.mxu0 0.0
    %1587 = vmatpush1.msra.mxu0 0.0
    %1588 = vmatprep.subr.mxu0 0.0
    %1589 = vmatpush1.msra.mxu0 0.0
    %1590 = vmatprep.subr.mxu0 0.0
    %1591 = vmatpush1.msra.mxu0 0.0
    %1592 = vmatprep.subr.mxu0 0.0
    %1593 = vmatpush1.msra.mxu0 0.0
    %1594 = vmatprep.subr.mxu0 0.0
    %1595 = vmatpush1.msra.mxu0 0.0
    %1596 = vmatprep.subr.mxu0 0.0
    %1597 = vmatpush1.msra.mxu0 0.0
    %1598 = vmatprep.subr.mxu0 0.0
    %1599 = vmatpush1.msra.mxu0 0.0
    %1600 = vmatprep.subr.mxu0 0.0
    %1601 = vmatpush1.msra.mxu0 0.0
    %1602 = vmatprep.subr.mxu0 0.0
    %1603 = vmatpush1.msra.mxu0 0.0
    %1604 = vmatprep.subr.mxu0 0.0
    %1605 = vmatpush1.msra.mxu0 0.0
    %1606 = vmatprep.subr.mxu0 0.0
    %1607 = vmatpush1.msra.mxu0 0.0
    %1608 = vmatprep.subr.mxu0 0.0
    %1609 = vmatpush1.msra.mxu0 0.0
    %1610 = vmatprep.subr.mxu0 0.0
    %1611 = vmatpush1.msra.mxu0 0.0
    %1612 = vmatprep.subr.mxu0 0.0
    %1613 = vmatpush1.msra.mxu0 0.0
    %1614 = vmatprep.subr.mxu0 0.0
    %1615 = vmatpush1.msra.mxu0 0.0
    %1616 = vmatprep.subr.mxu0 0.0
    %1617 = vmatpush1.msra.mxu0 0.0
    %1618 = vmatprep.subr.mxu0 0.0
    %1619 = vmatpush1.msra.mxu0 0.0
    %1620 = vmatprep.subr.mxu0 0.0
    %1621 = vmatpush1.msra.mxu0 0.0
    %1622 = vmatprep.subr.mxu0 0.0
    %1623 = vmatpush1.msra.mxu0 0.0
    %1624 = vmatprep.subr.mxu0 0.0
    %1625 = vmatpush1.msra.mxu0 0.0
    %1626 = vmatprep.subr.mxu0 0.0
    %1627 = vmatpush1.msra.mxu0 0.0
    %1628 = vmatprep.subr.mxu0 0.0
    %1629 = vmatpush1.msra.mxu0 0.0
    %1630 = vmatprep.subr.mxu0 0.0
    %1631 = vmatpush1.msra.mxu0 0.0
    %1632 = vmatprep.subr.mxu0 0.0
    %1633 = vmatpush1.msra.mxu0 0.0
    %1634 = vmatprep.subr.mxu0 0.0
    %1635 = vmatpush1.msra.mxu0 0.0
    %1636 = vmatprep.mubr.f32.mxu0 0.0
    %1637 = vmatmul.mubr.f32.gmra.mrb[0].mxu0 %v1570
    %v1638 = vpop.f32.mrb[0].mxu0
    %v1639 = vadd.f32 0.0, %v1638
    %v1640 = vpop.f32.mrb[0].mxu0
    %v1641 = vadd.f32 0.0, %v1640
    %1642 = vdwg.mxu0
    %v1643 = vadd.f32 %v1555, %v1639
    %v1644 = vadd.f32 %v1556, %v1641
    %v1645 = vmul.f32 %v1042, %v813
    %v1646 = vmul.f32 %v1043, %v816
    %1649 = vrot.lane.b32.xlu0 %v1645, 112
    %v1650 = vpop.permute.xlu0 %1649
    %1651 = vrot.lane.b32.xlu0 %v1646, 112
    %v1652 = vpop.permute.xlu0 %1651
    %v1653 = vsel %vm80, %v1650, %v1652
    %v1654 = vsel %vm80, %v1652, %v831
    %v1658 = vsel %vm1058, %v34, 0
    %1660 = vmatprep.subr.mxu0 %v1654
    %1661 = vmatpush1.msra.mxu0 %v1653
    %1662 = vmatprep.subr.mxu0 0.0
    %1663 = vmatpush1.msra.mxu0 0.0
    %1664 = vmatprep.subr.mxu0 0.0
    %1665 = vmatpush1.msra.mxu0 0.0
    %1666 = vmatprep.subr.mxu0 0.0
    %1667 = vmatpush1.msra.mxu0 0.0
    %1668 = vmatprep.subr.mxu0 0.0
    %1669 = vmatpush1.msra.mxu0 0.0
    %1670 = vmatprep.subr.mxu0 0.0
    %1671 = vmatpush1.msra.mxu0 0.0
    %1672 = vmatprep.subr.mxu0 0.0
    %1673 = vmatpush1.msra.mxu0 0.0
    %1674 = vmatprep.subr.mxu0 0.0
    %1675 = vmatpush1.msra.mxu0 0.0
    %1676 = vmatprep.subr.mxu0 0.0
    %1677 = vmatpush1.msra.mxu0 0.0
    %1678 = vmatprep.subr.mxu0 0.0
    %1679 = vmatpush1.msra.mxu0 0.0
    %1680 = vmatprep.subr.mxu0 0.0
    %1681 = vmatpush1.msra.mxu0 0.0
    %1682 = vmatprep.subr.mxu0 0.0
    %1683 = vmatpush1.msra.mxu0 0.0
    %1684 = vmatprep.subr.mxu0 0.0
    %1685 = vmatpush1.msra.mxu0 0.0
    %1686 = vmatprep.subr.mxu0 0.0
    %1687 = vmatpush1.msra.mxu0 0.0
    %1688 = vmatprep.subr.mxu0 0.0
    %1689 = vmatpush1.msra.mxu0 0.0
    %1690 = vmatprep.subr.mxu0 0.0
    %1691 = vmatpush1.msra.mxu0 0.0
    %1692 = vmatprep.subr.mxu0 0.0
    %1693 = vmatpush1.msra.mxu0 0.0
    %1694 = vmatprep.subr.mxu0 0.0
    %1695 = vmatpush1.msra.mxu0 0.0
    %1696 = vmatprep.subr.mxu0 0.0
    %1697 = vmatpush1.msra.mxu0 0.0
    %1698 = vmatprep.subr.mxu0 0.0
    %1699 = vmatpush1.msra.mxu0 0.0
    %1700 = vmatprep.subr.mxu0 0.0
    %1701 = vmatpush1.msra.mxu0 0.0
    %1702 = vmatprep.subr.mxu0 0.0
    %1703 = vmatpush1.msra.mxu0 0.0
    %1704 = vmatprep.subr.mxu0 0.0
    %1705 = vmatpush1.msra.mxu0 0.0
    %1706 = vmatprep.subr.mxu0 0.0
    %1707 = vmatpush1.msra.mxu0 0.0
    %1708 = vmatprep.subr.mxu0 0.0
    %1709 = vmatpush1.msra.mxu0 0.0
    %1710 = vmatprep.subr.mxu0 0.0
    %1711 = vmatpush1.msra.mxu0 0.0
    %1712 = vmatprep.subr.mxu0 0.0
    %1713 = vmatpush1.msra.mxu0 0.0
    %1714 = vmatprep.subr.mxu0 0.0
    %1715 = vmatpush1.msra.mxu0 0.0
    %1716 = vmatprep.subr.mxu0 0.0
    %1717 = vmatpush1.msra.mxu0 0.0
    %1718 = vmatprep.subr.mxu0 0.0
    %1719 = vmatpush1.msra.mxu0 0.0
    %1720 = vmatprep.subr.mxu0 0.0
    %1721 = vmatpush1.msra.mxu0 0.0
    %1722 = vmatprep.subr.mxu0 0.0
    %1723 = vmatpush1.msra.mxu0 0.0
    %1724 = vmatprep.mubr.f32.mxu0 0.0
    %1725 = vmatmul.mubr.f32.gmra.mrb[0].mxu0 %v1658
    %v1726 = vpop.f32.mrb[0].mxu0
    %v1727 = vadd.f32 0.0, %v1726
    %v1728 = vpop.f32.mrb[0].mxu0
    %v1729 = vadd.f32 0.0, %v1728
    %1730 = vdwg.mxu0
    %v1731 = vadd.f32 %v1643, %v1727
    %v1732 = vadd.f32 %v1644, %v1729
    %v1733 = vmul.f32 %v1042, %v925
    %v1734 = vmul.f32 %v1043, %v928
    %1737 = vrot.lane.b32.xlu0 %v1733, 111
    %v1738 = vpop.permute.xlu0 %1737
    %1739 = vrot.lane.b32.xlu0 %v1734, 111
    %v1740 = vpop.permute.xlu0 %1739
    %v1741 = vsel %vm58, %v1738, %v1740
    %v1742 = vsel %vm58, %v1740, %v943
    %v1746 = vsel %vm1058, %v35, 0
    %1748 = vmatprep.subr.mxu0 %v1742
    %1749 = vmatpush1.msra.mxu0 %v1741
    %1750 = vmatprep.subr.mxu0 0.0
    %1751 = vmatpush1.msra.mxu0 0.0
    %1752 = vmatprep.subr.mxu0 0.0
    %1753 = vmatpush1.msra.mxu0 0.0
    %1754 = vmatprep.subr.mxu0 0.0
    %1755 = vmatpush1.msra.mxu0 0.0
    %1756 = vmatprep.subr.mxu0 0.0
    %1757 = vmatpush1.msra.mxu0 0.0
    %1758 = vmatprep.subr.mxu0 0.0
    %1759 = vmatpush1.msra.mxu0 0.0
    %1760 = vmatprep.subr.mxu0 0.0
    %1761 = vmatpush1.msra.mxu0 0.0
    %1762 = vmatprep.subr.mxu0 0.0
    %1763 = vmatpush1.msra.mxu0 0.0
    %1764 = vmatprep.subr.mxu0 0.0
    %1765 = vmatpush1.msra.mxu0 0.0
    %1766 = vmatprep.subr.mxu0 0.0
    %1767 = vmatpush1.msra.mxu0 0.0
    %1768 = vmatprep.subr.mxu0 0.0
    %1769 = vmatpush1.msra.mxu0 0.0
    %1770 = vmatprep.subr.mxu0 0.0
    %1771 = vmatpush1.msra.mxu0 0.0
    %1772 = vmatprep.subr.mxu0 0.0
    %1773 = vmatpush1.msra.mxu0 0.0
    %1774 = vmatprep.subr.mxu0 0.0
    %1775 = vmatpush1.msra.mxu0 0.0
    %1776 = vmatprep.subr.mxu0 0.0
    %1777 = vmatpush1.msra.mxu0 0.0
    %1778 = vmatprep.subr.mxu0 0.0
    %1779 = vmatpush1.msra.mxu0 0.0
    %1780 = vmatprep.subr.mxu0 0.0
    %1781 = vmatpush1.msra.mxu0 0.0
    %1782 = vmatprep.subr.mxu0 0.0
    %1783 = vmatpush1.msra.mxu0 0.0
    %1784 = vmatprep.subr.mxu0 0.0
    %1785 = vmatpush1.msra.mxu0 0.0
    %1786 = vmatprep.subr.mxu0 0.0
    %1787 = vmatpush1.msra.mxu0 0.0
    %1788 = vmatprep.subr.mxu0 0.0
    %1789 = vmatpush1.msra.mxu0 0.0
    %1790 = vmatprep.subr.mxu0 0.0
    %1791 = vmatpush1.msra.mxu0 0.0
    %1792 = vmatprep.subr.mxu0 0.0
    %1793 = vmatpush1.msra.mxu0 0.0
    %1794 = vmatprep.subr.mxu0 0.0
    %1795 = vmatpush1.msra.mxu0 0.0
    %1796 = vmatprep.subr.mxu0 0.0
    %1797 = vmatpush1.msra.mxu0 0.0
    %1798 = vmatprep.subr.mxu0 0.0
    %1799 = vmatpush1.msra.mxu0 0.0
    %1800 = vmatprep.subr.mxu0 0.0
    %1801 = vmatpush1.msra.mxu0 0.0
    %1802 = vmatprep.subr.mxu0 0.0
    %1803 = vmatpush1.msra.mxu0 0.0
    %1804 = vmatprep.subr.mxu0 0.0
    %1805 = vmatpush1.msra.mxu0 0.0
    %1806 = vmatprep.subr.mxu0 0.0
    %1807 = vmatpush1.msra.mxu0 0.0
    %1808 = vmatprep.subr.mxu0 0.0
    %1809 = vmatpush1.msra.mxu0 0.0
    %1810 = vmatprep.subr.mxu0 0.0
    %1811 = vmatpush1.msra.mxu0 0.0
    %1812 = vmatprep.mubr.f32.mxu0 0.0
    %1813 = vmatmul.mubr.f32.gmra.mrb[0].mxu0 %v1746
    %v1814 = vpop.f32.mrb[0].mxu0
    %v1815 = vadd.f32 0.0, %v1814
    %v1816 = vpop.f32.mrb[0].mxu0
    %v1817 = vadd.f32 0.0, %v1816
    %1818 = vdwg.mxu0
    %v1819 = vadd.f32 %v1731, %v1815
    %v1820 = vadd.f32 %v1732, %v1817
    %v1821 = vadd.f32 %v1819, %v1820
    %1822 = vadd.xlane.f32.xlu0 %v1821
    %v1823 = vpop.xlane.xlu0 %1822
    %v1824 = vmul.f32 %v1823, 0.00390625
    %v1825 = vsub.f32 %v1819, %v1824
    %v1826 = vsub.f32 %v1820, %v1824
    %v1827 = vmul.f32 %v1825, %v1825
    %v1828 = vmul.f32 %v1826, %v1826
    %v1829 = vadd.f32 %v1827, %v1828
    %1830 = vadd.xlane.f32.xlu0 %v1829
    %v1831 = vpop.xlane.xlu0 %1830
    %v1832 = vmul.f32 %v1831, 0.00390625
    %v1833 = vadd.f32 %v1832, 1e-05
    %v1834 = vrsqrt.pop %v1833
    %v1835 = vmul.f32 %v1825, %v1834
    %v1836 = vmul.f32 %v1826, %v1834
    %v1837 = vmax.f32 %v1835, 0.0
    %v1838 = vmax.f32 %v1836, 0.0
    %1839 = vst [vmem:[#allocation2] sm:$0xff] %v1837
    %1840 = vst [vmem:[#allocation2 + $0x8] sm:$0xff] %v1838
    %s1841 = scalar_lea.vmem %s0, 8
    %v1842 = vld [vmem:[%s1841] sm:$0xff]
    %v1844 = vcombine.high %v1842, %v1842
    %v1846 = vmul.f32 %v1842, %v59
    %v1847 = vmul.f32 %v1844, %v57
    %v1848 = vmul.f32 %v1842, %v81
    %v1849 = vmul.f32 %v1844, %v79
    %1852 = vrot.lane.b32.xlu0 %v1848, 16
    %v1853 = vpop.permute.xlu0 %1852
    %1854 = vrot.lane.b32.xlu0 %v1849, 16
    %v1855 = vpop.permute.xlu0 %1854
    %v1856 = vsel %vm97, %v92, %v1853
    %v1857 = vsel %vm97, %v1853, %v1855
    %v1858 = vsel %vm104, %v1856, 0
    %v1860 = vsel %vm104, %v1857, 0
    %1862 = vmatprep.subr.mxu0 %v1860
    %1863 = vmatpush1.msra.mxu0 %v1858
    %1864 = vmatprep.subr.mxu0 0.0
    %1865 = vmatpush1.msra.mxu0 0.0
    %1866 = vmatprep.subr.mxu0 0.0
    %1867 = vmatpush1.msra.mxu0 0.0
    %1868 = vmatprep.subr.mxu0 0.0
    %1869 = vmatpush1.msra.mxu0 0.0
    %1870 = vmatprep.subr.mxu0 0.0
    %1871 = vmatpush1.msra.mxu0 0.0
    %1872 = vmatprep.subr.mxu0 0.0
    %1873 = vmatpush1.msra.mxu0 0.0
    %1874 = vmatprep.subr.mxu0 0.0
    %1875 = vmatpush1.msra.mxu0 0.0
    %1876 = vmatprep.subr.mxu0 0.0
    %1877 = vmatpush1.msra.mxu0 0.0
    %1878 = vmatprep.subr.mxu0 0.0
    %1879 = vmatpush1.msra.mxu0 0.0
    %1880 = vmatprep.subr.mxu0 0.0
    %1881 = vmatpush1.msra.mxu0 0.0
    %1882 = vmatprep.subr.mxu0 0.0
    %1883 = vmatpush1.msra.mxu0 0.0
    %1884 = vmatprep.subr.mxu0 0.0
    %1885 = vmatpush1.msra.mxu0 0.0
    %1886 = vmatprep.subr.mxu0 0.0
    %1887 = vmatpush1.msra.mxu0 0.0
    %1888 = vmatprep.subr.mxu0 0.0
    %1889 = vmatpush1.msra.mxu0 0.0
    %1890 = vmatprep.subr.mxu0 0.0
    %1891 = vmatpush1.msra.mxu0 0.0
    %1892 = vmatprep.subr.mxu0 0.0
    %1893 = vmatpush1.msra.mxu0 0.0
    %1894 = vmatprep.subr.mxu0 0.0
    %1895 = vmatpush1.msra.mxu0 0.0
    %1896 = vmatprep.subr.mxu0 0.0
    %1897 = vmatpush1.msra.mxu0 0.0
    %1898 = vmatprep.subr.mxu0 0.0
    %1899 = vmatpush1.msra.mxu0 0.0
    %1900 = vmatprep.subr.mxu0 0.0
    %1901 = vmatpush1.msra.mxu0 0.0
    %1902 = vmatprep.subr.mxu0 0.0
    %1903 = vmatpush1.msra.mxu0 0.0
    %1904 = vmatprep.subr.mxu0 0.0
    %1905 = vmatpush1.msra.mxu0 0.0
    %1906 = vmatprep.subr.mxu0 0.0
    %1907 = vmatpush1.msra.mxu0 0.0
    %1908 = vmatprep.subr.mxu0 0.0
    %1909 = vmatpush1.msra.mxu0 0.0
    %1910 = vmatprep.subr.mxu0 0.0
    %1911 = vmatpush1.msra.mxu0 0.0
    %1912 = vmatprep.subr.mxu0 0.0
    %1913 = vmatpush1.msra.mxu0 0.0
    %1914 = vmatprep.subr.mxu0 0.0
    %1915 = vmatpush1.msra.mxu0 0.0
    %1916 = vmatprep.subr.mxu0 0.0
    %1917 = vmatpush1.msra.mxu0 0.0
    %1918 = vmatprep.subr.mxu0 0.0
    %1919 = vmatpush1.msra.mxu0 0.0
    %1920 = vmatprep.subr.mxu0 0.0
    %1921 = vmatpush1.msra.mxu0 0.0
    %1922 = vmatprep.subr.mxu0 0.0
    %1923 = vmatpush1.msra.mxu0 0.0
    %1924 = vmatprep.subr.mxu0 0.0
    %1925 = vmatpush1.msra.mxu0 0.0
    %1926 = vmatprep.mubr.f32.mxu0 0.0
    %1927 = vmatmul.mubr.f32.gmra.mrb[0].mxu0 %v102
    %v1928 = vpop.f32.mrb[0].mxu0
    %v1929 = vadd.f32 0.0, %v1928
    %v1930 = vpop.f32.mrb[0].mxu0
    %v1931 = vadd.f32 0.0, %v1930
    %1932 = vdwg.mxu0
    %1935 = vrot.lane.b32.xlu0 %v1846, 17
    %v1936 = vpop.permute.xlu0 %1935
    %1937 = vrot.lane.b32.xlu0 %v1847, 17
    %v1938 = vpop.permute.xlu0 %1937
    %v1939 = vsel %vm189, %v184, %v1936
    %v1940 = vsel %vm189, %v1936, %v1938
    %v1941 = vsel %vm104, %v1939, 0
    %v1943 = vsel %vm104, %v1940, 0
    %1945 = vmatprep.subr.mxu0 %v1943
    %1946 = vmatpush1.msra.mxu0 %v1941
    %1947 = vmatprep.subr.mxu0 0.0
    %1948 = vmatpush1.msra.mxu0 0.0
    %1949 = vmatprep.subr.mxu0 0.0
    %1950 = vmatpush1.msra.mxu0 0.0
    %1951 = vmatprep.subr.mxu0 0.0
    %1952 = vmatpush1.msra.mxu0 0.0
    %1953 = vmatprep.subr.mxu0 0.0
    %1954 = vmatpush1.msra.mxu0 0.0
    %1955 = vmatprep.subr.mxu0 0.0
    %1956 = vmatpush1.msra.mxu0 0.0
    %1957 = vmatprep.subr.mxu0 0.0
    %1958 = vmatpush1.msra.mxu0 0.0
    %1959 = vmatprep.subr.mxu0 0.0
    %1960 = vmatpush1.msra.mxu0 0.0
    %1961 = vmatprep.subr.mxu0 0.0
    %1962 = vmatpush1.msra.mxu0 0.0
    %1963 = vmatprep.subr.mxu0 0.0
    %1964 = vmatpush1.msra.mxu0 0.0
    %1965 = vmatprep.subr.mxu0 0.0
    %1966 = vmatpush1.msra.mxu0 0.0
    %1967 = vmatprep.subr.mxu0 0.0
    %1968 = vmatpush1.msra.mxu0 0.0
    %1969 = vmatprep.subr.mxu0 0.0
    %1970 = vmatpush1.msra.mxu0 0.0
    %1971 = vmatprep.subr.mxu0 0.0
    %1972 = vmatpush1.msra.mxu0 0.0
    %1973 = vmatprep.subr.mxu0 0.0
    %1974 = vmatpush1.msra.mxu0 0.0
    %1975 = vmatprep.subr.mxu0 0.0
    %1976 = vmatpush1.msra.mxu0 0.0
    %1977 = vmatprep.subr.mxu0 0.0
    %1978 = vmatpush1.msra.mxu0 0.0
    %1979 = vmatprep.subr.mxu0 0.0
    %1980 = vmatpush1.msra.mxu0 0.0
    %1981 = vmatprep.subr.mxu0 0.0
    %1982 = vmatpush1.msra.mxu0 0.0
    %1983 = vmatprep.subr.mxu0 0.0
    %1984 = vmatpush1.msra.mxu0 0.0
    %1985 = vmatprep.subr.mxu0 0.0
    %1986 = vmatpush1.msra.mxu0 0.0
    %1987 = vmatprep.subr.mxu0 0.0
    %1988 = vmatpush1.msra.mxu0 0.0
    %1989 = vmatprep.subr.mxu0 0.0
    %1990 = vmatpush1.msra.mxu0 0.0
    %1991 = vmatprep.subr.mxu0 0.0
    %1992 = vmatpush1.msra.mxu0 0.0
    %1993 = vmatprep.subr.mxu0 0.0
    %1994 = vmatpush1.msra.mxu0 0.0
    %1995 = vmatprep.subr.mxu0 0.0
    %1996 = vmatpush1.msra.mxu0 0.0
    %1997 = vmatprep.subr.mxu0 0.0
    %1998 = vmatpush1.msra.mxu0 0.0
    %1999 = vmatprep.subr.mxu0 0.0
    %2000 = vmatpush1.msra.mxu0 0.0
    %2001 = vmatprep.subr.mxu0 0.0
    %2002 = vmatpush1.msra.mxu0 0.0
    %2003 = vmatprep.subr.mxu0 0.0
    %2004 = vmatpush1.msra.mxu0 0.0
    %2005 = vmatprep.subr.mxu0 0.0
    %2006 = vmatpush1.msra.mxu0 0.0
    %2007 = vmatprep.subr.mxu0 0.0
    %2008 = vmatpush1.msra.mxu0 0.0
    %2009 = vmatprep.mubr.f32.mxu0 0.0
    %2010 = vmatmul.mubr.f32.gmra.mrb[0].mxu0 %v193
    %v2011 = vpop.f32.mrb[0].mxu0
    %v2012 = vadd.f32 %v1929, %v2011
    %v2013 = vpop.f32.mrb[0].mxu0
    %v2014 = vadd.f32 %v1931, %v2013
    %2015 = vdwg.mxu0
    %v2016 = vmul.f32 %v1842, %v285
    %v2017 = vmul.f32 %v1844, %v283
    %2020 = vrot.lane.b32.xlu0 %v2016, 15
    %v2021 = vpop.permute.xlu0 %2020
    %2022 = vrot.lane.b32.xlu0 %v2017, 15
    %v2023 = vpop.permute.xlu0 %2022
    %v2024 = vsel %vm301, %v296, %v2021
    %v2025 = vsel %vm301, %v2021, %v2023
    %v2026 = vsel %vm104, %v2024, 0
    %v2028 = vsel %vm104, %v2025, 0
    %2030 = vmatprep.subr.mxu0 %v2028
    %2031 = vmatpush1.msra.mxu0 %v2026
    %2032 = vmatprep.subr.mxu0 0.0
    %2033 = vmatpush1.msra.mxu0 0.0
    %2034 = vmatprep.subr.mxu0 0.0
    %2035 = vmatpush1.msra.mxu0 0.0
    %2036 = vmatprep.subr.mxu0 0.0
    %2037 = vmatpush1.msra.mxu0 0.0
    %2038 = vmatprep.subr.mxu0 0.0
    %2039 = vmatpush1.msra.mxu0 0.0
    %2040 = vmatprep.subr.mxu0 0.0
    %2041 = vmatpush1.msra.mxu0 0.0
    %2042 = vmatprep.subr.mxu0 0.0
    %2043 = vmatpush1.msra.mxu0 0.0
    %2044 = vmatprep.subr.mxu0 0.0
    %2045 = vmatpush1.msra.mxu0 0.0
    %2046 = vmatprep.subr.mxu0 0.0
    %2047 = vmatpush1.msra.mxu0 0.0
    %2048 = vmatprep.subr.mxu0 0.0
    %2049 = vmatpush1.msra.mxu0 0.0
    %2050 = vmatprep.subr.mxu0 0.0
    %2051 = vmatpush1.msra.mxu0 0.0
    %2052 = vmatprep.subr.mxu0 0.0
    %2053 = vmatpush1.msra.mxu0 0.0
    %2054 = vmatprep.subr.mxu0 0.0
    %2055 = vmatpush1.msra.mxu0 0.0
    %2056 = vmatprep.subr.mxu0 0.0
    %2057 = vmatpush1.msra.mxu0 0.0
    %2058 = vmatprep.subr.mxu0 0.0
    %2059 = vmatpush1.msra.mxu0 0.0
    %2060 = vmatprep.subr.mxu0 0.0
    %2061 = vmatpush1.msra.mxu0 0.0
    %2062 = vmatprep.subr.mxu0 0.0
    %2063 = vmatpush1.msra.mxu0 0.0
    %2064 = vmatprep.subr.mxu0 0.0
    %2065 = vmatpush1.msra.mxu0 0.0
    %2066 = vmatprep.subr.mxu0 0.0
    %2067 = vmatpush1.msra.mxu0 0.0
    %2068 = vmatprep.subr.mxu0 0.0
    %2069 = vmatpush1.msra.mxu0 0.0
    %2070 = vmatprep.subr.mxu0 0.0
    %2071 = vmatpush1.msra.mxu0 0.0
    %2072 = vmatprep.subr.mxu0 0.0
    %2073 = vmatpush1.msra.mxu0 0.0
    %2074 = vmatprep.subr.mxu0 0.0
    %2075 = vmatpush1.msra.mxu0 0.0
    %2076 = vmatprep.subr.mxu0 0.0
    %2077 = vmatpush1.msra.mxu0 0.0
    %2078 = vmatprep.subr.mxu0 0.0
    %2079 = vmatpush1.msra.mxu0 0.0
    %2080 = vmatprep.subr.mxu0 0.0
    %2081 = vmatpush1.msra.mxu0 0.0
    %2082 = vmatprep.subr.mxu0 0.0
    %2083 = vmatpush1.msra.mxu0 0.0
    %2084 = vmatprep.subr.mxu0 0.0
    %2085 = vmatpush1.msra.mxu0 0.0
    %2086 = vmatprep.subr.mxu0 0.0
    %2087 = vmatpush1.msra.mxu0 0.0
    %2088 = vmatprep.subr.mxu0 0.0
    %2089 = vmatpush1.msra.mxu0 0.0
    %2090 = vmatprep.subr.mxu0 0.0
    %2091 = vmatpush1.msra.mxu0 0.0
    %2092 = vmatprep.subr.mxu0 0.0
    %2093 = vmatpush1.msra.mxu0 0.0
    %2094 = vmatprep.mubr.f32.mxu0 0.0
    %2095 = vmatmul.mubr.f32.gmra.mrb[0].mxu0 %v305
    %v2096 = vpop.f32.mrb[0].mxu0
    %v2097 = vadd.f32 0.0, %v2096
    %v2098 = vpop.f32.mrb[0].mxu0
    %v2099 = vadd.f32 0.0, %v2098
    %2100 = vdwg.mxu0
    %v2101 = vadd.f32 %v2012, %v2097
    %v2102 = vadd.f32 %v2014, %v2099
    %v2103 = vmul.f32 %v1842, %v399
    %v2104 = vmul.f32 %v1844, %v397
    %2107 = vrot.lane.b32.xlu0 %v2103, 1
    %v2108 = vpop.permute.xlu0 %2107
    %2109 = vrot.lane.b32.xlu0 %v2104, 1
    %v2110 = vpop.permute.xlu0 %2109
    %v2111 = vsel %vm415, %v410, %v2108
    %v2112 = vsel %vm415, %v2108, %v2110
    %v2113 = vsel %vm104, %v2111, 0
    %v2115 = vsel %vm104, %v2112, 0
    %2117 = vmatprep.subr.mxu0 %v2115
    %2118 = vmatpush1.msra.mxu0 %v2113
    %2119 = vmatprep.subr.mxu0 0.0
    %2120 = vmatpush1.msra.mxu0 0.0
    %2121 = vmatprep.subr.mxu0 0.0
    %2122 = vmatpush1.msra.mxu0 0.0
    %2123 = vmatprep.subr.mxu0 0.0
    %2124 = vmatpush1.msra.mxu0 0.0
    %2125 = vmatprep.subr.mxu0 0.0
    %2126 = vmatpush1.msra.mxu0 0.0
    %2127 = vmatprep.subr.mxu0 0.0
    %2128 = vmatpush1.msra.mxu0 0.0
    %2129 = vmatprep.subr.mxu0 0.0
    %2130 = vmatpush1.msra.mxu0 0.0
    %2131 = vmatprep.subr.mxu0 0.0
    %2132 = vmatpush1.msra.mxu0 0.0
    %2133 = vmatprep.subr.mxu0 0.0
    %2134 = vmatpush1.msra.mxu0 0.0
    %2135 = vmatprep.subr.mxu0 0.0
    %2136 = vmatpush1.msra.mxu0 0.0
    %2137 = vmatprep.subr.mxu0 0.0
    %2138 = vmatpush1.msra.mxu0 0.0
    %2139 = vmatprep.subr.mxu0 0.0
    %2140 = vmatpush1.msra.mxu0 0.0
    %2141 = vmatprep.subr.mxu0 0.0
    %2142 = vmatpush1.msra.mxu0 0.0
    %2143 = vmatprep.subr.mxu0 0.0
    %2144 = vmatpush1.msra.mxu0 0.0
    %2145 = vmatprep.subr.mxu0 0.0
    %2146 = vmatpush1.msra.mxu0 0.0
    %2147 = vmatprep.subr.mxu0 0.0
    %2148 = vmatpush1.msra.mxu0 0.0
    %2149 = vmatprep.subr.mxu0 0.0
    %2150 = vmatpush1.msra.mxu0 0.0
    %2151 = vmatprep.subr.mxu0 0.0
    %2152 = vmatpush1.msra.mxu0 0.0
    %2153 = vmatprep.subr.mxu0 0.0
    %2154 = vmatpush1.msra.mxu0 0.0
    %2155 = vmatprep.subr.mxu0 0.0
    %2156 = vmatpush1.msra.mxu0 0.0
    %2157 = vmatprep.subr.mxu0 0.0
    %2158 = vmatpush1.msra.mxu0 0.0
    %2159 = vmatprep.subr.mxu0 0.0
    %2160 = vmatpush1.msra.mxu0 0.0
    %2161 = vmatprep.subr.mxu0 0.0
    %2162 = vmatpush1.msra.mxu0 0.0
    %2163 = vmatprep.subr.mxu0 0.0
    %2164 = vmatpush1.msra.mxu0 0.0
    %2165 = vmatprep.subr.mxu0 0.0
    %2166 = vmatpush1.msra.mxu0 0.0
    %2167 = vmatprep.subr.mxu0 0.0
    %2168 = vmatpush1.msra.mxu0 0.0
    %2169 = vmatprep.subr.mxu0 0.0
    %2170 = vmatpush1.msra.mxu0 0.0
    %2171 = vmatprep.subr.mxu0 0.0
    %2172 = vmatpush1.msra.mxu0 0.0
    %2173 = vmatprep.subr.mxu0 0.0
    %2174 = vmatpush1.msra.mxu0 0.0
    %2175 = vmatprep.subr.mxu0 0.0
    %2176 = vmatpush1.msra.mxu0 0.0
    %2177 = vmatprep.subr.mxu0 0.0
    %2178 = vmatpush1.msra.mxu0 0.0
    %2179 = vmatprep.subr.mxu0 0.0
    %2180 = vmatpush1.msra.mxu0 0.0
    %2181 = vmatprep.mubr.f32.mxu0 0.0
    %2182 = vmatmul.mubr.f32.gmra.mrb[0].mxu0 %v419
    %v2183 = vpop.f32.mrb[0].mxu0
    %v2184 = vadd.f32 0.0, %v2183
    %v2185 = vpop.f32.mrb[0].mxu0
    %v2186 = vadd.f32 0.0, %v2185
    %2187 = vdwg.mxu0
    %v2188 = vadd.f32 %v2101, %v2184
    %v2189 = vadd.f32 %v2102, %v2186
    %v2190 = vsel %vm104, %v1842, 0
    %v2192 = vsel %vm104, %v1844, 0
    %2194 = vmatprep.subr.mxu0 %v2192
    %2195 = vmatpush1.msra.mxu0 %v2190
    %2196 = vmatprep.subr.mxu0 0.0
    %2197 = vmatpush1.msra.mxu0 0.0
    %2198 = vmatprep.subr.mxu0 0.0
    %2199 = vmatpush1.msra.mxu0 0.0
    %2200 = vmatprep.subr.mxu0 0.0
    %2201 = vmatpush1.msra.mxu0 0.0
    %2202 = vmatprep.subr.mxu0 0.0
    %2203 = vmatpush1.msra.mxu0 0.0
    %2204 = vmatprep.subr.mxu0 0.0
    %2205 = vmatpush1.msra.mxu0 0.0
    %2206 = vmatprep.subr.mxu0 0.0
    %2207 = vmatpush1.msra.mxu0 0.0
    %2208 = vmatprep.subr.mxu0 0.0
    %2209 = vmatpush1.msra.mxu0 0.0
    %2210 = vmatprep.subr.mxu0 0.0
    %2211 = vmatpush1.msra.mxu0 0.0
    %2212 = vmatprep.subr.mxu0 0.0
    %2213 = vmatpush1.msra.mxu0 0.0
    %2214 = vmatprep.subr.mxu0 0.0
    %2215 = vmatpush1.msra.mxu0 0.0
    %2216 = vmatprep.subr.mxu0 0.0
    %2217 = vmatpush1.msra.mxu0 0.0
    %2218 = vmatprep.subr.mxu0 0.0
    %2219 = vmatpush1.msra.mxu0 0.0
    %2220 = vmatprep.subr.mxu0 0.0
    %2221 = vmatpush1.msra.mxu0 0.0
    %2222 = vmatprep.subr.mxu0 0.0
    %2223 = vmatpush1.msra.mxu0 0.0
    %2224 = vmatprep.subr.mxu0 0.0
    %2225 = vmatpush1.msra.mxu0 0.0
    %2226 = vmatprep.subr.mxu0 0.0
    %2227 = vmatpush1.msra.mxu0 0.0
    %2228 = vmatprep.subr.mxu0 0.0
    %2229 = vmatpush1.msra.mxu0 0.0
    %2230 = vmatprep.subr.mxu0 0.0
    %2231 = vmatpush1.msra.mxu0 0.0
    %2232 = vmatprep.subr.mxu0 0.0
    %2233 = vmatpush1.msra.mxu0 0.0
    %2234 = vmatprep.subr.mxu0 0.0
    %2235 = vmatpush1.msra.mxu0 0.0
    %2236 = vmatprep.subr.mxu0 0.0
    %2237 = vmatpush1.msra.mxu0 0.0
    %2238 = vmatprep.subr.mxu0 0.0
    %2239 = vmatpush1.msra.mxu0 0.0
    %2240 = vmatprep.subr.mxu0 0.0
    %2241 = vmatpush1.msra.mxu0 0.0
    %2242 = vmatprep.subr.mxu0 0.0
    %2243 = vmatpush1.msra.mxu0 0.0
    %2244 = vmatprep.subr.mxu0 0.0
    %2245 = vmatpush1.msra.mxu0 0.0
    %2246 = vmatprep.subr.mxu0 0.0
    %2247 = vmatpush1.msra.mxu0 0.0
    %2248 = vmatprep.subr.mxu0 0.0
    %2249 = vmatpush1.msra.mxu0 0.0
    %2250 = vmatprep.subr.mxu0 0.0
    %2251 = vmatpush1.msra.mxu0 0.0
    %2252 = vmatprep.subr.mxu0 0.0
    %2253 = vmatpush1.msra.mxu0 0.0
    %2254 = vmatprep.subr.mxu0 0.0
    %2255 = vmatpush1.msra.mxu0 0.0
    %2256 = vmatprep.subr.mxu0 0.0
    %2257 = vmatpush1.msra.mxu0 0.0
    %2258 = vmatprep.mubr.f32.mxu0 0.0
    %2259 = vmatmul.mubr.f32.gmra.mrb[0].mxu0 %v499
    %v2260 = vpop.f32.mrb[0].mxu0
    %v2261 = vadd.f32 0.0, %v2260
    %v2262 = vpop.f32.mrb[0].mxu0
    %v2263 = vadd.f32 0.0, %v2262
    %2264 = vdwg.mxu0
    %v2265 = vadd.f32 %v2188, %v2261
    %v2266 = vadd.f32 %v2189, %v2263
    %v2267 = vmul.f32 %v1842, %v589
    %v2268 = vmul.f32 %v1844, %v592
    %2271 = vrot.lane.b32.xlu0 %v2267, 127
    %v2272 = vpop.permute.xlu0 %2271
    %2273 = vrot.lane.b32.xlu0 %v2268, 127
    %v2274 = vpop.permute.xlu0 %2273
    %v2275 = vsel %vm398, %v2272, %v2274
    %v2276 = vsel %vm398, %v2274, %v607
    %v2277 = vsel %vm104, %v2275, 0
    %v2279 = vsel %vm104, %v2276, 0
    %2281 = vmatprep.subr.mxu0 %v2279
    %2282 = vmatpush1.msra.mxu0 %v2277
    %2283 = vmatprep.subr.mxu0 0.0
    %2284 = vmatpush1.msra.mxu0 0.0
    %2285 = vmatprep.subr.mxu0 0.0
    %2286 = vmatpush1.msra.mxu0 0.0
    %2287 = vmatprep.subr.mxu0 0.0
    %2288 = vmatpush1.msra.mxu0 0.0
    %2289 = vmatprep.subr.mxu0 0.0
    %2290 = vmatpush1.msra.mxu0 0.0
    %2291 = vmatprep.subr.mxu0 0.0
    %2292 = vmatpush1.msra.mxu0 0.0
    %2293 = vmatprep.subr.mxu0 0.0
    %2294 = vmatpush1.msra.mxu0 0.0
    %2295 = vmatprep.subr.mxu0 0.0
    %2296 = vmatpush1.msra.mxu0 0.0
    %2297 = vmatprep.subr.mxu0 0.0
    %2298 = vmatpush1.msra.mxu0 0.0
    %2299 = vmatprep.subr.mxu0 0.0
    %2300 = vmatpush1.msra.mxu0 0.0
    %2301 = vmatprep.subr.mxu0 0.0
    %2302 = vmatpush1.msra.mxu0 0.0
    %2303 = vmatprep.subr.mxu0 0.0
    %2304 = vmatpush1.msra.mxu0 0.0
    %2305 = vmatprep.subr.mxu0 0.0
    %2306 = vmatpush1.msra.mxu0 0.0
    %2307 = vmatprep.subr.mxu0 0.0
    %2308 = vmatpush1.msra.mxu0 0.0
    %2309 = vmatprep.subr.mxu0 0.0
    %2310 = vmatpush1.msra.mxu0 0.0
    %2311 = vmatprep.subr.mxu0 0.0
    %2312 = vmatpush1.msra.mxu0 0.0
    %2313 = vmatprep.subr.mxu0 0.0
    %2314 = vmatpush1.msra.mxu0 0.0
    %2315 = vmatprep.subr.mxu0 0.0
    %2316 = vmatpush1.msra.mxu0 0.0
    %2317 = vmatprep.subr.mxu0 0.0
    %2318 = vmatpush1.msra.mxu0 0.0
    %2319 = vmatprep.subr.mxu0 0.0
    %2320 = vmatpush1.msra.mxu0 0.0
    %2321 = vmatprep.subr.mxu0 0.0
    %2322 = vmatpush1.msra.mxu0 0.0
    %2323 = vmatprep.subr.mxu0 0.0
    %2324 = vmatpush1.msra.mxu0 0.0
    %2325 = vmatprep.subr.mxu0 0.0
    %2326 = vmatpush1.msra.mxu0 0.0
    %2327 = vmatprep.subr.mxu0 0.0
    %2328 = vmatpush1.msra.mxu0 0.0
    %2329 = vmatprep.subr.mxu0 0.0
    %2330 = vmatpush1.msra.mxu0 0.0
    %2331 = vmatprep.subr.mxu0 0.0
    %2332 = vmatpush1.msra.mxu0 0.0
    %2333 = vmatprep.subr.mxu0 0.0
    %2334 = vmatpush1.msra.mxu0 0.0
    %2335 = vmatprep.subr.mxu0 0.0
    %2336 = vmatpush1.msra.mxu0 0.0
    %2337 = vmatprep.subr.mxu0 0.0
    %2338 = vmatpush1.msra.mxu0 0.0
    %2339 = vmatprep.subr.mxu0 0.0
    %2340 = vmatpush1.msra.mxu0 0.0
    %2341 = vmatprep.subr.mxu0 0.0
    %2342 = vmatpush1.msra.mxu0 0.0
    %2343 = vmatprep.subr.mxu0 0.0
    %2344 = vmatpush1.msra.mxu0 0.0
    %2345 = vmatprep.mubr.f32.mxu0 0.0
    %2346 = vmatmul.mubr.f32.gmra.mrb[0].mxu0 %v611
    %v2347 = vpop.f32.mrb[0].mxu0
    %v2348 = vadd.f32 0.0, %v2347
    %v2349 = vpop.f32.mrb[0].mxu0
    %v2350 = vadd.f32 0.0, %v2349
    %2351 = vdwg.mxu0
    %v2352 = vadd.f32 %v2265, %v2348
    %v2353 = vadd.f32 %v2266, %v2350
    %v2354 = vmul.f32 %v1842, %v701
    %v2355 = vmul.f32 %v1844, %v704
    %2358 = vrot.lane.b32.xlu0 %v2354, 113
    %v2359 = vpop.permute.xlu0 %2358
    %2360 = vrot.lane.b32.xlu0 %v2355, 113
    %v2361 = vpop.permute.xlu0 %2360
    %v2362 = vsel %vm284, %v2359, %v2361
    %v2363 = vsel %vm284, %v2361, %v719
    %v2364 = vsel %vm104, %v2362, 0
    %v2366 = vsel %vm104, %v2363, 0
    %2368 = vmatprep.subr.mxu0 %v2366
    %2369 = vmatpush1.msra.mxu0 %v2364
    %2370 = vmatprep.subr.mxu0 0.0
    %2371 = vmatpush1.msra.mxu0 0.0
    %2372 = vmatprep.subr.mxu0 0.0
    %2373 = vmatpush1.msra.mxu0 0.0
    %2374 = vmatprep.subr.mxu0 0.0
    %2375 = vmatpush1.msra.mxu0 0.0
    %2376 = vmatprep.subr.mxu0 0.0
    %2377 = vmatpush1.msra.mxu0 0.0
    %2378 = vmatprep.subr.mxu0 0.0
    %2379 = vmatpush1.msra.mxu0 0.0
    %2380 = vmatprep.subr.mxu0 0.0
    %2381 = vmatpush1.msra.mxu0 0.0
    %2382 = vmatprep.subr.mxu0 0.0
    %2383 = vmatpush1.msra.mxu0 0.0
    %2384 = vmatprep.subr.mxu0 0.0
    %2385 = vmatpush1.msra.mxu0 0.0
    %2386 = vmatprep.subr.mxu0 0.0
    %2387 = vmatpush1.msra.mxu0 0.0
    %2388 = vmatprep.subr.mxu0 0.0
    %2389 = vmatpush1.msra.mxu0 0.0
    %2390 = vmatprep.subr.mxu0 0.0
    %2391 = vmatpush1.msra.mxu0 0.0
    %2392 = vmatprep.subr.mxu0 0.0
    %2393 = vmatpush1.msra.mxu0 0.0
    %2394 = vmatprep.subr.mxu0 0.0
    %2395 = vmatpush1.msra.mxu0 0.0
    %2396 = vmatprep.subr.mxu0 0.0
    %2397 = vmatpush1.msra.mxu0 0.0
    %2398 = vmatprep.subr.mxu0 0.0
    %2399 = vmatpush1.msra.mxu0 0.0
    %2400 = vmatprep.subr.mxu0 0.0
    %2401 = vmatpush1.msra.mxu0 0.0
    %2402 = vmatprep.subr.mxu0 0.0
    %2403 = vmatpush1.msra.mxu0 0.0
    %2404 = vmatprep.subr.mxu0 0.0
    %2405 = vmatpush1.msra.mxu0 0.0
    %2406 = vmatprep.subr.mxu0 0.0
    %2407 = vmatpush1.msra.mxu0 0.0
    %2408 = vmatprep.subr.mxu0 0.0
    %2409 = vmatpush1.msra.mxu0 0.0
    %2410 = vmatprep.subr.mxu0 0.0
    %2411 = vmatpush1.msra.mxu0 0.0
    %2412 = vmatprep.subr.mxu0 0.0
    %2413 = vmatpush1.msra.mxu0 0.0
    %2414 = vmatprep.subr.mxu0 0.0
    %2415 = vmatpush1.msra.mxu0 0.0
    %2416 = vmatprep.subr.mxu0 0.0
    %2417 = vmatpush1.msra.mxu0 0.0
    %2418 = vmatprep.subr.mxu0 0.0
    %2419 = vmatpush1.msra.mxu0 0.0
    %2420 = vmatprep.subr.mxu0 0.0
    %2421 = vmatpush1.msra.mxu0 0.0
    %2422 = vmatprep.subr.mxu0 0.0
    %2423 = vmatpush1.msra.mxu0 0.0
    %2424 = vmatprep.subr.mxu0 0.0
    %2425 = vmatpush1.msra.mxu0 0.0
    %2426 = vmatprep.subr.mxu0 0.0
    %2427 = vmatpush1.msra.mxu0 0.0
    %2428 = vmatprep.subr.mxu0 0.0
    %2429 = vmatpush1.msra.mxu0 0.0
    %2430 = vmatprep.subr.mxu0 0.0
    %2431 = vmatpush1.msra.mxu0 0.0
    %2432 = vmatprep.mubr.f32.mxu0 0.0
    %2433 = vmatmul.mubr.f32.gmra.mrb[0].mxu0 %v723
    %v2434 = vpop.f32.mrb[0].mxu0
    %v2435 = vadd.f32 0.0, %v2434
    %v2436 = vpop.f32.mrb[0].mxu0
    %v2437 = vadd.f32 0.0, %v2436
    %2438 = vdwg.mxu0
    %v2439 = vadd.f32 %v2352, %v2435
    %v2440 = vadd.f32 %v2353, %v2437
    %v2441 = vmul.f32 %v1842, %v813
    %v2442 = vmul.f32 %v1844, %v816
    %2445 = vrot.lane.b32.xlu0 %v2441, 112
    %v2446 = vpop.permute.xlu0 %2445
    %2447 = vrot.lane.b32.xlu0 %v2442, 112
    %v2448 = vpop.permute.xlu0 %2447
    %v2449 = vsel %vm80, %v2446, %v2448
    %v2450 = vsel %vm80, %v2448, %v831
    %v2451 = vsel %vm104, %v2449, 0
    %v2453 = vsel %vm104, %v2450, 0
    %2455 = vmatprep.subr.mxu0 %v2453
    %2456 = vmatpush1.msra.mxu0 %v2451
    %2457 = vmatprep.subr.mxu0 0.0
    %2458 = vmatpush1.msra.mxu0 0.0
    %2459 = vmatprep.subr.mxu0 0.0
    %2460 = vmatpush1.msra.mxu0 0.0
    %2461 = vmatprep.subr.mxu0 0.0
    %2462 = vmatpush1.msra.mxu0 0.0
    %2463 = vmatprep.subr.mxu0 0.0
    %2464 = vmatpush1.msra.mxu0 0.0
    %2465 = vmatprep.subr.mxu0 0.0
    %2466 = vmatpush1.msra.mxu0 0.0
    %2467 = vmatprep.subr.mxu0 0.0
    %2468 = vmatpush1.msra.mxu0 0.0
    %2469 = vmatprep.subr.mxu0 0.0
    %2470 = vmatpush1.msra.mxu0 0.0
    %2471 = vmatprep.subr.mxu0 0.0
    %2472 = vmatpush1.msra.mxu0 0.0
    %2473 = vmatprep.subr.mxu0 0.0
    %2474 = vmatpush1.msra.mxu0 0.0
    %2475 = vmatprep.subr.mxu0 0.0
    %2476 = vmatpush1.msra.mxu0 0.0
    %2477 = vmatprep.subr.mxu0 0.0
    %2478 = vmatpush1.msra.mxu0 0.0
    %2479 = vmatprep.subr.mxu0 0.0
    %2480 = vmatpush1.msra.mxu0 0.0
    %2481 = vmatprep.subr.mxu0 0.0
    %2482 = vmatpush1.msra.mxu0 0.0
    %2483 = vmatprep.subr.mxu0 0.0
    %2484 = vmatpush1.msra.mxu0 0.0
    %2485 = vmatprep.subr.mxu0 0.0
    %2486 = vmatpush1.msra.mxu0 0.0
    %2487 = vmatprep.subr.mxu0 0.0
    %2488 = vmatpush1.msra.mxu0 0.0
    %2489 = vmatprep.subr.mxu0 0.0
    %2490 = vmatpush1.msra.mxu0 0.0
    %2491 = vmatprep.subr.mxu0 0.0
    %2492 = vmatpush1.msra.mxu0 0.0
    %2493 = vmatprep.subr.mxu0 0.0
    %2494 = vmatpush1.msra.mxu0 0.0
    %2495 = vmatprep.subr.mxu0 0.0
    %2496 = vmatpush1.msra.mxu0 0.0
    %2497 = vmatprep.subr.mxu0 0.0
    %2498 = vmatpush1.msra.mxu0 0.0
    %2499 = vmatprep.subr.mxu0 0.0
    %2500 = vmatpush1.msra.mxu0 0.0
    %2501 = vmatprep.subr.mxu0 0.0
    %2502 = vmatpush1.msra.mxu0 0.0
    %2503 = vmatprep.subr.mxu0 0.0
    %2504 = vmatpush1.msra.mxu0 0.0
    %2505 = vmatprep.subr.mxu0 0.0
    %2506 = vmatpush1.msra.mxu0 0.0
    %2507 = vmatprep.subr.mxu0 0.0
    %2508 = vmatpush1.msra.mxu0 0.0
    %2509 = vmatprep.subr.mxu0 0.0
    %2510 = vmatpush1.msra.mxu0 0.0
    %2511 = vmatprep.subr.mxu0 0.0
    %2512 = vmatpush1.msra.mxu0 0.0
    %2513 = vmatprep.subr.mxu0 0.0
    %2514 = vmatpush1.msra.mxu0 0.0
    %2515 = vmatprep.subr.mxu0 0.0
    %2516 = vmatpush1.msra.mxu0 0.0
    %2517 = vmatprep.subr.mxu0 0.0
    %2518 = vmatpush1.msra.mxu0 0.0
    %2519 = vmatprep.mubr.f32.mxu0 0.0
    %2520 = vmatmul.mubr.f32.gmra.mrb[0].mxu0 %v835
    %v2521 = vpop.f32.mrb[0].mxu0
    %v2522 = vadd.f32 0.0, %v2521
    %v2523 = vpop.f32.mrb[0].mxu0
    %v2524 = vadd.f32 0.0, %v2523
    %2525 = vdwg.mxu0
    %v2526 = vadd.f32 %v2439, %v2522
    %v2527 = vadd.f32 %v2440, %v2524
    %v2528 = vmul.f32 %v1842, %v925
    %v2529 = vmul.f32 %v1844, %v928
    %2532 = vrot.lane.b32.xlu0 %v2528, 111
    %v2533 = vpop.permute.xlu0 %2532
    %2534 = vrot.lane.b32.xlu0 %v2529, 111
    %v2535 = vpop.permute.xlu0 %2534
    %v2536 = vsel %vm58, %v2533, %v2535
    %v2537 = vsel %vm58, %v2535, %v943
    %v2538 = vsel %vm104, %v2536, 0
    %v2540 = vsel %vm104, %v2537, 0
    %2542 = vmatprep.subr.mxu0 %v2540
    %2543 = vmatpush1.msra.mxu0 %v2538
    %2544 = vmatprep.subr.mxu0 0.0
    %2545 = vmatpush1.msra.mxu0 0.0
    %2546 = vmatprep.subr.mxu0 0.0
    %2547 = vmatpush1.msra.mxu0 0.0
    %2548 = vmatprep.subr.mxu0 0.0
    %2549 = vmatpush1.msra.mxu0 0.0
    %2550 = vmatprep.subr.mxu0 0.0
    %2551 = vmatpush1.msra.mxu0 0.0
    %2552 = vmatprep.subr.mxu0 0.0
    %2553 = vmatpush1.msra.mxu0 0.0
    %2554 = vmatprep.subr.mxu0 0.0
    %2555 = vmatpush1.msra.mxu0 0.0
    %2556 = vmatprep.subr.mxu0 0.0
    %2557 = vmatpush1.msra.mxu0 0.0
    %2558 = vmatprep.subr.mxu0 0.0
    %2559 = vmatpush1.msra.mxu0 0.0
    %2560 = vmatprep.subr.mxu0 0.0
    %2561 = vmatpush1.msra.mxu0 0.0
    %2562 = vmatprep.subr.mxu0 0.0
    %2563 = vmatpush1.msra.mxu0 0.0
    %2564 = vmatprep.subr.mxu0 0.0
    %2565 = vmatpush1.msra.mxu0 0.0
    %2566 = vmatprep.subr.mxu0 0.0
    %2567 = vmatpush1.msra.mxu0 0.0
    %2568 = vmatprep.subr.mxu0 0.0
    %2569 = vmatpush1.msra.mxu0 0.0
    %2570 = vmatprep.subr.mxu0 0.0
    %2571 = vmatpush1.msra.mxu0 0.0
    %2572 = vmatprep.subr.mxu0 0.0
    %2573 = vmatpush1.msra.mxu0 0.0
    %2574 = vmatprep.subr.mxu0 0.0
    %2575 = vmatpush1.msra.mxu0 0.0
    %2576 = vmatprep.subr.mxu0 0.0
    %2577 = vmatpush1.msra.mxu0 0.0
    %2578 = vmatprep.subr.mxu0 0.0
    %2579 = vmatpush1.msra.mxu0 0.0
    %2580 = vmatprep.subr.mxu0 0.0
    %2581 = vmatpush1.msra.mxu0 0.0
    %2582 = vmatprep.subr.mxu0 0.0
    %2583 = vmatpush1.msra.mxu0 0.0
    %2584 = vmatprep.subr.mxu0 0.0
    %2585 = vmatpush1.msra.mxu0 0.0
    %2586 = vmatprep.subr.mxu0 0.0
    %2587 = vmatpush1.msra.mxu0 0.0
    %2588 = vmatprep.subr.mxu0 0.0
    %2589 = vmatpush1.msra.mxu0 0.0
    %2590 = vmatprep.subr.mxu0 0.0
    %2591 = vmatpush1.msra.mxu0 0.0
    %2592 = vmatprep.subr.mxu0 0.0
    %2593 = vmatpush1.msra.mxu0 0.0
    %2594 = vmatprep.subr.mxu0 0.0
    %2595 = vmatpush1.msra.mxu0 0.0
    %2596 = vmatprep.subr.mxu0 0.0
    %2597 = vmatpush1.msra.mxu0 0.0
    %2598 = vmatprep.subr.mxu0 0.0
    %2599 = vmatpush1.msra.mxu0 0.0
    %2600 = vmatprep.subr.mxu0 0.0
    %2601 = vmatpush1.msra.mxu0 0.0
    %2602 = vmatprep.subr.mxu0 0.0
    %2603 = vmatpush1.msra.mxu0 0.0
    %2604 = vmatprep.subr.mxu0 0.0
    %2605 = vmatpush1.msra.mxu0 0.0
    %2606 = vmatprep.mubr.f32.mxu0 0.0
    %2607 = vmatmul.mubr.f32.gmra.mrb[0].mxu0 %v947
    %v2608 = vpop.f32.mrb[0].mxu0
    %v2609 = vadd.f32 0.0, %v2608
    %v2610 = vpop.f32.mrb[0].mxu0
    %v2611 = vadd.f32 0.0, %v2610
    %2612 = vdwg.mxu0
    %v2613 = vadd.f32 %v2526, %v2609
    %v2614 = vadd.f32 %v2527, %v2611
    %v2615 = vadd.f32 %v2613, %v2614
    %2616 = vadd.xlane.f32.xlu0 %v2615
    %v2617 = vpop.xlane.xlu0 %2616
    %v2618 = vmul.f32 %v2617, 0.00390625
    %v2619 = vsub.f32 %v2613, %v2618
    %v2620 = vsub.f32 %v2614, %v2618
    %v2621 = vmul.f32 %v2619, %v2619
    %v2622 = vmul.f32 %v2620, %v2620
    %v2623 = vadd.f32 %v2621, %v2622
    %2624 = vadd.xlane.f32.xlu0 %v2623
    %v2625 = vpop.xlane.xlu0 %2624
    %v2626 = vmul.f32 %v2625, 0.00390625
    %v2627 = vadd.f32 %v2626, 1e-05
    %v2628 = vrsqrt.pop %v2627
    %v2629 = vmul.f32 %v2619, %v2628
    %v2630 = vmul.f32 %v2620, %v2628
    %v2631 = vmax.f32 %v2629, 0.0
    %v2632 = vmax.f32 %v2630, 0.0
    %v2633 = vmul.f32 %v2631, %v59
    %v2634 = vmul.f32 %v2632, %v57
    %v2635 = vmul.f32 %v2631, %v81
    %v2636 = vmul.f32 %v2632, %v79
    %2639 = vrot.lane.b32.xlu0 %v2635, 16
    %v2640 = vpop.permute.xlu0 %2639
    %2641 = vrot.lane.b32.xlu0 %v2636, 16
    %v2642 = vpop.permute.xlu0 %2641
    %v2643 = vsel %vm97, %v92, %v2640
    %v2644 = vsel %vm97, %v2640, %v2642
    %2647 = vmatprep.subr.mxu0 %v2644
    %2648 = vmatpush1.msra.mxu0 %v2643
    %2649 = vmatprep.subr.mxu0 0.0
    %2650 = vmatpush1.msra.mxu0 0.0
    %2651 = vmatprep.subr.mxu0 0.0
    %2652 = vmatpush1.msra.mxu0 0.0
    %2653 = vmatprep.subr.mxu0 0.0
    %2654 = vmatpush1.msra.mxu0 0.0
    %2655 = vmatprep.subr.mxu0 0.0
    %2656 = vmatpush1.msra.mxu0 0.0
    %2657 = vmatprep.subr.mxu0 0.0
    %2658 = vmatpush1.msra.mxu0 0.0
    %2659 = vmatprep.subr.mxu0 0.0
    %2660 = vmatpush1.msra.mxu0 0.0
    %2661 = vmatprep.subr.mxu0 0.0
    %2662 = vmatpush1.msra.mxu0 0.0
    %2663 = vmatprep.subr.mxu0 0.0
    %2664 = vmatpush1.msra.mxu0 0.0
    %2665 = vmatprep.subr.mxu0 0.0
    %2666 = vmatpush1.msra.mxu0 0.0
    %2667 = vmatprep.subr.mxu0 0.0
    %2668 = vmatpush1.msra.mxu0 0.0
    %2669 = vmatprep.subr.mxu0 0.0
    %2670 = vmatpush1.msra.mxu0 0.0
    %2671 = vmatprep.subr.mxu0 0.0
    %2672 = vmatpush1.msra.mxu0 0.0
    %2673 = vmatprep.subr.mxu0 0.0
    %2674 = vmatpush1.msra.mxu0 0.0
    %2675 = vmatprep.subr.mxu0 0.0
    %2676 = vmatpush1.msra.mxu0 0.0
    %2677 = vmatprep.subr.mxu0 0.0
    %2678 = vmatpush1.msra.mxu0 0.0
    %2679 = vmatprep.subr.mxu0 0.0
    %2680 = vmatpush1.msra.mxu0 0.0
    %2681 = vmatprep.subr.mxu0 0.0
    %2682 = vmatpush1.msra.mxu0 0.0
    %2683 = vmatprep.subr.mxu0 0.0
    %2684 = vmatpush1.msra.mxu0 0.0
    %2685 = vmatprep.subr.mxu0 0.0
    %2686 = vmatpush1.msra.mxu0 0.0
    %2687 = vmatprep.subr.mxu0 0.0
    %2688 = vmatpush1.msra.mxu0 0.0
    %2689 = vmatprep.subr.mxu0 0.0
    %2690 = vmatpush1.msra.mxu0 0.0
    %2691 = vmatprep.subr.mxu0 0.0
    %2692 = vmatpush1.msra.mxu0 0.0
    %2693 = vmatprep.subr.mxu0 0.0
    %2694 = vmatpush1.msra.mxu0 0.0
    %2695 = vmatprep.subr.mxu0 0.0
    %2696 = vmatpush1.msra.mxu0 0.0
    %2697 = vmatprep.subr.mxu0 0.0
    %2698 = vmatpush1.msra.mxu0 0.0
    %2699 = vmatprep.subr.mxu0 0.0
    %2700 = vmatpush1.msra.mxu0 0.0
    %2701 = vmatprep.subr.mxu0 0.0
    %2702 = vmatpush1.msra.mxu0 0.0
    %2703 = vmatprep.subr.mxu0 0.0
    %2704 = vmatpush1.msra.mxu0 0.0
    %2705 = vmatprep.subr.mxu0 0.0
    %2706 = vmatpush1.msra.mxu0 0.0
    %2707 = vmatprep.subr.mxu0 0.0
    %2708 = vmatpush1.msra.mxu0 0.0
    %2709 = vmatprep.subr.mxu0 0.0
    %2710 = vmatpush1.msra.mxu0 0.0
    %2711 = vmatprep.mubr.f32.mxu0 0.0
    %2712 = vmatmul.mubr.f32.gmra.mrb[0].mxu0 %v1060
    %v2713 = vpop.f32.mrb[0].mxu0
    %v2714 = vadd.f32 0.0, %v2713
    %v2715 = vpop.f32.mrb[0].mxu0
    %v2716 = vadd.f32 0.0, %v2715
    %2717 = vdwg.mxu0
    %2720 = vrot.lane.b32.xlu0 %v2633, 17
    %v2721 = vpop.permute.xlu0 %2720
    %2722 = vrot.lane.b32.xlu0 %v2634, 17
    %v2723 = vpop.permute.xlu0 %2722
    %v2724 = vsel %vm189, %v184, %v2721
    %v2725 = vsel %vm189, %v2721, %v2723
    %2728 = vmatprep.subr.mxu0 %v2725
    %2729 = vmatpush1.msra.mxu0 %v2724
    %2730 = vmatprep.subr.mxu0 0.0
    %2731 = vmatpush1.msra.mxu0 0.0
    %2732 = vmatprep.subr.mxu0 0.0
    %2733 = vmatpush1.msra.mxu0 0.0
    %2734 = vmatprep.subr.mxu0 0.0
    %2735 = vmatpush1.msra.mxu0 0.0
    %2736 = vmatprep.subr.mxu0 0.0
    %2737 = vmatpush1.msra.mxu0 0.0
    %2738 = vmatprep.subr.mxu0 0.0
    %2739 = vmatpush1.msra.mxu0 0.0
    %2740 = vmatprep.subr.mxu0 0.0
    %2741 = vmatpush1.msra.mxu0 0.0
    %2742 = vmatprep.subr.mxu0 0.0
    %2743 = vmatpush1.msra.mxu0 0.0
    %2744 = vmatprep.subr.mxu0 0.0
    %2745 = vmatpush1.msra.mxu0 0.0
    %2746 = vmatprep.subr.mxu0 0.0
    %2747 = vmatpush1.msra.mxu0 0.0
    %2748 = vmatprep.subr.mxu0 0.0
    %2749 = vmatpush1.msra.mxu0 0.0
    %2750 = vmatprep.subr.mxu0 0.0
    %2751 = vmatpush1.msra.mxu0 0.0
    %2752 = vmatprep.subr.mxu0 0.0
    %2753 = vmatpush1.msra.mxu0 0.0
    %2754 = vmatprep.subr.mxu0 0.0
    %2755 = vmatpush1.msra.mxu0 0.0
    %2756 = vmatprep.subr.mxu0 0.0
    %2757 = vmatpush1.msra.mxu0 0.0
    %2758 = vmatprep.subr.mxu0 0.0
    %2759 = vmatpush1.msra.mxu0 0.0
    %2760 = vmatprep.subr.mxu0 0.0
    %2761 = vmatpush1.msra.mxu0 0.0
    %2762 = vmatprep.subr.mxu0 0.0
    %2763 = vmatpush1.msra.mxu0 0.0
    %2764 = vmatprep.subr.mxu0 0.0
    %2765 = vmatpush1.msra.mxu0 0.0
    %2766 = vmatprep.subr.mxu0 0.0
    %2767 = vmatpush1.msra.mxu0 0.0
    %2768 = vmatprep.subr.mxu0 0.0
    %2769 = vmatpush1.msra.mxu0 0.0
    %2770 = vmatprep.subr.mxu0 0.0
    %2771 = vmatpush1.msra.mxu0 0.0
    %2772 = vmatprep.subr.mxu0 0.0
    %2773 = vmatpush1.msra.mxu0 0.0
    %2774 = vmatprep.subr.mxu0 0.0
    %2775 = vmatpush1.msra.mxu0 0.0
    %2776 = vmatprep.subr.mxu0 0.0
    %2777 = vmatpush1.msra.mxu0 0.0
    %2778 = vmatprep.subr.mxu0 0.0
    %2779 = vmatpush1.msra.mxu0 0.0
    %2780 = vmatprep.subr.mxu0 0.0
    %2781 = vmatpush1.msra.mxu0 0.0
    %2782 = vmatprep.subr.mxu0 0.0
    %2783 = vmatpush1.msra.mxu0 0.0
    %2784 = vmatprep.subr.mxu0 0.0
    %2785 = vmatpush1.msra.mxu0 0.0
    %2786 = vmatprep.subr.mxu0 0.0
    %2787 = vmatpush1.msra.mxu0 0.0
    %2788 = vmatprep.subr.mxu0 0.0
    %2789 = vmatpush1.msra.mxu0 0.0
    %2790 = vmatprep.subr.mxu0 0.0
    %2791 = vmatpush1.msra.mxu0 0.0
    %2792 = vmatprep.mubr.f32.mxu0 0.0
    %2793 = vmatmul.mubr.f32.gmra.mrb[0].mxu0 %v1144
    %v2794 = vpop.f32.mrb[0].mxu0
    %v2795 = vadd.f32 %v2714, %v2794
    %v2796 = vpop.f32.mrb[0].mxu0
    %v2797 = vadd.f32 %v2716, %v2796
    %2798 = vdwg.mxu0
    %v2799 = vmul.f32 %v2631, %v285
    %v2800 = vmul.f32 %v2632, %v283
    %2803 = vrot.lane.b32.xlu0 %v2799, 15
    %v2804 = vpop.permute.xlu0 %2803
    %2805 = vrot.lane.b32.xlu0 %v2800, 15
    %v2806 = vpop.permute.xlu0 %2805
    %v2807 = vsel %vm301, %v296, %v2804
    %v2808 = vsel %vm301, %v2804, %v2806
    %2811 = vmatprep.subr.mxu0 %v2808
    %2812 = vmatpush1.msra.mxu0 %v2807
    %2813 = vmatprep.subr.mxu0 0.0
    %2814 = vmatpush1.msra.mxu0 0.0
    %2815 = vmatprep.subr.mxu0 0.0
    %2816 = vmatpush1.msra.mxu0 0.0
    %2817 = vmatprep.subr.mxu0 0.0
    %2818 = vmatpush1.msra.mxu0 0.0
    %2819 = vmatprep.subr.mxu0 0.0
    %2820 = vmatpush1.msra.mxu0 0.0
    %2821 = vmatprep.subr.mxu0 0.0
    %2822 = vmatpush1.msra.mxu0 0.0
    %2823 = vmatprep.subr.mxu0 0.0
    %2824 = vmatpush1.msra.mxu0 0.0
    %2825 = vmatprep.subr.mxu0 0.0
    %2826 = vmatpush1.msra.mxu0 0.0
    %2827 = vmatprep.subr.mxu0 0.0
    %2828 = vmatpush1.msra.mxu0 0.0
    %2829 = vmatprep.subr.mxu0 0.0
    %2830 = vmatpush1.msra.mxu0 0.0
    %2831 = vmatprep.subr.mxu0 0.0
    %2832 = vmatpush1.msra.mxu0 0.0
    %2833 = vmatprep.subr.mxu0 0.0
    %2834 = vmatpush1.msra.mxu0 0.0
    %2835 = vmatprep.subr.mxu0 0.0
    %2836 = vmatpush1.msra.mxu0 0.0
    %2837 = vmatprep.subr.mxu0 0.0
    %2838 = vmatpush1.msra.mxu0 0.0
    %2839 = vmatprep.subr.mxu0 0.0
    %2840 = vmatpush1.msra.mxu0 0.0
    %2841 = vmatprep.subr.mxu0 0.0
    %2842 = vmatpush1.msra.mxu0 0.0
    %2843 = vmatprep.subr.mxu0 0.0
    %2844 = vmatpush1.msra.mxu0 0.0
    %2845 = vmatprep.subr.mxu0 0.0
    %2846 = vmatpush1.msra.mxu0 0.0
    %2847 = vmatprep.subr.mxu0 0.0
    %2848 = vmatpush1.msra.mxu0 0.0
    %2849 = vmatprep.subr.mxu0 0.0
    %2850 = vmatpush1.msra.mxu0 0.0
    %2851 = vmatprep.subr.mxu0 0.0
    %2852 = vmatpush1.msra.mxu0 0.0
    %2853 = vmatprep.subr.mxu0 0.0
    %2854 = vmatpush1.msra.mxu0 0.0
    %2855 = vmatprep.subr.mxu0 0.0
    %2856 = vmatpush1.msra.mxu0 0.0
    %2857 = vmatprep.subr.mxu0 0.0
    %2858 = vmatpush1.msra.mxu0 0.0
    %2859 = vmatprep.subr.mxu0 0.0
    %2860 = vmatpush1.msra.mxu0 0.0
    %2861 = vmatprep.subr.mxu0 0.0
    %2862 = vmatpush1.msra.mxu0 0.0
    %2863 = vmatprep.subr.mxu0 0.0
    %2864 = vmatpush1.msra.mxu0 0.0
    %2865 = vmatprep.subr.mxu0 0.0
    %2866 = vmatpush1.msra.mxu0 0.0
    %2867 = vmatprep.subr.mxu0 0.0
    %2868 = vmatpush1.msra.mxu0 0.0
    %2869 = vmatprep.subr.mxu0 0.0
    %2870 = vmatpush1.msra.mxu0 0.0
    %2871 = vmatprep.subr.mxu0 0.0
    %2872 = vmatpush1.msra.mxu0 0.0
    %2873 = vmatprep.subr.mxu0 0.0
    %2874 = vmatpush1.msra.mxu0 0.0
    %2875 = vmatprep.mubr.f32.mxu0 0.0
    %2876 = vmatmul.mubr.f32.gmra.mrb[0].mxu0 %v1230
    %v2877 = vpop.f32.mrb[0].mxu0
    %v2878 = vadd.f32 0.0, %v2877
    %v2879 = vpop.f32.mrb[0].mxu0
    %v2880 = vadd.f32 0.0, %v2879
    %2881 = vdwg.mxu0
    %v2882 = vadd.f32 %v2795, %v2878
    %v2883 = vadd.f32 %v2797, %v2880
    %v2884 = vmul.f32 %v2631, %v399
    %v2885 = vmul.f32 %v2632, %v397
    %2888 = vrot.lane.b32.xlu0 %v2884, 1
    %v2889 = vpop.permute.xlu0 %2888
    %2890 = vrot.lane.b32.xlu0 %v2885, 1
    %v2891 = vpop.permute.xlu0 %2890
    %v2892 = vsel %vm415, %v410, %v2889
    %v2893 = vsel %vm415, %v2889, %v2891
    %2896 = vmatprep.subr.mxu0 %v2893
    %2897 = vmatpush1.msra.mxu0 %v2892
    %2898 = vmatprep.subr.mxu0 0.0
    %2899 = vmatpush1.msra.mxu0 0.0
    %2900 = vmatprep.subr.mxu0 0.0
    %2901 = vmatpush1.msra.mxu0 0.0
    %2902 = vmatprep.subr.mxu0 0.0
    %2903 = vmatpush1.msra.mxu0 0.0
    %2904 = vmatprep.subr.mxu0 0.0
    %2905 = vmatpush1.msra.mxu0 0.0
    %2906 = vmatprep.subr.mxu0 0.0
    %2907 = vmatpush1.msra.mxu0 0.0
    %2908 = vmatprep.subr.mxu0 0.0
    %2909 = vmatpush1.msra.mxu0 0.0
    %2910 = vmatprep.subr.mxu0 0.0
    %2911 = vmatpush1.msra.mxu0 0.0
    %2912 = vmatprep.subr.mxu0 0.0
    %2913 = vmatpush1.msra.mxu0 0.0
    %2914 = vmatprep.subr.mxu0 0.0
    %2915 = vmatpush1.msra.mxu0 0.0
    %2916 = vmatprep.subr.mxu0 0.0
    %2917 = vmatpush1.msra.mxu0 0.0
    %2918 = vmatprep.subr.mxu0 0.0
    %2919 = vmatpush1.msra.mxu0 0.0
    %2920 = vmatprep.subr.mxu0 0.0
    %2921 = vmatpush1.msra.mxu0 0.0
    %2922 = vmatprep.subr.mxu0 0.0
    %2923 = vmatpush1.msra.mxu0 0.0
    %2924 = vmatprep.subr.mxu0 0.0
    %2925 = vmatpush1.msra.mxu0 0.0
    %2926 = vmatprep.subr.mxu0 0.0
    %2927 = vmatpush1.msra.mxu0 0.0
    %2928 = vmatprep.subr.mxu0 0.0
    %2929 = vmatpush1.msra.mxu0 0.0
    %2930 = vmatprep.subr.mxu0 0.0
    %2931 = vmatpush1.msra.mxu0 0.0
    %2932 = vmatprep.subr.mxu0 0.0
    %2933 = vmatpush1.msra.mxu0 0.0
    %2934 = vmatprep.subr.mxu0 0.0
    %2935 = vmatpush1.msra.mxu0 0.0
    %2936 = vmatprep.subr.mxu0 0.0
    %2937 = vmatpush1.msra.mxu0 0.0
    %2938 = vmatprep.subr.mxu0 0.0
    %2939 = vmatpush1.msra.mxu0 0.0
    %2940 = vmatprep.subr.mxu0 0.0
    %2941 = vmatpush1.msra.mxu0 0.0
    %2942 = vmatprep.subr.mxu0 0.0
    %2943 = vmatpush1.msra.mxu0 0.0
    %2944 = vmatprep.subr.mxu0 0.0
    %2945 = vmatpush1.msra.mxu0 0.0
    %2946 = vmatprep.subr.mxu0 0.0
    %2947 = vmatpush1.msra.mxu0 0.0
    %2948 = vmatprep.subr.mxu0 0.0
    %2949 = vmatpush1.msra.mxu0 0.0
    %2950 = vmatprep.subr.mxu0 0.0
    %2951 = vmatpush1.msra.mxu0 0.0
    %2952 = vmatprep.subr.mxu0 0.0
    %2953 = vmatpush1.msra.mxu0 0.0
    %2954 = vmatprep.subr.mxu0 0.0
    %2955 = vmatpush1.msra.mxu0 0.0
    %2956 = vmatprep.subr.mxu0 0.0
    %2957 = vmatpush1.msra.mxu0 0.0
    %2958 = vmatprep.subr.mxu0 0.0
    %2959 = vmatpush1.msra.mxu0 0.0
    %2960 = vmatprep.mubr.f32.mxu0 0.0
    %2961 = vmatmul.mubr.f32.gmra.mrb[0].mxu0 %v1318
    %v2962 = vpop.f32.mrb[0].mxu0
    %v2963 = vadd.f32 0.0, %v2962
    %v2964 = vpop.f32.mrb[0].mxu0
    %v2965 = vadd.f32 0.0, %v2964
    %2966 = vdwg.mxu0
    %v2967 = vadd.f32 %v2882, %v2963
    %v2968 = vadd.f32 %v2883, %v2965
    %2969 = vmatprep.subr.mxu0 %v2632
    %2970 = vmatpush1.msra.mxu0 %v2631
    %2971 = vmatprep.subr.mxu0 0.0
    %2972 = vmatpush1.msra.mxu0 0.0
    %2973 = vmatprep.subr.mxu0 0.0
    %2974 = vmatpush1.msra.mxu0 0.0
    %2975 = vmatprep.subr.mxu0 0.0
    %2976 = vmatpush1.msra.mxu0 0.0
    %2977 = vmatprep.subr.mxu0 0.0
    %2978 = vmatpush1.msra.mxu0 0.0
    %2979 = vmatprep.subr.mxu0 0.0
    %2980 = vmatpush1.msra.mxu0 0.0
    %2981 = vmatprep.subr.mxu0 0.0
    %2982 = vmatpush1.msra.mxu0 0.0
    %2983 = vmatprep.subr.mxu0 0.0
    %2984 = vmatpush1.msra.mxu0 0.0
    %2985 = vmatprep.subr.mxu0 0.0
    %2986 = vmatpush1.msra.mxu0 0.0
    %2987 = vmatprep.subr.mxu0 0.0
    %2988 = vmatpush1.msra.mxu0 0.0
    %2989 = vmatprep.subr.mxu0 0.0
    %2990 = vmatpush1.msra.mxu0 0.0
    %2991 = vmatprep.subr.mxu0 0.0
    %2992 = vmatpush1.msra.mxu0 0.0
    %2993 = vmatprep.subr.mxu0 0.0
    %2994 = vmatpush1.msra.mxu0 0.0
    %2995 = vmatprep.subr.mxu0 0.0
    %2996 = vmatpush1.msra.mxu0 0.0
    %2997 = vmatprep.subr.mxu0 0.0
    %2998 = vmatpush1.msra.mxu0 0.0
    %2999 = vmatprep.subr.mxu0 0.0
    %3000 = vmatpush1.msra.mxu0 0.0
    %3001 = vmatprep.subr.mxu0 0.0
    %3002 = vmatpush1.msra.mxu0 0.0
    %3003 = vmatprep.subr.mxu0 0.0
    %3004 = vmatpush1.msra.mxu0 0.0
    %3005 = vmatprep.subr.mxu0 0.0
    %3006 = vmatpush1.msra.mxu0 0.0
    %3007 = vmatprep.subr.mxu0 0.0
    %3008 = vmatpush1.msra.mxu0 0.0
    %3009 = vmatprep.subr.mxu0 0.0
    %3010 = vmatpush1.msra.mxu0 0.0
    %3011 = vmatprep.subr.mxu0 0.0
    %3012 = vmatpush1.msra.mxu0 0.0
    %3013 = vmatprep.subr.mxu0 0.0
    %3014 = vmatpush1.msra.mxu0 0.0
    %3015 = vmatprep.subr.mxu0 0.0
    %3016 = vmatpush1.msra.mxu0 0.0
    %3017 = vmatprep.subr.mxu0 0.0
    %3018 = vmatpush1.msra.mxu0 0.0
    %3019 = vmatprep.subr.mxu0 0.0
    %3020 = vmatpush1.msra.mxu0 0.0
    %3021 = vmatprep.subr.mxu0 0.0
    %3022 = vmatpush1.msra.mxu0 0.0
    %3023 = vmatprep.subr.mxu0 0.0
    %3024 = vmatpush1.msra.mxu0 0.0
    %3025 = vmatprep.subr.mxu0 0.0
    %3026 = vmatpush1.msra.mxu0 0.0
    %3027 = vmatprep.subr.mxu0 0.0
    %3028 = vmatpush1.msra.mxu0 0.0
    %3029 = vmatprep.subr.mxu0 0.0
    %3030 = vmatpush1.msra.mxu0 0.0
    %3031 = vmatprep.subr.mxu0 0.0
    %3032 = vmatpush1.msra.mxu0 0.0
    %3033 = vmatprep.mubr.f32.mxu0 0.0
    %3034 = vmatmul.mubr.f32.gmra.mrb[0].mxu0 %v1394
    %v3035 = vpop.f32.mrb[0].mxu0
    %v3036 = vadd.f32 0.0, %v3035
    %v3037 = vpop.f32.mrb[0].mxu0
    %v3038 = vadd.f32 0.0, %v3037
    %3039 = vdwg.mxu0
    %v3040 = vadd.f32 %v2967, %v3036
    %v3041 = vadd.f32 %v2968, %v3038
    %v3042 = vmul.f32 %v2631, %v589
    %v3043 = vmul.f32 %v2632, %v592
    %3046 = vrot.lane.b32.xlu0 %v3042, 127
    %v3047 = vpop.permute.xlu0 %3046
    %3048 = vrot.lane.b32.xlu0 %v3043, 127
    %v3049 = vpop.permute.xlu0 %3048
    %v3050 = vsel %vm398, %v3047, %v3049
    %v3051 = vsel %vm398, %v3049, %v607
    %3054 = vmatprep.subr.mxu0 %v3051
    %3055 = vmatpush1.msra.mxu0 %v3050
    %3056 = vmatprep.subr.mxu0 0.0
    %3057 = vmatpush1.msra.mxu0 0.0
    %3058 = vmatprep.subr.mxu0 0.0
    %3059 = vmatpush1.msra.mxu0 0.0
    %3060 = vmatprep.subr.mxu0 0.0
    %3061 = vmatpush1.msra.mxu0 0.0
    %3062 = vmatprep.subr.mxu0 0.0
    %3063 = vmatpush1.msra.mxu0 0.0
    %3064 = vmatprep.subr.mxu0 0.0
    %3065 = vmatpush1.msra.mxu0 0.0
    %3066 = vmatprep.subr.mxu0 0.0
    %3067 = vmatpush1.msra.mxu0 0.0
    %3068 = vmatprep.subr.mxu0 0.0
    %3069 = vmatpush1.msra.mxu0 0.0
    %3070 = vmatprep.subr.mxu0 0.0
    %3071 = vmatpush1.msra.mxu0 0.0
    %3072 = vmatprep.subr.mxu0 0.0
    %3073 = vmatpush1.msra.mxu0 0.0
    %3074 = vmatprep.subr.mxu0 0.0
    %3075 = vmatpush1.msra.mxu0 0.0
    %3076 = vmatprep.subr.mxu0 0.0
    %3077 = vmatpush1.msra.mxu0 0.0
    %3078 = vmatprep.subr.mxu0 0.0
    %3079 = vmatpush1.msra.mxu0 0.0
    %3080 = vmatprep.subr.mxu0 0.0
    %3081 = vmatpush1.msra.mxu0 0.0
    %3082 = vmatprep.subr.mxu0 0.0
    %3083 = vmatpush1.msra.mxu0 0.0
    %3084 = vmatprep.subr.mxu0 0.0
    %3085 = vmatpush1.msra.mxu0 0.0
    %3086 = vmatprep.subr.mxu0 0.0
    %3087 = vmatpush1.msra.mxu0 0.0
    %3088 = vmatprep.subr.mxu0 0.0
    %3089 = vmatpush1.msra.mxu0 0.0
    %3090 = vmatprep.subr.mxu0 0.0
    %3091 = vmatpush1.msra.mxu0 0.0
    %3092 = vmatprep.subr.mxu0 0.0
    %3093 = vmatpush1.msra.mxu0 0.0
    %3094 = vmatprep.subr.mxu0 0.0
    %3095 = vmatpush1.msra.mxu0 0.0
    %3096 = vmatprep.subr.mxu0 0.0
    %3097 = vmatpush1.msra.mxu0 0.0
    %3098 = vmatprep.subr.mxu0 0.0
    %3099 = vmatpush1.msra.mxu0 0.0
    %3100 = vmatprep.subr.mxu0 0.0
    %3101 = vmatpush1.msra.mxu0 0.0
    %3102 = vmatprep.subr.mxu0 0.0
    %3103 = vmatpush1.msra.mxu0 0.0
    %3104 = vmatprep.subr.mxu0 0.0
    %3105 = vmatpush1.msra.mxu0 0.0
    %3106 = vmatprep.subr.mxu0 0.0
    %3107 = vmatpush1.msra.mxu0 0.0
    %3108 = vmatprep.subr.mxu0 0.0
    %3109 = vmatpush1.msra.mxu0 0.0
    %3110 = vmatprep.subr.mxu0 0.0
    %3111 = vmatpush1.msra.mxu0 0.0
    %3112 = vmatprep.subr.mxu0 0.0
    %3113 = vmatpush1.msra.mxu0 0.0
    %3114 = vmatprep.subr.mxu0 0.0
    %3115 = vmatpush1.msra.mxu0 0.0
    %3116 = vmatprep.subr.mxu0 0.0
    %3117 = vmatpush1.msra.mxu0 0.0
    %3118 = vmatprep.mubr.f32.mxu0 0.0
    %3119 = vmatmul.mubr.f32.gmra.mrb[0].mxu0 %v1482
    %v3120 = vpop.f32.mrb[0].mxu0
    %v3121 = vadd.f32 0.0, %v3120
    %v3122 = vpop.f32.mrb[0].mxu0
    %v3123 = vadd.f32 0.0, %v3122
    %3124 = vdwg.mxu0
    %v3125 = vadd.f32 %v3040, %v3121
    %v3126 = vadd.f32 %v3041, %v3123
    %v3127 = vmul.f32 %v2631, %v701
    %v3128 = vmul.f32 %v2632, %v704
    %3131 = vrot.lane.b32.xlu0 %v3127, 113
    %v3132 = vpop.permute.xlu0 %3131
    %3133 = vrot.lane.b32.xlu0 %v3128, 113
    %v3134 = vpop.permute.xlu0 %3133
    %v3135 = vsel %vm284, %v3132, %v3134
    %v3136 = vsel %vm284, %v3134, %v719
    %3139 = vmatprep.subr.mxu0 %v3136
    %3140 = vmatpush1.msra.mxu0 %v3135
    %3141 = vmatprep.subr.mxu0 0.0
    %3142 = vmatpush1.msra.mxu0 0.0
    %3143 = vmatprep.subr.mxu0 0.0
    %3144 = vmatpush1.msra.mxu0 0.0
    %3145 = vmatprep.subr.mxu0 0.0
    %3146 = vmatpush1.msra.mxu0 0.0
    %3147 = vmatprep.subr.mxu0 0.0
    %3148 = vmatpush1.msra.mxu0 0.0
    %3149 = vmatprep.subr.mxu0 0.0
    %3150 = vmatpush1.msra.mxu0 0.0
    %3151 = vmatprep.subr.mxu0 0.0
    %3152 = vmatpush1.msra.mxu0 0.0
    %3153 = vmatprep.subr.mxu0 0.0
    %3154 = vmatpush1.msra.mxu0 0.0
    %3155 = vmatprep.subr.mxu0 0.0
    %3156 = vmatpush1.msra.mxu0 0.0
    %3157 = vmatprep.subr.mxu0 0.0
    %3158 = vmatpush1.msra.mxu0 0.0
    %3159 = vmatprep.subr.mxu0 0.0
    %3160 = vmatpush1.msra.mxu0 0.0
    %3161 = vmatprep.subr.mxu0 0.0
    %3162 = vmatpush1.msra.mxu0 0.0
    %3163 = vmatprep.subr.mxu0 0.0
    %3164 = vmatpush1.msra.mxu0 0.0
    %3165 = vmatprep.subr.mxu0 0.0
    %3166 = vmatpush1.msra.mxu0 0.0
    %3167 = vmatprep.subr.mxu0 0.0
    %3168 = vmatpush1.msra.mxu0 0.0
    %3169 = vmatprep.subr.mxu0 0.0
    %3170 = vmatpush1.msra.mxu0 0.0
    %3171 = vmatprep.subr.mxu0 0.0
    %3172 = vmatpush1.msra.mxu0 0.0
    %3173 = vmatprep.subr.mxu0 0.0
    %3174 = vmatpush1.msra.mxu0 0.0
    %3175 = vmatprep.subr.mxu0 0.0
    %3176 = vmatpush1.msra.mxu0 0.0
    %3177 = vmatprep.subr.mxu0 0.0
    %3178 = vmatpush1.msra.mxu0 0.0
    %3179 = vmatprep.subr.mxu0 0.0
    %3180 = vmatpush1.msra.mxu0 0.0
    %3181 = vmatprep.subr.mxu0 0.0
    %3182 = vmatpush1.msra.mxu0 0.0
    %3183 = vmatprep.subr.mxu0 0.0
    %3184 = vmatpush1.msra.mxu0 0.0
    %3185 = vmatprep.subr.mxu0 0.0
    %3186 = vmatpush1.msra.mxu0 0.0
    %3187 = vmatprep.subr.mxu0 0.0
    %3188 = vmatpush1.msra.mxu0 0.0
    %3189 = vmatprep.subr.mxu0 0.0
    %3190 = vmatpush1.msra.mxu0 0.0
    %3191 = vmatprep.subr.mxu0 0.0
    %3192 = vmatpush1.msra.mxu0 0.0
    %3193 = vmatprep.subr.mxu0 0.0
    %3194 = vmatpush1.msra.mxu0 0.0
    %3195 = vmatprep.subr.mxu0 0.0
    %3196 = vmatpush1.msra.mxu0 0.0
    %3197 = vmatprep.subr.mxu0 0.0
    %3198 = vmatpush1.msra.mxu0 0.0
    %3199 = vmatprep.subr.mxu0 0.0
    %3200 = vmatpush1.msra.mxu0 0.0
    %3201 = vmatprep.subr.mxu0 0.0
    %3202 = vmatpush1.msra.mxu0 0.0
    %3203 = vmatprep.mubr.f32.mxu0 0.0
    %3204 = vmatmul.mubr.f32.gmra.mrb[0].mxu0 %v1570
    %v3205 = vpop.f32.mrb[0].mxu0
    %v3206 = vadd.f32 0.0, %v3205
    %v3207 = vpop.f32.mrb[0].mxu0
    %v3208 = vadd.f32 0.0, %v3207
    %3209 = vdwg.mxu0
    %v3210 = vadd.f32 %v3125, %v3206
    %v3211 = vadd.f32 %v3126, %v3208
    %v3212 = vmul.f32 %v2631, %v813
    %v3213 = vmul.f32 %v2632, %v816
    %3216 = vrot.lane.b32.xlu0 %v3212, 112
    %v3217 = vpop.permute.xlu0 %3216
    %3218 = vrot.lane.b32.xlu0 %v3213, 112
    %v3219 = vpop.permute.xlu0 %3218
    %v3220 = vsel %vm80, %v3217, %v3219
    %v3221 = vsel %vm80, %v3219, %v831
    %3224 = vmatprep.subr.mxu0 %v3221
    %3225 = vmatpush1.msra.mxu0 %v3220
    %3226 = vmatprep.subr.mxu0 0.0
    %3227 = vmatpush1.msra.mxu0 0.0
    %3228 = vmatprep.subr.mxu0 0.0
    %3229 = vmatpush1.msra.mxu0 0.0
    %3230 = vmatprep.subr.mxu0 0.0
    %3231 = vmatpush1.msra.mxu0 0.0
    %3232 = vmatprep.subr.mxu0 0.0
    %3233 = vmatpush1.msra.mxu0 0.0
    %3234 = vmatprep.subr.mxu0 0.0
    %3235 = vmatpush1.msra.mxu0 0.0
    %3236 = vmatprep.subr.mxu0 0.0
    %3237 = vmatpush1.msra.mxu0 0.0
    %3238 = vmatprep.subr.mxu0 0.0
    %3239 = vmatpush1.msra.mxu0 0.0
    %3240 = vmatprep.subr.mxu0 0.0
    %3241 = vmatpush1.msra.mxu0 0.0
    %3242 = vmatprep.subr.mxu0 0.0
    %3243 = vmatpush1.msra.mxu0 0.0
    %3244 = vmatprep.subr.mxu0 0.0
    %3245 = vmatpush1.msra.mxu0 0.0
    %3246 = vmatprep.subr.mxu0 0.0
    %3247 = vmatpush1.msra.mxu0 0.0
    %3248 = vmatprep.subr.mxu0 0.0
    %3249 = vmatpush1.msra.mxu0 0.0
    %3250 = vmatprep.subr.mxu0 0.0
    %3251 = vmatpush1.msra.mxu0 0.0
    %3252 = vmatprep.subr.mxu0 0.0
    %3253 = vmatpush1.msra.mxu0 0.0
    %3254 = vmatprep.subr.mxu0 0.0
    %3255 = vmatpush1.msra.mxu0 0.0
    %3256 = vmatprep.subr.mxu0 0.0
    %3257 = vmatpush1.msra.mxu0 0.0
    %3258 = vmatprep.subr.mxu0 0.0
    %3259 = vmatpush1.msra.mxu0 0.0
    %3260 = vmatprep.subr.mxu0 0.0
    %3261 = vmatpush1.msra.mxu0 0.0
    %3262 = vmatprep.subr.mxu0 0.0
    %3263 = vmatpush1.msra.mxu0 0.0
    %3264 = vmatprep.subr.mxu0 0.0
    %3265 = vmatpush1.msra.mxu0 0.0
    %3266 = vmatprep.subr.mxu0 0.0
    %3267 = vmatpush1.msra.mxu0 0.0
    %3268 = vmatprep.subr.mxu0 0.0
    %3269 = vmatpush1.msra.mxu0 0.0
    %3270 = vmatprep.subr.mxu0 0.0
    %3271 = vmatpush1.msra.mxu0 0.0
    %3272 = vmatprep.subr.mxu0 0.0
    %3273 = vmatpush1.msra.mxu0 0.0
    %3274 = vmatprep.subr.mxu0 0.0
    %3275 = vmatpush1.msra.mxu0 0.0
    %3276 = vmatprep.subr.mxu0 0.0
    %3277 = vmatpush1.msra.mxu0 0.0
    %3278 = vmatprep.subr.mxu0 0.0
    %3279 = vmatpush1.msra.mxu0 0.0
    %3280 = vmatprep.subr.mxu0 0.0
    %3281 = vmatpush1.msra.mxu0 0.0
    %3282 = vmatprep.subr.mxu0 0.0
    %3283 = vmatpush1.msra.mxu0 0.0
    %3284 = vmatprep.subr.mxu0 0.0
    %3285 = vmatpush1.msra.mxu0 0.0
    %3286 = vmatprep.subr.mxu0 0.0
    %3287 = vmatpush1.msra.mxu0 0.0
    %3288 = vmatprep.mubr.f32.mxu0 0.0
    %3289 = vmatmul.mubr.f32.gmra.mrb[0].mxu0 %v1658
    %v3290 = vpop.f32.mrb[0].mxu0
    %v3291 = vadd.f32 0.0, %v3290
    %v3292 = vpop.f32.mrb[0].mxu0
    %v3293 = vadd.f32 0.0, %v3292
    %3294 = vdwg.mxu0
    %v3295 = vadd.f32 %v3210, %v3291
    %v3296 = vadd.f32 %v3211, %v3293
    %v3297 = vmul.f32 %v2631, %v925
    %v3298 = vmul.f32 %v2632, %v928
    %3301 = vrot.lane.b32.xlu0 %v3297, 111
    %v3302 = vpop.permute.xlu0 %3301
    %3303 = vrot.lane.b32.xlu0 %v3298, 111
    %v3304 = vpop.permute.xlu0 %3303
    %v3305 = vsel %vm58, %v3302, %v3304
    %v3306 = vsel %vm58, %v3304, %v943
    %3309 = vmatprep.subr.mxu0 %v3306
    %3310 = vmatpush1.msra.mxu0 %v3305
    %3311 = vmatprep.subr.mxu0 0.0
    %3312 = vmatpush1.msra.mxu0 0.0
    %3313 = vmatprep.subr.mxu0 0.0
    %3314 = vmatpush1.msra.mxu0 0.0
    %3315 = vmatprep.subr.mxu0 0.0
    %3316 = vmatpush1.msra.mxu0 0.0
    %3317 = vmatprep.subr.mxu0 0.0
    %3318 = vmatpush1.msra.mxu0 0.0
    %3319 = vmatprep.subr.mxu0 0.0
    %3320 = vmatpush1.msra.mxu0 0.0
    %3321 = vmatprep.subr.mxu0 0.0
    %3322 = vmatpush1.msra.mxu0 0.0
    %3323 = vmatprep.subr.mxu0 0.0
    %3324 = vmatpush1.msra.mxu0 0.0
    %3325 = vmatprep.subr.mxu0 0.0
    %3326 = vmatpush1.msra.mxu0 0.0
    %3327 = vmatprep.subr.mxu0 0.0
    %3328 = vmatpush1.msra.mxu0 0.0
    %3329 = vmatprep.subr.mxu0 0.0
    %3330 = vmatpush1.msra.mxu0 0.0
    %3331 = vmatprep.subr.mxu0 0.0
    %3332 = vmatpush1.msra.mxu0 0.0
    %3333 = vmatprep.subr.mxu0 0.0
    %3334 = vmatpush1.msra.mxu0 0.0
    %3335 = vmatprep.subr.mxu0 0.0
    %3336 = vmatpush1.msra.mxu0 0.0
    %3337 = vmatprep.subr.mxu0 0.0
    %3338 = vmatpush1.msra.mxu0 0.0
    %3339 = vmatprep.subr.mxu0 0.0
    %3340 = vmatpush1.msra.mxu0 0.0
    %3341 = vmatprep.subr.mxu0 0.0
    %3342 = vmatpush1.msra.mxu0 0.0
    %3343 = vmatprep.subr.mxu0 0.0
    %3344 = vmatpush1.msra.mxu0 0.0
    %3345 = vmatprep.subr.mxu0 0.0
    %3346 = vmatpush1.msra.mxu0 0.0
    %3347 = vmatprep.subr.mxu0 0.0
    %3348 = vmatpush1.msra.mxu0 0.0
    %3349 = vmatprep.subr.mxu0 0.0
    %3350 = vmatpush1.msra.mxu0 0.0
    %3351 = vmatprep.subr.mxu0 0.0
    %3352 = vmatpush1.msra.mxu0 0.0
    %3353 = vmatprep.subr.mxu0 0.0
    %3354 = vmatpush1.msra.mxu0 0.0
    %3355 = vmatprep.subr.mxu0 0.0
    %3356 = vmatpush1.msra.mxu0 0.0
    %3357 = vmatprep.subr.mxu0 0.0
    %3358 = vmatpush1.msra.mxu0 0.0
    %3359 = vmatprep.subr.mxu0 0.0
    %3360 = vmatpush1.msra.mxu0 0.0
    %3361 = vmatprep.subr.mxu0 0.0
    %3362 = vmatpush1.msra.mxu0 0.0
    %3363 = vmatprep.subr.mxu0 0.0
    %3364 = vmatpush1.msra.mxu0 0.0
    %3365 = vmatprep.subr.mxu0 0.0
    %3366 = vmatpush1.msra.mxu0 0.0
    %3367 = vmatprep.subr.mxu0 0.0
    %3368 = vmatpush1.msra.mxu0 0.0
    %3369 = vmatprep.subr.mxu0 0.0
    %3370 = vmatpush1.msra.mxu0 0.0
    %3371 = vmatprep.subr.mxu0 0.0
    %3372 = vmatpush1.msra.mxu0 0.0
    %3373 = vmatprep.mubr.f32.mxu0 0.0
    %3374 = vmatmul.mubr.f32.gmra.mrb[0].mxu0 %v1746
    %v3375 = vpop.f32.mrb[0].mxu0
    %v3376 = vadd.f32 0.0, %v3375
    %v3377 = vpop.f32.mrb[0].mxu0
    %v3378 = vadd.f32 0.0, %v3377
    %3379 = vdwg.mxu0
    %v3380 = vadd.f32 %v3295, %v3376
    %v3381 = vadd.f32 %v3296, %v3378
    %v3382 = vadd.f32 %v3380, %v3381
    %3383 = vadd.xlane.f32.xlu0 %v3382
    %v3384 = vpop.xlane.xlu0 %3383
    %v3385 = vmul.f32 %v3384, 0.00390625
    %v3386 = vsub.f32 %v3380, %v3385
    %v3387 = vsub.f32 %v3381, %v3385
    %v3388 = vmul.f32 %v3386, %v3386
    %v3389 = vmul.f32 %v3387, %v3387
    %v3390 = vadd.f32 %v3388, %v3389
    %3391 = vadd.xlane.f32.xlu0 %v3390
    %v3392 = vpop.xlane.xlu0 %3391
    %v3393 = vmul.f32 %v3392, 0.00390625
    %v3394 = vadd.f32 %v3393, 1e-05
    %v3395 = vrsqrt.pop %v3394
    %v3396 = vmul.f32 %v3386, %v3395
    %v3397 = vmul.f32 %v3387, %v3395
    %v3398 = vmax.f32 %v3396, 0.0
    %v3399 = vmax.f32 %v3397, 0.0
    %s3400 = scalar_lea.vmem [#allocation2], 16
    %3401 = vst [vmem:[%s3400] sm:$0xff] %v3398
    %3402 = vst [vmem:[%s3400 + $0x8] sm:$0xff] %v3399
    // Predicated region
    $region18: #{tpu_custom_call.1} parent=1 // pred_check
      _
    $region19: #{tpu_custom_call.1} parent=1 // pred_check_branch
      %3404 = sbr.rel (0) target = $region21
    $region20: #{tpu_custom_call.1} parent=1 // pred_region
      %s3406 = ssub.s32 512, 512
      %3407 = vsyncadd [#allocation3], %s3406
      %s3408 = sshll.u32 [#allocation2], 4
      %s3409 = int_to_ptr.vmem [resolvable:$true] %s3408
      %3414 = dma.vmem_to_hbm [thread:$0]  %s3409, 512, %s4, [#allocation3], 256, 256, 16
    $region21: #{tpu_custom_call.1} parent=1 // pred_fallthru
      _
    // Predicated region
    $region22: #{tpu_custom_call.1} parent=1 // pred_check
      _
    $region23: #{tpu_custom_call.1} parent=1 // pred_check_branch
      %3416 = sbr.rel (0) target = $region25
    $region24: #{tpu_custom_call.1} parent=1 // pred_region
      %3417 = dma.done [#allocation3], 512
    $region25: #{tpu_custom_call.1} parent=1 // pred_fallthru
      _
    %3418 = vsyncpa [#allocation3], 1

</llo_original>
